<compile_context>
chip_gen: v7x
topology: tpu7x:2x2x1
jax: 0.10.0
libtpu: 0.0.40
codegen_flags: <defaults>
</compile_context>

<pallas_src>
import numpy as np
import jax
import jax.numpy as jnp
from jax.experimental import pallas as pl
from jax.experimental.pallas import tpu as pltpu

BOARD = 8
FILTERS = 256
BN_EPS = 1e-5
POLICY = BOARD * BOARD            # 64 policy logits
HEAD_W = 128                      # policy(64) + value(1), zero-padded to one 128-lane slab
K1 = 16                           # conv_1 im2col depth (9 taps zero-padded to 16)

# (h_in, h_out, m_pad) for the three shared conv_2 applications: 8->6->4->2.
# m_pad pads each tap's output-row block to a multiple of 8 so slices stay aligned.
CONV2_LAYERS = ((8, 6, 40), (6, 4, 16), (4, 2, 8))


# ----------------------------------------------------------------------------
# Stacked 0/1 selector (bf16): row k*m_pad + p has a single 1 at the input
# position feeding output position p for kernel tap k (valid conv, pad=0).
# ----------------------------------------------------------------------------
def _stacked_selectors(h_in, h_out, m_pad):
    sel = np.zeros((9 * m_pad, h_in * h_in), np.float32)
    for kh in range(3):
        for kw in range(3):
            k = kh * 3 + kw
            for oh in range(h_out):
                for ow in range(h_out):
                    sel[k * m_pad + oh * h_out + ow, (oh + kh) * h_in + (ow + kw)] = 1.0
    return jnp.asarray(sel, jnp.bfloat16)


# ----------------------------------------------------------------------------
# The fused Pallas kernel: conv_1 + 3x conv_2 + both heads.
# ----------------------------------------------------------------------------
def alphahex_kernel(g_ref, w1_ref, s1_ref, sela_ref, selb_ref, selc_ref,
                    s2_ref, w2_hbm, wh_hbm, bh_ref,
                    out_ref, w2_vmem, wh_vmem, sem):
    f32 = jnp.float32
    bf16 = jnp.bfloat16

    # Kick off the big-weight DMAs immediately so they overlap conv_1 + first gather.
    w2_cp = pltpu.make_async_copy(w2_hbm, w2_vmem, sem.at[0])
    w2_cp.start()
    wh_cp = pltpu.make_async_copy(wh_hbm, wh_vmem, sem.at[1])
    wh_cp.start()

    # ---- conv_1 (im2col'd board) + folded-BN shift + ReLU  -> (64, 256) f32 ---
    x = jnp.maximum(
        jnp.dot(g_ref[...], w1_ref[...], preferred_element_type=f32) + s1_ref[...],
        0.0)

    s2 = s2_ref[...]

    def gather_patch(sel_ref, xcur, m_out, m_pad):
        # ONE stacked selection matmul gathers all 9 taps; tap slices are packed
        # lane-wise into the (m_out, 9*256) im2col slab (bf16 for the MXU).
        y = jnp.dot(sel_ref[...], xcur.astype(bf16), preferred_element_type=f32)
        return jnp.concatenate(
            [y[k * m_pad:k * m_pad + m_out, :].astype(bf16) for k in range(9)],
            axis=1)

    # First gather needs only x, not w2 -> extra DMA overlap before the wait.
    _, h_out, m_pad = CONV2_LAYERS[0]
    patch = gather_patch(sela_ref, x, h_out * h_out, m_pad)

    w2_cp.wait()
    w2 = w2_vmem[...]                                          # (2304, 256) bf16

    # conv_2 #1: ONE K=2304 weight matmul + shift + ReLU  -> (36, 256)
    x = jnp.maximum(jnp.dot(patch, w2, preferred_element_type=f32) + s2, 0.0)

    # conv_2 #2 and #3 (shared weights): 16 and 4 output positions.
    for sel_ref, (_, h_out, m_pad) in ((selb_ref, CONV2_LAYERS[1]),
                                       (selc_ref, CONV2_LAYERS[2])):
        patch = gather_patch(sel_ref, x, h_out * h_out, m_pad)
        x = jnp.maximum(jnp.dot(patch, w2, preferred_element_type=f32) + s2, 0.0)

    # ---- heads: single (4,256)x(256,512) dot; block-diagonal picks give the fused
    # 128-wide (policy | value) logit row.  torch's NCHW out.view(-1) ordering is
    # absorbed into the head weights offline.
    wh_cp.wait()
    h = jnp.dot(x.astype(bf16), wh_vmem[...], preferred_element_type=f32)   # (4, 512)
    raw = bh_ref[...]                                                       # (1, 128)
    for p in range(4):
        raw = raw + h[p:p + 1, p * HEAD_W:(p + 1) * HEAD_W]

    lane = jax.lax.broadcasted_iota(jnp.int32, (1, HEAD_W), 1)
    is_pol = lane < POLICY
    m = jnp.max(jnp.where(is_pol, raw, -jnp.inf), axis=-1, keepdims=True)
    z = raw - m
    lse = jnp.log(jnp.sum(jnp.where(is_pol, jnp.exp(z), 0.0), axis=-1, keepdims=True))
    out_ref[...] = jnp.where(is_pol, z - lse,                               # log_softmax(policy)
                             jnp.where(lane == POLICY, jnp.tanh(raw), 0.0)) # tanh(value)


# ----------------------------------------------------------------------------
# Wrapper
# ----------------------------------------------------------------------------
@jax.jit
def alphahex_forward(x, params):
    # Reference: out = x.view(-1, 1, 8, 8); out.view(-1) requires batch == 1.
    b = x.reshape(BOARD, BOARD).astype(jnp.float32)
    bp = jnp.pad(b, 1)
    cols = [bp[kh:kh + BOARD, kw:kw + BOARD].reshape(BOARD * BOARD, 1)
            for kh in range(3) for kw in range(3)]
    g = jnp.concatenate(cols + [jnp.zeros((BOARD * BOARD, K1 - 9), jnp.float32)],
                        axis=1)                                   # (64, 16) im2col of the board

    flops = int(
        2 * BOARD * BOARD * K1 * FILTERS
        + sum(2 * 9 * m_pad * (h_in * h_in) * FILTERS                 # stacked gather dots
              + 2 * (h_out * h_out) * 9 * FILTERS * FILTERS           # K=2304 weight dots
              for h_in, h_out, m_pad in CONV2_LAYERS)
        + 2 * 4 * FILTERS * 4 * HEAD_W)                               # fused heads
    bytes_accessed = int(sum(int(np.prod(a.shape)) * a.dtype.itemsize
                             for a in params.values())
                         + g.size * 4 + HEAD_W * 4)

    vmem = pl.BlockSpec(memory_space=pltpu.MemorySpace.VMEM)
    hbm = pl.BlockSpec(memory_space=pl.ANY)

    out = pl.pallas_call(
        alphahex_kernel,
        out_shape=jax.ShapeDtypeStruct((1, HEAD_W), jnp.float32),
        in_specs=[vmem, vmem, vmem, vmem, vmem, vmem, vmem, hbm, hbm, vmem],
        out_specs=vmem,
        scratch_shapes=[
            pltpu.VMEM((9 * FILTERS, FILTERS), jnp.bfloat16),     # conv_2 weight landing buffer
            pltpu.VMEM((FILTERS, 4 * HEAD_W), jnp.bfloat16),      # head weight landing buffer
            pltpu.SemaphoreType.DMA((2,)),
        ],
        compiler_params=pltpu.CompilerParams(vmem_limit_bytes=16 * 1024 * 1024),
        cost_estimate=pl.CostEstimate(flops=flops, transcendentals=2 * HEAD_W + 2,
                                      bytes_accessed=bytes_accessed),
    )(g, params["w1"], params["s1"], params["sela"], params["selb"], params["selc"],
      params["s2"], params["w2"], params["wh"], params["bh"])

    return out[0, :POLICY], out[0, POLICY:POLICY + 1]


# ----------------------------------------------------------------------------
# Deterministic parameter construction (torch-layout weights -> kernel layout)
# ----------------------------------------------------------------------------
def make_params(key):
    ks = jax.random.split(key, 9)
    # "torch layout" weights, as the original module would hold them.
    w1_t = jax.random.normal(ks[0], (FILTERS, 1, 3, 3), jnp.float32) * 0.1         # OIHW
    b1 = jax.random.normal(ks[1], (FILTERS,), jnp.float32) * 0.01
    w2_t = jax.random.normal(ks[2], (FILTERS, FILTERS, 3, 3), jnp.float32) * 0.02   # OIHW
    b2 = jax.random.normal(ks[3], (FILTERS,), jnp.float32) * 0.01
    wp_t = jax.random.normal(ks[4], (POLICY, 4 * FILTERS), jnp.float32) * 0.02      # Linear(1024,64)
    bp = jax.random.normal(ks[5], (POLICY,), jnp.float32) * 0.01
    wv_t = jax.random.normal(ks[6], (1, 4 * FILTERS), jnp.float32) * 0.02           # Linear(1024,1)
    bv = jax.random.normal(ks[7], (1,), jnp.float32) * 0.01

    # BatchNorm2d, eval mode, PyTorch defaults: gamma=1, beta=0, mean=0, var=1.
    gamma = jnp.ones((FILTERS,), jnp.float32)
    beta = jnp.zeros((FILTERS,), jnp.float32)
    mu = jnp.zeros((FILTERS,), jnp.float32)
    var = jnp.ones((FILTERS,), jnp.float32)
    scale = gamma / jnp.sqrt(var + BN_EPS)
    s1 = (beta + scale * (b1 - mu)).reshape(1, FILTERS)
    s2 = (beta + scale * (b2 - mu)).reshape(1, FILTERS)

    # conv_1: fold BN scale; layout (K1, 256) = [tap, out_channel], taps padded 9 -> 16.
    w1 = (w1_t[:, 0] * scale[:, None, None]).reshape(FILTERS, 9).T
    w1 = jnp.pad(w1, ((0, K1 - 9), (0, 0)))

    # conv_2: fold BN scale; im2col layout (9*256, 256) = [tap*256 + c_in, c_out], bf16.
    w2 = jnp.transpose(w2_t * scale[:, None, None, None], (2, 3, 1, 0))   # (kh, kw, c_in, c_out)
    w2 = w2.reshape(9 * FILTERS, FILTERS).astype(jnp.bfloat16)

    # Heads: torch flattens the final (1,256,2,2) NCHW tensor as index c*4 + p.  The kernel
    # keeps x as (p, c) and computes ONE (4,256)x(256,512) dot; wh is laid out (c, p*128 + j)
    # with j<64 = policy row j, j==64 = value, j>64 = zero padding.
    wcomb = jnp.concatenate(
        [wp_t, wv_t, jnp.zeros((HEAD_W - POLICY - 1, 4 * FILTERS), jnp.float32)],
        axis=0)                                                           # (128, 1024)
    wh = (wcomb.reshape(HEAD_W, FILTERS, 4)                               # [j, c, p]
          .transpose(1, 2, 0)                                             # [c, p, j]
          .reshape(FILTERS, 4 * HEAD_W)                                   # [c, p*128 + j]
          .astype(jnp.bfloat16))
    bh = jnp.concatenate(
        [bp, bv, jnp.zeros((HEAD_W - POLICY - 1,), jnp.float32)]).reshape(1, HEAD_W)

    # TODO(synk): dropout (p=0.3), linear_layer / linear_layer_2 and the 1-D batch norms are
    # declared in __init__ but never affect the reference forward output (linear_layer(out)
    # is computed and discarded), so they are intentionally omitted.
    params = {
        "w1": w1, "s1": s1, "s2": s2,
        "w2": w2,
        "sela": _stacked_selectors(*CONV2_LAYERS[0]),
        "selb": _stacked_selectors(*CONV2_LAYERS[1]),
        "selc": _stacked_selectors(*CONV2_LAYERS[2]),
        "wh": wh, "bh": bh,
    }
    return params, ks[8]


if __name__ == "__main__":
    params, in_key = make_params(jax.random.PRNGKey(0))
    # Batch must be 1: the module's out.view(-1) feeds Linear(1024, ...) directly.
    x = jax.random.normal(in_key, (1, BOARD, BOARD), jnp.float32)

    policy, value = alphahex_forward(x, params)
    jax.block_until_ready((policy, value))

    assert policy.shape == (POLICY,)
    assert value.shape == (1,)
    assert bool(jnp.isfinite(policy).all()) and bool(jnp.isfinite(value).all())
    # log_softmax sanity: probabilities sum to ~1
    assert abs(float(jnp.exp(policy).sum()) - 1.0) < 1e-4
    print("KERNEL_OK")
</pallas_src>

<mosaic_0001>
module attributes {stable_mosaic.version = 11 : i64} {
  func.func @alphahex_kernel(%arg0: memref<64x16xf32, #tpu.memory_space<vmem>>, %arg1: memref<16x256xf32, #tpu.memory_space<vmem>>, %arg2: memref<1x256xf32, #tpu.memory_space<vmem>>, %arg3: memref<360x64xbf16, #tpu.memory_space<vmem>>, %arg4: memref<144x36xbf16, #tpu.memory_space<vmem>>, %arg5: memref<72x16xbf16, #tpu.memory_space<vmem>>, %arg6: memref<1x256xf32, #tpu.memory_space<vmem>>, %arg7: memref<2304x256xbf16, #tpu.memory_space<any>>, %arg8: memref<256x512xbf16, #tpu.memory_space<any>>, %arg9: memref<1x128xf32, #tpu.memory_space<vmem>>, %arg10: memref<1x128xf32, #tpu.memory_space<vmem>>, %arg11: memref<2304x256xbf16, #tpu.memory_space<vmem>>, %arg12: memref<256x512xbf16, #tpu.memory_space<vmem>>, %arg13: memref<2x!tpu.dma_semaphore, #tpu.memory_space<semaphore_mem>>) attributes {dimension_semantics = [], scalar_prefetch = 0 : i64, scratch_operands = 3 : i64, tpu.core_type = #tpu.core_type<tc>} {
    %c0_i32 = arith.constant 0 : i32
    %0 = tpu.memref_slice %arg13[%c0_i32] : memref<2x!tpu.dma_semaphore, #tpu.memory_space<semaphore_mem>> -> memref<1x!tpu.dma_semaphore, #tpu.memory_space<semaphore_mem>>
    %1 = tpu.memref_squeeze %0 : memref<1x!tpu.dma_semaphore, #tpu.memory_space<semaphore_mem>> -> memref<!tpu.dma_semaphore, #tpu.memory_space<semaphore_mem>>
    tpu.enqueue_dma source(%arg7 : memref<2304x256xbf16, #tpu.memory_space<any>>) target(%arg11 : memref<2304x256xbf16, #tpu.memory_space<vmem>>) target_semaphore(%1 : memref<!tpu.dma_semaphore, #tpu.memory_space<semaphore_mem>>)
    %c1_i32 = arith.constant 1 : i32
    %2 = tpu.memref_slice %arg13[%c1_i32] : memref<2x!tpu.dma_semaphore, #tpu.memory_space<semaphore_mem>> -> memref<1x!tpu.dma_semaphore, #tpu.memory_space<semaphore_mem>>
    %3 = tpu.memref_squeeze %2 : memref<1x!tpu.dma_semaphore, #tpu.memory_space<semaphore_mem>> -> memref<!tpu.dma_semaphore, #tpu.memory_space<semaphore_mem>>
    tpu.enqueue_dma source(%arg8 : memref<256x512xbf16, #tpu.memory_space<any>>) target(%arg12 : memref<256x512xbf16, #tpu.memory_space<vmem>>) target_semaphore(%3 : memref<!tpu.dma_semaphore, #tpu.memory_space<semaphore_mem>>)
    %c0 = arith.constant 0 : index
    %c0_0 = arith.constant 0 : index
    %4 = vector.load %arg0[%c0, %c0_0] : memref<64x16xf32, #tpu.memory_space<vmem>>, vector<64x16xf32>
    %c0_1 = arith.constant 0 : index
    %c0_2 = arith.constant 0 : index
    %5 = vector.load %arg1[%c0_1, %c0_2] : memref<16x256xf32, #tpu.memory_space<vmem>>, vector<16x256xf32>
    %cst = arith.constant dense<0.000000e+00> : vector<64x256xf32>
    %6 = tpu.matmul %4, %5, %cst {dimension_numbers = #tpu.dot_dimension_numbers<[1], [0], [0], [1], [0, 0, 1, 1], [], []>} : vector<64x16xf32>, vector<16x256xf32>, vector<64x256xf32> -> vector<64x256xf32>
    %c0_3 = arith.constant 0 : index
    %c0_4 = arith.constant 0 : index
    %7 = vector.load %arg2[%c0_3, %c0_4] : memref<1x256xf32, #tpu.memory_space<vmem>>, vector<1x256xf32>
    %8 = vector.broadcast %7 : vector<1x256xf32> to vector<64x256xf32>
    %9 = arith.addf %6, %8 : vector<64x256xf32>
    %cst_5 = arith.constant 0.000000e+00 : f32
    %10 = vector.broadcast %cst_5 : f32 to vector<64x256xf32>
    %11 = arith.maximumf %9, %10 : vector<64x256xf32>
    %c0_6 = arith.constant 0 : index
    %c0_7 = arith.constant 0 : index
    %12 = vector.load %arg6[%c0_6, %c0_7] : memref<1x256xf32, #tpu.memory_space<vmem>>, vector<1x256xf32>
    %c0_8 = arith.constant 0 : index
    %c0_9 = arith.constant 0 : index
    %13 = vector.load %arg3[%c0_8, %c0_9] : memref<360x64xbf16, #tpu.memory_space<vmem>>, vector<360x64xbf16>
    %14 = arith.truncf %11 : vector<64x256xf32> to vector<64x256xbf16>
    %cst_10 = arith.constant dense<0.000000e+00> : vector<360x256xf32>
    %15 = tpu.matmul %13, %14, %cst_10 {dimension_numbers = #tpu.dot_dimension_numbers<[1], [0], [0], [1], [0, 0, 1, 1], [], []>} : vector<360x64xbf16>, vector<64x256xbf16>, vector<360x256xf32> -> vector<360x256xf32>
    %16 = vector.extract_strided_slice %15 {offsets = [0, 0], sizes = [36, 256], strides = [1, 1]} : vector<360x256xf32> to vector<36x256xf32>
    %17 = arith.truncf %16 : vector<36x256xf32> to vector<36x256xbf16>
    %18 = vector.extract_strided_slice %15 {offsets = [40, 0], sizes = [36, 256], strides = [1, 1]} : vector<360x256xf32> to vector<36x256xf32>
    %19 = arith.truncf %18 : vector<36x256xf32> to vector<36x256xbf16>
    %20 = vector.extract_strided_slice %15 {offsets = [80, 0], sizes = [36, 256], strides = [1, 1]} : vector<360x256xf32> to vector<36x256xf32>
    %21 = arith.truncf %20 : vector<36x256xf32> to vector<36x256xbf16>
    %22 = vector.extract_strided_slice %15 {offsets = [120, 0], sizes = [36, 256], strides = [1, 1]} : vector<360x256xf32> to vector<36x256xf32>
    %23 = arith.truncf %22 : vector<36x256xf32> to vector<36x256xbf16>
    %24 = vector.extract_strided_slice %15 {offsets = [160, 0], sizes = [36, 256], strides = [1, 1]} : vector<360x256xf32> to vector<36x256xf32>
    %25 = arith.truncf %24 : vector<36x256xf32> to vector<36x256xbf16>
    %26 = vector.extract_strided_slice %15 {offsets = [200, 0], sizes = [36, 256], strides = [1, 1]} : vector<360x256xf32> to vector<36x256xf32>
    %27 = arith.truncf %26 : vector<36x256xf32> to vector<36x256xbf16>
    %28 = vector.extract_strided_slice %15 {offsets = [240, 0], sizes = [36, 256], strides = [1, 1]} : vector<360x256xf32> to vector<36x256xf32>
    %29 = arith.truncf %28 : vector<36x256xf32> to vector<36x256xbf16>
    %30 = vector.extract_strided_slice %15 {offsets = [280, 0], sizes = [36, 256], strides = [1, 1]} : vector<360x256xf32> to vector<36x256xf32>
    %31 = arith.truncf %30 : vector<36x256xf32> to vector<36x256xbf16>
    %32 = vector.extract_strided_slice %15 {offsets = [320, 0], sizes = [36, 256], strides = [1, 1]} : vector<360x256xf32> to vector<36x256xf32>
    %33 = arith.truncf %32 : vector<36x256xf32> to vector<36x256xbf16>
    %34 = tpu.concatenate %17, %19, %21, %23, %25, %27, %29, %31, %33 in 1 : vector<36x256xbf16>, vector<36x256xbf16>, vector<36x256xbf16>, vector<36x256xbf16>, vector<36x256xbf16>, vector<36x256xbf16>, vector<36x256xbf16>, vector<36x256xbf16>, vector<36x256xbf16> -> vector<36x2304xbf16>
    %c0_i32_11 = arith.constant 0 : i32
    %35 = tpu.memref_slice %arg13[%c0_i32_11] : memref<2x!tpu.dma_semaphore, #tpu.memory_space<semaphore_mem>> -> memref<1x!tpu.dma_semaphore, #tpu.memory_space<semaphore_mem>>
    %36 = tpu.memref_squeeze %35 : memref<1x!tpu.dma_semaphore, #tpu.memory_space<semaphore_mem>> -> memref<!tpu.dma_semaphore, #tpu.memory_space<semaphore_mem>>
    tpu.wait_dma2 semaphore(%36 : memref<!tpu.dma_semaphore, #tpu.memory_space<semaphore_mem>>) src(%arg7 : memref<2304x256xbf16, #tpu.memory_space<any>>) dst(%arg11 : memref<2304x256xbf16, #tpu.memory_space<vmem>>)
    %c0_12 = arith.constant 0 : index
    %c0_13 = arith.constant 0 : index
    %37 = vector.load %arg11[%c0_12, %c0_13] : memref<2304x256xbf16, #tpu.memory_space<vmem>>, vector<2304x256xbf16>
    %cst_14 = arith.constant dense<0.000000e+00> : vector<36x256xf32>
    %38 = tpu.matmul %34, %37, %cst_14 {dimension_numbers = #tpu.dot_dimension_numbers<[1], [0], [0], [1], [0, 0, 1, 1], [], []>} : vector<36x2304xbf16>, vector<2304x256xbf16>, vector<36x256xf32> -> vector<36x256xf32>
    %39 = vector.broadcast %12 : vector<1x256xf32> to vector<36x256xf32>
    %40 = arith.addf %38, %39 : vector<36x256xf32>
    %cst_15 = arith.constant 0.000000e+00 : f32
    %41 = vector.broadcast %cst_15 : f32 to vector<36x256xf32>
    %42 = arith.maximumf %40, %41 : vector<36x256xf32>
    %c0_16 = arith.constant 0 : index
    %c0_17 = arith.constant 0 : index
    %43 = vector.load %arg4[%c0_16, %c0_17] : memref<144x36xbf16, #tpu.memory_space<vmem>>, vector<144x36xbf16>
    %44 = arith.truncf %42 : vector<36x256xf32> to vector<36x256xbf16>
    %cst_18 = arith.constant dense<0.000000e+00> : vector<144x256xf32>
    %45 = tpu.matmul %43, %44, %cst_18 {dimension_numbers = #tpu.dot_dimension_numbers<[1], [0], [0], [1], [0, 0, 1, 1], [], []>} : vector<144x36xbf16>, vector<36x256xbf16>, vector<144x256xf32> -> vector<144x256xf32>
    %46 = vector.extract_strided_slice %45 {offsets = [0, 0], sizes = [16, 256], strides = [1, 1]} : vector<144x256xf32> to vector<16x256xf32>
    %47 = arith.truncf %46 : vector<16x256xf32> to vector<16x256xbf16>
    %48 = vector.extract_strided_slice %45 {offsets = [16, 0], sizes = [16, 256], strides = [1, 1]} : vector<144x256xf32> to vector<16x256xf32>
    %49 = arith.truncf %48 : vector<16x256xf32> to vector<16x256xbf16>
    %50 = vector.extract_strided_slice %45 {offsets = [32, 0], sizes = [16, 256], strides = [1, 1]} : vector<144x256xf32> to vector<16x256xf32>
    %51 = arith.truncf %50 : vector<16x256xf32> to vector<16x256xbf16>
    %52 = vector.extract_strided_slice %45 {offsets = [48, 0], sizes = [16, 256], strides = [1, 1]} : vector<144x256xf32> to vector<16x256xf32>
    %53 = arith.truncf %52 : vector<16x256xf32> to vector<16x256xbf16>
    %54 = vector.extract_strided_slice %45 {offsets = [64, 0], sizes = [16, 256], strides = [1, 1]} : vector<144x256xf32> to vector<16x256xf32>
    %55 = arith.truncf %54 : vector<16x256xf32> to vector<16x256xbf16>
    %56 = vector.extract_strided_slice %45 {offsets = [80, 0], sizes = [16, 256], strides = [1, 1]} : vector<144x256xf32> to vector<16x256xf32>
    %57 = arith.truncf %56 : vector<16x256xf32> to vector<16x256xbf16>
    %58 = vector.extract_strided_slice %45 {offsets = [96, 0], sizes = [16, 256], strides = [1, 1]} : vector<144x256xf32> to vector<16x256xf32>
    %59 = arith.truncf %58 : vector<16x256xf32> to vector<16x256xbf16>
    %60 = vector.extract_strided_slice %45 {offsets = [112, 0], sizes = [16, 256], strides = [1, 1]} : vector<144x256xf32> to vector<16x256xf32>
    %61 = arith.truncf %60 : vector<16x256xf32> to vector<16x256xbf16>
    %62 = vector.extract_strided_slice %45 {offsets = [128, 0], sizes = [16, 256], strides = [1, 1]} : vector<144x256xf32> to vector<16x256xf32>
    %63 = arith.truncf %62 : vector<16x256xf32> to vector<16x256xbf16>
    %64 = tpu.concatenate %47, %49, %51, %53, %55, %57, %59, %61, %63 in 1 : vector<16x256xbf16>, vector<16x256xbf16>, vector<16x256xbf16>, vector<16x256xbf16>, vector<16x256xbf16>, vector<16x256xbf16>, vector<16x256xbf16>, vector<16x256xbf16>, vector<16x256xbf16> -> vector<16x2304xbf16>
    %cst_19 = arith.constant dense<0.000000e+00> : vector<16x256xf32>
    %65 = tpu.matmul %64, %37, %cst_19 {dimension_numbers = #tpu.dot_dimension_numbers<[1], [0], [0], [1], [0, 0, 1, 1], [], []>} : vector<16x2304xbf16>, vector<2304x256xbf16>, vector<16x256xf32> -> vector<16x256xf32>
    %66 = vector.broadcast %12 : vector<1x256xf32> to vector<16x256xf32>
    %67 = arith.addf %65, %66 : vector<16x256xf32>
    %cst_20 = arith.constant 0.000000e+00 : f32
    %68 = vector.broadcast %cst_20 : f32 to vector<16x256xf32>
    %69 = arith.maximumf %67, %68 : vector<16x256xf32>
    %c0_21 = arith.constant 0 : index
    %c0_22 = arith.constant 0 : index
    %70 = vector.load %arg5[%c0_21, %c0_22] : memref<72x16xbf16, #tpu.memory_space<vmem>>, vector<72x16xbf16>
    %71 = arith.truncf %69 : vector<16x256xf32> to vector<16x256xbf16>
    %cst_23 = arith.constant dense<0.000000e+00> : vector<72x256xf32>
    %72 = tpu.matmul %70, %71, %cst_23 {dimension_numbers = #tpu.dot_dimension_numbers<[1], [0], [0], [1], [0, 0, 1, 1], [], []>} : vector<72x16xbf16>, vector<16x256xbf16>, vector<72x256xf32> -> vector<72x256xf32>
    %73 = vector.extract_strided_slice %72 {offsets = [0, 0], sizes = [4, 256], strides = [1, 1]} : vector<72x256xf32> to vector<4x256xf32>
    %74 = arith.truncf %73 : vector<4x256xf32> to vector<4x256xbf16>
    %75 = vector.extract_strided_slice %72 {offsets = [8, 0], sizes = [4, 256], strides = [1, 1]} : vector<72x256xf32> to vector<4x256xf32>
    %76 = arith.truncf %75 : vector<4x256xf32> to vector<4x256xbf16>
    %77 = vector.extract_strided_slice %72 {offsets = [16, 0], sizes = [4, 256], strides = [1, 1]} : vector<72x256xf32> to vector<4x256xf32>
    %78 = arith.truncf %77 : vector<4x256xf32> to vector<4x256xbf16>
    %79 = vector.extract_strided_slice %72 {offsets = [24, 0], sizes = [4, 256], strides = [1, 1]} : vector<72x256xf32> to vector<4x256xf32>
    %80 = arith.truncf %79 : vector<4x256xf32> to vector<4x256xbf16>
    %81 = vector.extract_strided_slice %72 {offsets = [32, 0], sizes = [4, 256], strides = [1, 1]} : vector<72x256xf32> to vector<4x256xf32>
    %82 = arith.truncf %81 : vector<4x256xf32> to vector<4x256xbf16>
    %83 = vector.extract_strided_slice %72 {offsets = [40, 0], sizes = [4, 256], strides = [1, 1]} : vector<72x256xf32> to vector<4x256xf32>
    %84 = arith.truncf %83 : vector<4x256xf32> to vector<4x256xbf16>
    %85 = vector.extract_strided_slice %72 {offsets = [48, 0], sizes = [4, 256], strides = [1, 1]} : vector<72x256xf32> to vector<4x256xf32>
    %86 = arith.truncf %85 : vector<4x256xf32> to vector<4x256xbf16>
    %87 = vector.extract_strided_slice %72 {offsets = [56, 0], sizes = [4, 256], strides = [1, 1]} : vector<72x256xf32> to vector<4x256xf32>
    %88 = arith.truncf %87 : vector<4x256xf32> to vector<4x256xbf16>
    %89 = vector.extract_strided_slice %72 {offsets = [64, 0], sizes = [4, 256], strides = [1, 1]} : vector<72x256xf32> to vector<4x256xf32>
    %90 = arith.truncf %89 : vector<4x256xf32> to vector<4x256xbf16>
    %91 = tpu.concatenate %74, %76, %78, %80, %82, %84, %86, %88, %90 in 1 : vector<4x256xbf16>, vector<4x256xbf16>, vector<4x256xbf16>, vector<4x256xbf16>, vector<4x256xbf16>, vector<4x256xbf16>, vector<4x256xbf16>, vector<4x256xbf16>, vector<4x256xbf16> -> vector<4x2304xbf16>
    %cst_24 = arith.constant dense<0.000000e+00> : vector<4x256xf32>
    %92 = tpu.matmul %91, %37, %cst_24 {dimension_numbers = #tpu.dot_dimension_numbers<[1], [0], [0], [1], [0, 0, 1, 1], [], []>} : vector<4x2304xbf16>, vector<2304x256xbf16>, vector<4x256xf32> -> vector<4x256xf32>
    %93 = vector.broadcast %12 : vector<1x256xf32> to vector<4x256xf32>
    %94 = arith.addf %92, %93 : vector<4x256xf32>
    %cst_25 = arith.constant 0.000000e+00 : f32
    %95 = vector.broadcast %cst_25 : f32 to vector<4x256xf32>
    %96 = arith.maximumf %94, %95 : vector<4x256xf32>
    %c1_i32_26 = arith.constant 1 : i32
    %97 = tpu.memref_slice %arg13[%c1_i32_26] : memref<2x!tpu.dma_semaphore, #tpu.memory_space<semaphore_mem>> -> memref<1x!tpu.dma_semaphore, #tpu.memory_space<semaphore_mem>>
    %98 = tpu.memref_squeeze %97 : memref<1x!tpu.dma_semaphore, #tpu.memory_space<semaphore_mem>> -> memref<!tpu.dma_semaphore, #tpu.memory_space<semaphore_mem>>
    tpu.wait_dma2 semaphore(%98 : memref<!tpu.dma_semaphore, #tpu.memory_space<semaphore_mem>>) src(%arg8 : memref<256x512xbf16, #tpu.memory_space<any>>) dst(%arg12 : memref<256x512xbf16, #tpu.memory_space<vmem>>)
    %99 = arith.truncf %96 : vector<4x256xf32> to vector<4x256xbf16>
    %c0_27 = arith.constant 0 : index
    %c0_28 = arith.constant 0 : index
    %100 = vector.load %arg12[%c0_27, %c0_28] : memref<256x512xbf16, #tpu.memory_space<vmem>>, vector<256x512xbf16>
    %cst_29 = arith.constant dense<0.000000e+00> : vector<4x512xf32>
    %101 = tpu.matmul %99, %100, %cst_29 {dimension_numbers = #tpu.dot_dimension_numbers<[1], [0], [0], [1], [0, 0, 1, 1], [], []>} : vector<4x256xbf16>, vector<256x512xbf16>, vector<4x512xf32> -> vector<4x512xf32>
    %c0_30 = arith.constant 0 : index
    %c0_31 = arith.constant 0 : index
    %102 = vector.load %arg9[%c0_30, %c0_31] : memref<1x128xf32, #tpu.memory_space<vmem>>, vector<1x128xf32>
    %103 = vector.extract_strided_slice %101 {offsets = [0, 0], sizes = [1, 128], strides = [1, 1]} : vector<4x512xf32> to vector<1x128xf32>
    %104 = arith.addf %102, %103 : vector<1x128xf32>
    %105 = vector.extract_strided_slice %101 {offsets = [1, 128], sizes = [1, 128], strides = [1, 1]} : vector<4x512xf32> to vector<1x128xf32>
    %106 = arith.addf %104, %105 : vector<1x128xf32>
    %107 = vector.extract_strided_slice %101 {offsets = [2, 256], sizes = [1, 128], strides = [1, 1]} : vector<4x512xf32> to vector<1x128xf32>
    %108 = arith.addf %106, %107 : vector<1x128xf32>
    %109 = vector.extract_strided_slice %101 {offsets = [3, 384], sizes = [1, 128], strides = [1, 1]} : vector<4x512xf32> to vector<1x128xf32>
    %110 = arith.addf %108, %109 : vector<1x128xf32>
    %111 = tpu.iota {dimensions = array<i32: 1>} : vector<1x128xi32>
    %c64_i32 = arith.constant 64 : i32
    %112 = vector.broadcast %c64_i32 : i32 to vector<1x128xi32>
    %113 = arith.cmpi slt, %111, %112 : vector<1x128xi32>
    %cst_32 = arith.constant 0xFF800000 : f32
    %114 = vector.broadcast %cst_32 : f32 to vector<1x128xf32>
    %115 = arith.select %113, %110, %114 : vector<1x128xi1>, vector<1x128xf32>
    %cst_33 = arith.constant dense<0xFF800000> : vector<1xf32>
    %116 = vector.multi_reduction <maximumf>, %115, %cst_33 [1] : vector<1x128xf32> to vector<1xf32>
    %117 = vector.shape_cast %116 : vector<1xf32> to vector<1x1xf32>
    %118 = vector.broadcast %117 : vector<1x1xf32> to vector<1x128xf32>
    %119 = arith.subf %110, %118 : vector<1x128xf32>
    %120 = math.exp %119 : vector<1x128xf32>
    %cst_34 = arith.constant 0.000000e+00 : f32
    %121 = vector.broadcast %cst_34 : f32 to vector<1x128xf32>
    %122 = arith.select %113, %120, %121 : vector<1x128xi1>, vector<1x128xf32>
    %cst_35 = arith.constant dense<0.000000e+00> : vector<1xf32>
    %123 = vector.multi_reduction <add>, %122, %cst_35 [1] : vector<1x128xf32> to vector<1xf32>
    %124 = vector.shape_cast %123 : vector<1xf32> to vector<1x1xf32>
    %125 = math.log %124 : vector<1x1xf32>
    %126 = vector.broadcast %125 : vector<1x1xf32> to vector<1x128xf32>
    %127 = arith.subf %119, %126 : vector<1x128xf32>
    %c64_i32_36 = arith.constant 64 : i32
    %128 = vector.broadcast %c64_i32_36 : i32 to vector<1x128xi32>
    %129 = arith.cmpi eq, %111, %128 : vector<1x128xi32>
    %130 = math.tanh %110 : vector<1x128xf32>
    %cst_37 = arith.constant 0.000000e+00 : f32
    %131 = vector.broadcast %cst_37 : f32 to vector<1x128xf32>
    %132 = arith.select %129, %130, %131 : vector<1x128xi1>, vector<1x128xf32>
    %133 = arith.select %113, %127, %132 : vector<1x128xi1>, vector<1x128xf32>
    %c0_38 = arith.constant 0 : index
    %c0_39 = arith.constant 0 : index
    %134 = vector.load %arg10[%c0_38, %c0_39] : memref<1x128xf32, #tpu.memory_space<vmem>>, vector<1x128xf32>
    tpu.vector_store %arg10[%c0_38, %c0_39], %133 {strides = array<i32>} : memref<1x128xf32, #tpu.memory_space<vmem>>, vector<1x128xf32>,
    return
  }
}

</mosaic_0001>

<llo_original>
// kernel: alphahex_forward.1
$region0: #{alphahex_forward.1}
  #allocation0 [shape = 'u32[]', space=smem, size = 0x4, offset = 0x4, fixed_abs, tag = 'smem constant byte address 0x4 - core index']
  #allocation1 [shape = 'u32[144,128]{1,0:T(1,128)}', space=vmem, size = 0x12000, scoped, tag = 'internal scratch']
  #allocation2 [shape = 'bf16[2304,256]{1,0:T(16,128)(2,1)}', space=vmem, size = 0x120000, scoped, tag = 'scratch operand']
  #allocation3 [shape = 'bf16[256,512]{1,0:T(16,128)(2,1)}', space=vmem, size = 0x40000, scoped, tag = 'scratch operand']
  #allocation4 [shape = 's32[2]{0}', space=sflag, size = 0x8, scoped, tag = 'scratch operand']
  #allocation12 [shape = 's32[]', space=sflag, size = 0x4, offset = 0, fixed_abs, tag = 'sflag constant byte address 0x0 - dummy sync flag']
  #allocation14 [shape = 's32[]', space=sflag, size = 0x4, offset = 0, fixed_abs, tag = 'sflag constant byte address 0x0 - dummy sync flag']
  %s0 = inlined_call_operand.vmem [shape: f32[64,16], index: 0, kind: input, shape index: {}]
  %s1 = inlined_call_operand.hbm [shape: f32[16,256], index: 1, kind: input, shape index: {}]
  %s2 = inlined_call_operand.hbm [shape: f32[1,256], index: 2, kind: input, shape index: {}]
  %s3 = inlined_call_operand.vmem [shape: bf16[360,64], index: 3, kind: input, shape index: {}]
  %s4 = inlined_call_operand.vmem [shape: bf16[144,36], index: 4, kind: input, shape index: {}]
  %s5 = inlined_call_operand.vmem [shape: bf16[72,16], index: 5, kind: input, shape index: {}]
  %s6 = inlined_call_operand.hbm [shape: f32[1,256], index: 6, kind: input, shape index: {}]
  %s7 = inlined_call_operand.hbm [shape: bf16[2304,256], index: 7, kind: input, shape index: {}]
  %s8 = inlined_call_operand.hbm [shape: bf16[256,512], index: 8, kind: input, shape index: {}]
  %s9 = inlined_call_operand.hbm [shape: f32[1,128], index: 9, kind: input, shape index: {}]
  %s10 = inlined_call_operand.vmem [shape: f32[1,128], index: 10, kind: output, shape index: {}]
  %s11 = sld [smem:[#allocation0]]
  $region58: #{alphahex_forward.1} parent=0
    _
  %s13 = ssub.s32 1, %s11
  %s14 = scalar_select 0, %s13, %s11
  $region1: #{alphahex_forward.1} parent=0
    #allocation5 [shape = 'u8[16384]{0}', space=vmem, size = 0x4000, scoped, tag = 'input window, operand 1, single buffered']
    #allocation6 [shape = 's32[1]{0}', space=sflag, size = 0x4, scoped, tag = 'scoped memory for alphahex_forward.1']
    #allocation7 [shape = 'u8[1024]{0}', space=vmem, size = 0x400, scoped, tag = 'input window, operand 2, single buffered']
    #allocation8 [shape = 's32[1]{0}', space=sflag, size = 0x4, scoped, tag = 'scoped memory for alphahex_forward.1']
    #allocation9 [shape = 'u8[1024]{0}', space=vmem, size = 0x400, scoped, tag = 'input window, operand 6, single buffered']
    #allocation10 [shape = 'u8[512]{0}', space=vmem, size = 0x400, scoped, tag = 'input window, operand 9, single buffered']
    #allocation11 [shape = 's32[1]{0}', space=sflag, size = 0x4, scoped, tag = 'scoped memory for alphahex_forward.1']
    #allocation13 [shape = 'u32[9]{0}', space=smem, size = 0x24, scoped, tag = 'DMA stride descriptor']
    #allocation15 [shape = 'u32[9]{0}', space=smem, size = 0x24, scoped, tag = 'DMA stride descriptor']
    %15 = vsyncpa [#allocation6], 0
    %16 = vsyncpa [#allocation8], 0
    %17 = vsyncpa [#allocation11], 0
    // Predicated region
    $region2: #{alphahex_forward.1} parent=1 // pred_check
      _
    $region3: #{alphahex_forward.1} parent=1 // pred_check_branch
      %19 = sbr.rel (0) target = $region5
    $region4: #{alphahex_forward.1} parent=1 // pred_region
      _
    $region5: #{alphahex_forward.1} parent=1 // pred_fallthru
      _
    // Predicated region
    $region6: #{alphahex_forward.1} parent=1 // pred_check
      _
    $region7: #{alphahex_forward.1} parent=1 // pred_check_branch
      %21 = sbr.rel (0) target = $region9
    $region8: #{alphahex_forward.1} parent=1 // pred_region
      %s23 = ssub.s32 512, 512
      %24 = vsyncadd [#allocation6], %s23
      %s25 = sshll.u32 [#allocation5], 4
      %s26 = int_to_ptr.vmem [resolvable:$true] %s25
      %31 = dma.hbm_to_vmem [thread:$0]  %s1, 512, %s26, [#allocation6], 256, 256, 16
    $region9: #{alphahex_forward.1} parent=1 // pred_fallthru
      _
    // Predicated region
    $region10: #{alphahex_forward.1} parent=1 // pred_check
      _
    $region11: #{alphahex_forward.1} parent=1 // pred_check_branch
      %33 = sbr.rel (0) target = $region13
    $region12: #{alphahex_forward.1} parent=1 // pred_region
      %s35 = ssub.s32 32, 32
      %36 = vsyncadd [#allocation8], %s35
      %s38 = sshll.u32 [#allocation7], 4
      %s39 = int_to_ptr.vmem [resolvable:$true] %s38
      %41 = dma.hbm_to_vmem [thread:$0]  %s2, 32, %s39, [#allocation8]
    $region13: #{alphahex_forward.1} parent=1 // pred_fallthru
      _
    // Predicated region
    $region14: #{alphahex_forward.1} parent=1 // pred_check
      _
    $region15: #{alphahex_forward.1} parent=1 // pred_check_branch
      %43 = sbr.rel (0) target = $region17
    $region16: #{alphahex_forward.1} parent=1 // pred_region
      _
    $region17: #{alphahex_forward.1} parent=1 // pred_fallthru
      _
    // Predicated region
    $region18: #{alphahex_forward.1} parent=1 // pred_check
      _
    $region19: #{alphahex_forward.1} parent=1 // pred_check_branch
      %45 = sbr.rel (0) target = $region21
    $region20: #{alphahex_forward.1} parent=1 // pred_region
      _
    $region21: #{alphahex_forward.1} parent=1 // pred_fallthru
      _
    // Predicated region
    $region22: #{alphahex_forward.1} parent=1 // pred_check
      _
    $region23: #{alphahex_forward.1} parent=1 // pred_check_branch
      %47 = sbr.rel (0) target = $region25
    $region24: #{alphahex_forward.1} parent=1 // pred_region
      _
    $region25: #{alphahex_forward.1} parent=1 // pred_fallthru
      _
    // Predicated region
    $region26: #{alphahex_forward.1} parent=1 // pred_check
      _
    $region27: #{alphahex_forward.1} parent=1 // pred_check_branch
      %49 = sbr.rel (0) target = $region29
    $region28: #{alphahex_forward.1} parent=1 // pred_region
      %s51 = ssub.s32 32, 32
      %52 = vsyncadd [#allocation8], %s51
      %s54 = sshll.u32 [#allocation9], 4
      %s55 = int_to_ptr.vmem [resolvable:$true] %s54
      %57 = dma.hbm_to_vmem [thread:$0]  %s6, 32, %s55, [#allocation8]
    $region29: #{alphahex_forward.1} parent=1 // pred_fallthru
      _
    // Predicated region
    $region30: #{alphahex_forward.1} parent=1 // pred_check
      _
    $region31: #{alphahex_forward.1} parent=1 // pred_check_branch
      %59 = sbr.rel (0) target = $region33
    $region32: #{alphahex_forward.1} parent=1 // pred_region
      %s61 = ssub.s32 16, 16
      %62 = vsyncadd [#allocation11], %s61
      %s64 = sshll.u32 [#allocation10], 4
      %s65 = int_to_ptr.vmem [resolvable:$true] %s64
      %67 = dma.hbm_to_vmem [thread:$0]  %s9, 16, %s65, [#allocation11]
    $region33: #{alphahex_forward.1} parent=1 // pred_fallthru
      _
    // Predicated region
    $region34: #{alphahex_forward.1} parent=1 // pred_check
      _
    $region35: #{alphahex_forward.1} parent=1 // pred_check_branch
      %69 = sbr.rel (0) target = $region37
    $region36: #{alphahex_forward.1} parent=1 // pred_region
      %70 = dma.done [#allocation6], 512
    $region37: #{alphahex_forward.1} parent=1 // pred_fallthru
      _
    // Predicated region
    $region38: #{alphahex_forward.1} parent=1 // pred_check
      _
    $region39: #{alphahex_forward.1} parent=1 // pred_check_branch
      %72 = sbr.rel (0) target = $region41
    $region40: #{alphahex_forward.1} parent=1 // pred_region
      %73 = dma.done [#allocation8], 32
    $region41: #{alphahex_forward.1} parent=1 // pred_fallthru
      _
    // Predicated region
    $region42: #{alphahex_forward.1} parent=1 // pred_check
      _
    $region43: #{alphahex_forward.1} parent=1 // pred_check_branch
      %75 = sbr.rel (0) target = $region45
    $region44: #{alphahex_forward.1} parent=1 // pred_region
      %76 = dma.done [#allocation8], 32
    $region45: #{alphahex_forward.1} parent=1 // pred_fallthru
      _
    // Predicated region
    $region46: #{alphahex_forward.1} parent=1 // pred_check
      _
    $region47: #{alphahex_forward.1} parent=1 // pred_check_branch
      %78 = sbr.rel (0) target = $region49
    $region48: #{alphahex_forward.1} parent=1 // pred_region
      %79 = dma.done [#allocation11], 16
    $region49: #{alphahex_forward.1} parent=1 // pred_fallthru
      _
    %s82 = sshll.u32 1, 14
    %s83 = sxor.u32 4294967295, %s82
    %s85 = sld [smem:[#allocation0]]
    %s86 = sadd.s32 2, %s85
    %s88 = sshll.u32 7, 26
    %s89 = sxor.u32 4294967295, %s88
    %s90 = sand.u32 0, %s89
    %s91 = sshll.u32 %s86, 26
    %s92 = sor.u32 %s90, %s91
    %s93 = sshll.u32 [#allocation2], 4
    %s94 = int_to_ptr.vmem [resolvable:$true] %s93
    %97 = sst [smem:[#allocation13]] 256
    %s98 = scalar_lea.smem [#allocation13], 1
    %99 = sst [smem:[%s98]] 256
    %s100 = scalar_lea.smem [#allocation13], 2
    %101 = sst [smem:[%s100]] 2
    %s102 = scalar_lea.smem [#allocation13], 3
    %103 = sst [smem:[%s102]] 64
    %s104 = scalar_lea.smem [#allocation13], 4
    %105 = sst [smem:[%s104]] 128
    %s106 = scalar_lea.smem [#allocation13], 5
    %107 = sst [smem:[%s106]] 2
    %s108 = scalar_lea.smem [#allocation13], 6
    %109 = sst [smem:[%s108]] 128
    %s110 = scalar_lea.smem [#allocation13], 7
    %111 = sst [smem:[%s110]] 64
    %s112 = scalar_lea.smem [#allocation13], 8
    %113 = sst [smem:[%s112]] 4
    %115 = dma.general %s7, 36864, %s94, [#allocation4], [#allocation12], [#allocation13], %s92, 0
    %s116 = scalar_lea.sflag [#allocation4], 1
    %s118 = sshll.u32 1, 14
    %s119 = sxor.u32 4294967295, %s118
    %s121 = sadd.s32 2, %s85
    %s123 = sshll.u32 7, 26
    %s124 = sxor.u32 4294967295, %s123
    %s125 = sand.u32 0, %s124
    %s126 = sshll.u32 %s121, 26
    %s127 = sor.u32 %s125, %s126
    %s128 = sshll.u32 [#allocation3], 4
    %s129 = int_to_ptr.vmem [resolvable:$true] %s128
    %132 = sst [smem:[#allocation15]] 512
    %s133 = scalar_lea.smem [#allocation15], 1
    %134 = sst [smem:[%s133]] 512
    %s135 = scalar_lea.smem [#allocation15], 2
    %136 = sst [smem:[%s135]] 4
    %s137 = scalar_lea.smem [#allocation15], 3
    %138 = sst [smem:[%s137]] 64
    %s139 = scalar_lea.smem [#allocation15], 4
    %140 = sst [smem:[%s139]] 128
    %s141 = scalar_lea.smem [#allocation15], 5
    %142 = sst [smem:[%s141]] 2
    %s143 = scalar_lea.smem [#allocation15], 6
    %144 = sst [smem:[%s143]] 256
    %s145 = scalar_lea.smem [#allocation15], 7
    %146 = sst [smem:[%s145]] 64
    %s147 = scalar_lea.smem [#allocation15], 8
    %148 = sst [smem:[%s147]] 4
    %150 = dma.general %s8, 8192, %s129, %s116, [#allocation14], [#allocation15], %s127, 0
    %v151 = vld [vmem:[%s0] sm:$0xff]
    %v152 = vld [vmem:[%s0 + $0x8] sm:$0xff]
    %v153 = vld [vmem:[%s0 + $0x10] sm:$0xff]
    %v154 = vld [vmem:[%s0 + $0x18] sm:$0xff]
    %v155 = vld [vmem:[%s0 + $0x20] sm:$0xff]
    %v156 = vld [vmem:[%s0 + $0x28] sm:$0xff]
    %v157 = vld [vmem:[%s0 + $0x30] sm:$0xff]
    %v158 = vld [vmem:[%s0 + $0x38] sm:$0xff]
    %v159 = vld [vmem:[#allocation5] sm:$0xff]
    %v160 = vld [vmem:[#allocation5 + $0x8] sm:$0xff]
    %v161 = vld [vmem:[#allocation5 + $0x10] sm:$0xff]
    %v162 = vld [vmem:[#allocation5 + $0x18] sm:$0xff]
    %v163 = vld [vmem:[#allocation7] sm:$0x3]
    %v165 = vlaneseq
    %v166 = vshrl.u32 %v165, 7
    %v167 = vsub.s32 0, %v166
    %v168 = vrot.slane %v163, %v167
    %v169 = vlaneseq
    %v170 = vshrl.u32 %v169, 7
    %v171 = vsub.s32 1, %v170
    %v172 = vrot.slane %v163, %v171
    %vm175 = vcmask 130048
    %v177 = vsel %vm175, %v151, 0
    %v180 = vsel %vm175, %v152, 0
    %v183 = vsel %vm175, %v153, 0
    %v186 = vsel %vm175, %v154, 0
    %v189 = vsel %vm175, %v155, 0
    %v192 = vsel %vm175, %v156, 0
    %v195 = vsel %vm175, %v157, 0
    %v198 = vsel %vm175, %v158, 0
    %200 = vmatprep.subr.mxu0 %v160
    %201 = vmatpush1.msra.mxu0 %v159
    %202 = vmatprep.subr.mxu0 %v162
    %203 = vmatpush1.msra.mxu0 %v161
    %204 = vmatprep.subr.mxu0 0.0
    %205 = vmatpush1.msra.mxu0 0.0
    %206 = vmatprep.subr.mxu0 0.0
    %207 = vmatpush1.msra.mxu0 0.0
    %208 = vmatprep.subr.mxu0 0.0
    %209 = vmatpush1.msra.mxu0 0.0
    %210 = vmatprep.subr.mxu0 0.0
    %211 = vmatpush1.msra.mxu0 0.0
    %212 = vmatprep.subr.mxu0 0.0
    %213 = vmatpush1.msra.mxu0 0.0
    %214 = vmatprep.subr.mxu0 0.0
    %215 = vmatpush1.msra.mxu0 0.0
    %216 = vmatprep.subr.mxu0 0.0
    %217 = vmatpush1.msra.mxu0 0.0
    %218 = vmatprep.subr.mxu0 0.0
    %219 = vmatpush1.msra.mxu0 0.0
    %220 = vmatprep.subr.mxu0 0.0
    %221 = vmatpush1.msra.mxu0 0.0
    %222 = vmatprep.subr.mxu0 0.0
    %223 = vmatpush1.msra.mxu0 0.0
    %224 = vmatprep.subr.mxu0 0.0
    %225 = vmatpush1.msra.mxu0 0.0
    %226 = vmatprep.subr.mxu0 0.0
    %227 = vmatpush1.msra.mxu0 0.0
    %228 = vmatprep.subr.mxu0 0.0
    %229 = vmatpush1.msra.mxu0 0.0
    %230 = vmatprep.subr.mxu0 0.0
    %231 = vmatpush1.msra.mxu0 0.0
    %232 = vmatprep.subr.mxu0 0.0
    %233 = vmatpush1.msra.mxu0 0.0
    %234 = vmatprep.subr.mxu0 0.0
    %235 = vmatpush1.msra.mxu0 0.0
    %236 = vmatprep.subr.mxu0 0.0
    %237 = vmatpush1.msra.mxu0 0.0
    %238 = vmatprep.subr.mxu0 0.0
    %239 = vmatpush1.msra.mxu0 0.0
    %240 = vmatprep.subr.mxu0 0.0
    %241 = vmatpush1.msra.mxu0 0.0
    %242 = vmatprep.subr.mxu0 0.0
    %243 = vmatpush1.msra.mxu0 0.0
    %244 = vmatprep.subr.mxu0 0.0
    %245 = vmatpush1.msra.mxu0 0.0
    %246 = vmatprep.subr.mxu0 0.0
    %247 = vmatpush1.msra.mxu0 0.0
    %248 = vmatprep.subr.mxu0 0.0
    %249 = vmatpush1.msra.mxu0 0.0
    %250 = vmatprep.subr.mxu0 0.0
    %251 = vmatpush1.msra.mxu0 0.0
    %252 = vmatprep.subr.mxu0 0.0
    %253 = vmatpush1.msra.mxu0 0.0
    %254 = vmatprep.subr.mxu0 0.0
    %255 = vmatpush1.msra.mxu0 0.0
    %256 = vmatprep.subr.mxu0 0.0
    %257 = vmatpush1.msra.mxu0 0.0
    %258 = vmatprep.subr.mxu0 0.0
    %259 = vmatpush1.msra.mxu0 0.0
    %260 = vmatprep.subr.mxu0 0.0
    %261 = vmatpush1.msra.mxu0 0.0
    %262 = vmatprep.subr.mxu0 0.0
    %263 = vmatpush1.msra.mxu0 0.0
    %264 = vmatprep.mubr.f32.mxu0 0.0
    %265 = vmatmul.mubr.f32.gmra.mrb[0].mxu0 %v177
    %v266 = vpop.f32.mrb[0].mxu0
    %v267 = vadd.f32 %v168, %v266
    %v268 = vpop.f32.mrb[0].mxu0
    %v269 = vadd.f32 %v172, %v268
    %270 = vmatprep.mubr.f32.mxu0 0.0
    %271 = vmatmul.mubr.f32.gmra.mrb[0].mxu0 %v180
    %v272 = vpop.f32.mrb[0].mxu0
    %v273 = vadd.f32 %v168, %v272
    %v274 = vpop.f32.mrb[0].mxu0
    %v275 = vadd.f32 %v172, %v274
    %276 = vmatprep.mubr.f32.mxu0 0.0
    %277 = vmatmul.mubr.f32.gmra.mrb[0].mxu0 %v183
    %v278 = vpop.f32.mrb[0].mxu0
    %v279 = vadd.f32 %v168, %v278
    %v280 = vpop.f32.mrb[0].mxu0
    %v281 = vadd.f32 %v172, %v280
    %282 = vmatprep.mubr.f32.mxu0 0.0
    %283 = vmatmul.mubr.f32.gmra.mrb[0].mxu0 %v186
    %v284 = vpop.f32.mrb[0].mxu0
    %v285 = vadd.f32 %v168, %v284
    %v286 = vpop.f32.mrb[0].mxu0
    %v287 = vadd.f32 %v172, %v286
    %288 = vmatprep.mubr.f32.mxu0 0.0
    %289 = vmatmul.mubr.f32.gmra.mrb[0].mxu0 %v189
    %v290 = vpop.f32.mrb[0].mxu0
    %v291 = vadd.f32 %v168, %v290
    %v292 = vpop.f32.mrb[0].mxu0
    %v293 = vadd.f32 %v172, %v292
    %294 = vmatprep.mubr.f32.mxu0 0.0
    %295 = vmatmul.mubr.f32.gmra.mrb[0].mxu0 %v192
    %v296 = vpop.f32.mrb[0].mxu0
    %v297 = vadd.f32 %v168, %v296
    %v298 = vpop.f32.mrb[0].mxu0
    %v299 = vadd.f32 %v172, %v298
    %300 = vmatprep.mubr.f32.mxu0 0.0
    %301 = vmatmul.mubr.f32.gmra.mrb[0].mxu0 %v195
    %v302 = vpop.f32.mrb[0].mxu0
    %v303 = vadd.f32 %v168, %v302
    %v304 = vpop.f32.mrb[0].mxu0
    %v305 = vadd.f32 %v172, %v304
    %306 = vmatprep.mubr.f32.mxu0 0.0
    %307 = vmatmul.mubr.f32.gmra.mrb[0].mxu0 %v198
    %v308 = vpop.f32.mrb[0].mxu0
    %v309 = vadd.f32 %v168, %v308
    %v310 = vpop.f32.mrb[0].mxu0
    %v311 = vadd.f32 %v172, %v310
    %312 = vdwg.mxu0
    %v313 = vmax.f32 %v267, 0.0
    %v314 = vmax.f32 %v269, 0.0
    %v315 = vmax.f32 %v273, 0.0
    %v316 = vmax.f32 %v275, 0.0
    %v317 = vmax.f32 %v279, 0.0
    %v318 = vmax.f32 %v281, 0.0
    %v319 = vmax.f32 %v285, 0.0
    %v320 = vmax.f32 %v287, 0.0
    %v321 = vmax.f32 %v291, 0.0
    %v322 = vmax.f32 %v293, 0.0
    %v323 = vmax.f32 %v297, 0.0
    %v324 = vmax.f32 %v299, 0.0
    %v325 = vmax.f32 %v303, 0.0
    %v326 = vmax.f32 %v305, 0.0
    %v327 = vmax.f32 %v309, 0.0
    %v328 = vmax.f32 %v311, 0.0
    %v329 = vld [vmem:[#allocation9] sm:$0x3]
    %v330 = vld [vmem:[%s3] sm:$0xf]
    %v331 = vld [vmem:[%s3 + $0x4] sm:$0xf]
    %v332 = vld [vmem:[%s3 + $0x8] sm:$0xf]
    %v333 = vld [vmem:[%s3 + $0xc] sm:$0xf]
    %v334 = vld [vmem:[%s3 + $0x10] sm:$0xf]
    %v335 = vld [vmem:[%s3 + $0x14] sm:$0xf]
    %v336 = vld [vmem:[%s3 + $0x18] sm:$0xf]
    %v337 = vld [vmem:[%s3 + $0x1c] sm:$0xf]
    %v338 = vld [vmem:[%s3 + $0x20] sm:$0xf]
    %v339 = vld [vmem:[%s3 + $0x24] sm:$0xf]
    %v340 = vld [vmem:[%s3 + $0x28] sm:$0xf]
    %v341 = vld [vmem:[%s3 + $0x2c] sm:$0xf]
    %v342 = vld [vmem:[%s3 + $0x30] sm:$0xf]
    %v343 = vld [vmem:[%s3 + $0x34] sm:$0xf]
    %v344 = vld [vmem:[%s3 + $0x38] sm:$0xf]
    %v345 = vld [vmem:[%s3 + $0x3c] sm:$0xf]
    %v346 = vld [vmem:[%s3 + $0x40] sm:$0xf]
    %v347 = vld [vmem:[%s3 + $0x44] sm:$0xf]
    %v348 = vld [vmem:[%s3 + $0x48] sm:$0xf]
    %v349 = vld [vmem:[%s3 + $0x4c] sm:$0xf]
    %v350 = vld [vmem:[%s3 + $0x50] sm:$0xf]
    %v351 = vld [vmem:[%s3 + $0x54] sm:$0xf]
    %v352 = vld [vmem:[%s3 + $0x58] sm:$0xf]
    %v353 = vld [vmem:[%s3 + $0x5c] sm:$0xf]
    %v354 = vld [vmem:[%s3 + $0x60] sm:$0xf]
    %v355 = vld [vmem:[%s3 + $0x64] sm:$0xf]
    %v356 = vld [vmem:[%s3 + $0x68] sm:$0xf]
    %v357 = vld [vmem:[%s3 + $0x6c] sm:$0xf]
    %v358 = vld [vmem:[%s3 + $0x70] sm:$0xf]
    %v359 = vld [vmem:[%s3 + $0x74] sm:$0xf]
    %v360 = vld [vmem:[%s3 + $0x78] sm:$0xf]
    %v361 = vld [vmem:[%s3 + $0x7c] sm:$0xf]
    %v362 = vld [vmem:[%s3 + $0x80] sm:$0xf]
    %v363 = vld [vmem:[%s3 + $0x84] sm:$0xf]
    %v364 = vld [vmem:[%s3 + $0x88] sm:$0xf]
    %v365 = vld [vmem:[%s3 + $0x8c] sm:$0xf]
    %v366 = vld [vmem:[%s3 + $0x90] sm:$0xf]
    %v367 = vld [vmem:[%s3 + $0x94] sm:$0xf]
    %v368 = vld [vmem:[%s3 + $0x98] sm:$0xf]
    %v369 = vld [vmem:[%s3 + $0x9c] sm:$0xf]
    %v370 = vld [vmem:[%s3 + $0xa0] sm:$0xf]
    %v371 = vld [vmem:[%s3 + $0xa4] sm:$0xf]
    %v372 = vld [vmem:[%s3 + $0xa8] sm:$0xf]
    %v373 = vld [vmem:[%s3 + $0xac] sm:$0xf]
    %v374 = vld [vmem:[%s3 + $0xb0] sm:$0xf]
    %v375 = vpack.c.bf16 %v315, %v313
    %v376 = vpack.c.bf16 %v316, %v314
    %v377 = vpack.c.bf16 %v319, %v317
    %v378 = vpack.c.bf16 %v320, %v318
    %v379 = vpack.c.bf16 %v323, %v321
    %v380 = vpack.c.bf16 %v324, %v322
    %v381 = vpack.c.bf16 %v327, %v325
    %v382 = vpack.c.bf16 %v328, %v326
    %v428 = vunpack.c.l.b16 %v330
    %v429 = vunpack.c.l.b16 %v331
    %v430 = vunpack.c.l.b16 %v332
    %v431 = vunpack.c.l.b16 %v333
    %v432 = vunpack.c.l.b16 %v334
    %v433 = vunpack.c.l.b16 %v335
    %v434 = vunpack.c.l.b16 %v336
    %v435 = vunpack.c.l.b16 %v337
    %v436 = vunpack.c.l.b16 %v338
    %v437 = vunpack.c.l.b16 %v339
    %v438 = vunpack.c.l.b16 %v340
    %v439 = vunpack.c.l.b16 %v341
    %v440 = vunpack.c.l.b16 %v342
    %v441 = vunpack.c.l.b16 %v343
    %v442 = vunpack.c.l.b16 %v344
    %v443 = vunpack.c.l.b16 %v345
    %v444 = vunpack.c.l.b16 %v346
    %v445 = vunpack.c.l.b16 %v347
    %v446 = vunpack.c.l.b16 %v348
    %v447 = vunpack.c.l.b16 %v349
    %v448 = vunpack.c.l.b16 %v350
    %v449 = vunpack.c.l.b16 %v351
    %v450 = vunpack.c.l.b16 %v352
    %v451 = vunpack.c.l.b16 %v353
    %v452 = vunpack.c.l.b16 %v354
    %v453 = vunpack.c.l.b16 %v355
    %v454 = vunpack.c.l.b16 %v356
    %v455 = vunpack.c.l.b16 %v357
    %v456 = vunpack.c.l.b16 %v358
    %v457 = vunpack.c.l.b16 %v359
    %v458 = vunpack.c.l.b16 %v360
    %v459 = vunpack.c.l.b16 %v361
    %v460 = vunpack.c.l.b16 %v362
    %v461 = vunpack.c.l.b16 %v363
    %v462 = vunpack.c.l.b16 %v364
    %v463 = vunpack.c.l.b16 %v365
    %v464 = vunpack.c.l.b16 %v366
    %v465 = vunpack.c.l.b16 %v367
    %v466 = vunpack.c.l.b16 %v368
    %v467 = vunpack.c.l.b16 %v369
    %v468 = vunpack.c.l.b16 %v370
    %v469 = vunpack.c.l.b16 %v371
    %v470 = vunpack.c.l.b16 %v372
    %v471 = vunpack.c.l.b16 %v373
    %v472 = vunpack.c.l.b16 %v374
    %v473 = vpack.c.b16 %v429, %v428
    %v474 = vpack.c.b16 %v431, %v430
    %v475 = vpack.c.b16 %v433, %v432
    %v476 = vpack.c.b16 %v435, %v434
    %v477 = vpack.c.b16 %v437, %v436
    %v478 = vpack.c.b16 %v439, %v438
    %v479 = vpack.c.b16 %v441, %v440
    %v480 = vpack.c.b16 %v443, %v442
    %v481 = vpack.c.b16 %v445, %v444
    %v482 = vpack.c.b16 %v447, %v446
    %v483 = vpack.c.b16 %v449, %v448
    %v484 = vpack.c.b16 %v451, %v450
    %v485 = vpack.c.b16 %v453, %v452
    %v486 = vpack.c.b16 %v455, %v454
    %v487 = vpack.c.b16 %v457, %v456
    %v488 = vpack.c.b16 %v459, %v458
    %v489 = vpack.c.b16 %v461, %v460
    %v490 = vpack.c.b16 %v463, %v462
    %v491 = vpack.c.b16 %v465, %v464
    %v492 = vpack.c.b16 %v467, %v466
    %v493 = vpack.c.b16 %v469, %v468
    %v494 = vpack.c.b16 %v471, %v470
    %v495 = vpack.c.b16 %v472, %v472
    %vm496 = vcmask 523264
    %v498 = vsel %vm496, %v473, 0
    %v501 = vsel %vm496, %v474, 0
    %v504 = vsel %vm496, %v475, 0
    %v507 = vsel %vm496, %v476, 0
    %v510 = vsel %vm496, %v477, 0
    %v513 = vsel %vm496, %v478, 0
    %v516 = vsel %vm496, %v479, 0
    %v519 = vsel %vm496, %v480, 0
    %v522 = vsel %vm496, %v481, 0
    %v525 = vsel %vm496, %v482, 0
    %v528 = vsel %vm496, %v483, 0
    %v531 = vsel %vm496, %v484, 0
    %v534 = vsel %vm496, %v485, 0
    %v537 = vsel %vm496, %v486, 0
    %v540 = vsel %vm496, %v487, 0
    %v543 = vsel %vm496, %v488, 0
    %v546 = vsel %vm496, %v489, 0
    %v549 = vsel %vm496, %v490, 0
    %v552 = vsel %vm496, %v491, 0
    %v555 = vsel %vm496, %v492, 0
    %v558 = vsel %vm496, %v493, 0
    %v561 = vsel %vm496, %v494, 0
    %v564 = vsel %vm496, %v495, 0
    %566 = vmatprep.subr.bf16.mxu0 %v376
    %567 = vmatpush1.bf16.msra.mxu0 %v375
    %568 = vmatprep.subr.bf16.mxu0 %v378
    %569 = vmatpush1.bf16.msra.mxu0 %v377
    %570 = vmatprep.subr.bf16.mxu0 %v380
    %571 = vmatpush1.bf16.msra.mxu0 %v379
    %572 = vmatprep.subr.bf16.mxu0 %v382
    %573 = vmatpush1.bf16.msra.mxu0 %v381
    %574 = vmatprep.subr.bf16.mxu0 0
    %575 = vmatpush1.bf16.msra.mxu0 0
    %576 = vmatprep.subr.bf16.mxu0 0
    %577 = vmatpush1.bf16.msra.mxu0 0
    %578 = vmatprep.subr.bf16.mxu0 0
    %579 = vmatpush1.bf16.msra.mxu0 0
    %580 = vmatprep.subr.bf16.mxu0 0
    %581 = vmatpush1.bf16.msra.mxu0 0
    %582 = vmatprep.subr.bf16.mxu0 0
    %583 = vmatpush1.bf16.msra.mxu0 0
    %584 = vmatprep.subr.bf16.mxu0 0
    %585 = vmatpush1.bf16.msra.mxu0 0
    %586 = vmatprep.subr.bf16.mxu0 0
    %587 = vmatpush1.bf16.msra.mxu0 0
    %588 = vmatprep.subr.bf16.mxu0 0
    %589 = vmatpush1.bf16.msra.mxu0 0
    %590 = vmatprep.subr.bf16.mxu0 0
    %591 = vmatpush1.bf16.msra.mxu0 0
    %592 = vmatprep.subr.bf16.mxu0 0
    %593 = vmatpush1.bf16.msra.mxu0 0
    %594 = vmatprep.subr.bf16.mxu0 0
    %595 = vmatpush1.bf16.msra.mxu0 0
    %596 = vmatprep.subr.bf16.mxu0 0
    %597 = vmatpush1.bf16.msra.mxu0 0
    %598 = vmatprep.mubr.bf16.mxu0 0
    %599 = vmatmul.mubr.bf16.gmra.mrb[0].mxu0 %v498
    %v600 = vpop.f32.mrb[0].mxu0
    %v601 = vadd.f32 0.0, %v600
    %v602 = vpop.f32.mrb[0].mxu0
    %v603 = vadd.f32 0.0, %v602
    %v604 = vpop.f32.mrb[0].mxu0
    %v605 = vadd.f32 0.0, %v604
    %v606 = vpop.f32.mrb[0].mxu0
    %v607 = vadd.f32 0.0, %v606
    %608 = vmatprep.mubr.bf16.mxu0 0
    %609 = vmatmul.mubr.bf16.gmra.mrb[0].mxu0 %v501
    %v610 = vpop.f32.mrb[0].mxu0
    %v611 = vadd.f32 0.0, %v610
    %v612 = vpop.f32.mrb[0].mxu0
    %v613 = vadd.f32 0.0, %v612
    %v614 = vpop.f32.mrb[0].mxu0
    %v615 = vadd.f32 0.0, %v614
    %v616 = vpop.f32.mrb[0].mxu0
    %v617 = vadd.f32 0.0, %v616
    %618 = vmatprep.mubr.bf16.mxu0 0
    %619 = vmatmul.mubr.bf16.gmra.mrb[0].mxu0 %v504
    %v620 = vpop.f32.mrb[0].mxu0
    %v621 = vadd.f32 0.0, %v620
    %v622 = vpop.f32.mrb[0].mxu0
    %v623 = vadd.f32 0.0, %v622
    %v624 = vpop.f32.mrb[0].mxu0
    %v625 = vadd.f32 0.0, %v624
    %v626 = vpop.f32.mrb[0].mxu0
    %v627 = vadd.f32 0.0, %v626
    %628 = vmatprep.mubr.bf16.mxu0 0
    %629 = vmatmul.mubr.bf16.gmra.mrb[0].mxu0 %v507
    %v630 = vpop.f32.mrb[0].mxu0
    %v631 = vadd.f32 0.0, %v630
    %v632 = vpop.f32.mrb[0].mxu0
    %v633 = vadd.f32 0.0, %v632
    %v634 = vpop.f32.mrb[0].mxu0
    %v635 = vadd.f32 0.0, %v634
    %v636 = vpop.f32.mrb[0].mxu0
    %v637 = vadd.f32 0.0, %v636
    %638 = vmatprep.mubr.bf16.mxu0 0
    %639 = vmatmul.mubr.bf16.gmra.mrb[0].mxu0 %v510
    %v640 = vpop.f32.mrb[0].mxu0
    %v641 = vadd.f32 0.0, %v640
    %v642 = vpop.f32.mrb[0].mxu0
    %v643 = vadd.f32 0.0, %v642
    %v644 = vpop.f32.mrb[0].mxu0
    %v645 = vadd.f32 0.0, %v644
    %v646 = vpop.f32.mrb[0].mxu0
    %v647 = vadd.f32 0.0, %v646
    %648 = vmatprep.mubr.bf16.mxu0 0
    %649 = vmatmul.mubr.bf16.gmra.mrb[0].mxu0 %v513
    %v650 = vpop.f32.mrb[0].mxu0
    %v651 = vadd.f32 0.0, %v650
    %v652 = vpop.f32.mrb[0].mxu0
    %v653 = vadd.f32 0.0, %v652
    %v654 = vpop.f32.mrb[0].mxu0
    %v655 = vadd.f32 0.0, %v654
    %v656 = vpop.f32.mrb[0].mxu0
    %v657 = vadd.f32 0.0, %v656
    %658 = vmatprep.mubr.bf16.mxu0 0
    %659 = vmatmul.mubr.bf16.gmra.mrb[0].mxu0 %v516
    %v660 = vpop.f32.mrb[0].mxu0
    %v661 = vadd.f32 0.0, %v660
    %v662 = vpop.f32.mrb[0].mxu0
    %v663 = vadd.f32 0.0, %v662
    %v664 = vpop.f32.mrb[0].mxu0
    %v665 = vadd.f32 0.0, %v664
    %v666 = vpop.f32.mrb[0].mxu0
    %v667 = vadd.f32 0.0, %v666
    %668 = vmatprep.mubr.bf16.mxu0 0
    %669 = vmatmul.mubr.bf16.gmra.mrb[0].mxu0 %v519
    %v670 = vpop.f32.mrb[0].mxu0
    %v671 = vadd.f32 0.0, %v670
    %v672 = vpop.f32.mrb[0].mxu0
    %v673 = vadd.f32 0.0, %v672
    %v674 = vpop.f32.mrb[0].mxu0
    %v675 = vadd.f32 0.0, %v674
    %v676 = vpop.f32.mrb[0].mxu0
    %v677 = vadd.f32 0.0, %v676
    %678 = vmatprep.mubr.bf16.mxu0 0
    %679 = vmatmul.mubr.bf16.gmra.mrb[0].mxu0 %v522
    %v680 = vpop.f32.mrb[0].mxu0
    %v681 = vadd.f32 0.0, %v680
    %v682 = vpop.f32.mrb[0].mxu0
    %v683 = vadd.f32 0.0, %v682
    %v684 = vpop.f32.mrb[0].mxu0
    %v685 = vadd.f32 0.0, %v684
    %v686 = vpop.f32.mrb[0].mxu0
    %v687 = vadd.f32 0.0, %v686
    %688 = vmatprep.mubr.bf16.mxu0 0
    %689 = vmatmul.mubr.bf16.gmra.mrb[0].mxu0 %v525
    %v690 = vpop.f32.mrb[0].mxu0
    %v691 = vadd.f32 0.0, %v690
    %v692 = vpop.f32.mrb[0].mxu0
    %v693 = vadd.f32 0.0, %v692
    %v694 = vpop.f32.mrb[0].mxu0
    %v695 = vadd.f32 0.0, %v694
    %v696 = vpop.f32.mrb[0].mxu0
    %v697 = vadd.f32 0.0, %v696
    %698 = vmatprep.mubr.bf16.mxu0 0
    %699 = vmatmul.mubr.bf16.gmra.mrb[0].mxu0 %v528
    %v700 = vpop.f32.mrb[0].mxu0
    %v701 = vadd.f32 0.0, %v700
    %v702 = vpop.f32.mrb[0].mxu0
    %v703 = vadd.f32 0.0, %v702
    %v704 = vpop.f32.mrb[0].mxu0
    %v705 = vadd.f32 0.0, %v704
    %v706 = vpop.f32.mrb[0].mxu0
    %v707 = vadd.f32 0.0, %v706
    %708 = vmatprep.mubr.bf16.mxu0 0
    %709 = vmatmul.mubr.bf16.gmra.mrb[0].mxu0 %v531
    %v710 = vpop.f32.mrb[0].mxu0
    %v711 = vadd.f32 0.0, %v710
    %v712 = vpop.f32.mrb[0].mxu0
    %v713 = vadd.f32 0.0, %v712
    %v714 = vpop.f32.mrb[0].mxu0
    %v715 = vadd.f32 0.0, %v714
    %v716 = vpop.f32.mrb[0].mxu0
    %v717 = vadd.f32 0.0, %v716
    %718 = vmatprep.mubr.bf16.mxu0 0
    %719 = vmatmul.mubr.bf16.gmra.mrb[0].mxu0 %v534
    %v720 = vpop.f32.mrb[0].mxu0
    %v721 = vadd.f32 0.0, %v720
    %v722 = vpop.f32.mrb[0].mxu0
    %v723 = vadd.f32 0.0, %v722
    %v724 = vpop.f32.mrb[0].mxu0
    %v725 = vadd.f32 0.0, %v724
    %v726 = vpop.f32.mrb[0].mxu0
    %v727 = vadd.f32 0.0, %v726
    %728 = vmatprep.mubr.bf16.mxu0 0
    %729 = vmatmul.mubr.bf16.gmra.mrb[0].mxu0 %v537
    %v730 = vpop.f32.mrb[0].mxu0
    %v731 = vadd.f32 0.0, %v730
    %v732 = vpop.f32.mrb[0].mxu0
    %v733 = vadd.f32 0.0, %v732
    %v734 = vpop.f32.mrb[0].mxu0
    %v735 = vadd.f32 0.0, %v734
    %v736 = vpop.f32.mrb[0].mxu0
    %v737 = vadd.f32 0.0, %v736
    %738 = vmatprep.mubr.bf16.mxu0 0
    %739 = vmatmul.mubr.bf16.gmra.mrb[0].mxu0 %v540
    %v740 = vpop.f32.mrb[0].mxu0
    %v741 = vadd.f32 0.0, %v740
    %v742 = vpop.f32.mrb[0].mxu0
    %v743 = vadd.f32 0.0, %v742
    %v744 = vpop.f32.mrb[0].mxu0
    %v745 = vadd.f32 0.0, %v744
    %v746 = vpop.f32.mrb[0].mxu0
    %v747 = vadd.f32 0.0, %v746
    %748 = vmatprep.mubr.bf16.mxu0 0
    %749 = vmatmul.mubr.bf16.gmra.mrb[0].mxu0 %v543
    %v750 = vpop.f32.mrb[0].mxu0
    %v751 = vadd.f32 0.0, %v750
    %v752 = vpop.f32.mrb[0].mxu0
    %v753 = vadd.f32 0.0, %v752
    %v754 = vpop.f32.mrb[0].mxu0
    %v755 = vadd.f32 0.0, %v754
    %v756 = vpop.f32.mrb[0].mxu0
    %v757 = vadd.f32 0.0, %v756
    %758 = vmatprep.mubr.bf16.mxu0 0
    %759 = vmatmul.mubr.bf16.gmra.mrb[0].mxu0 %v546
    %v760 = vpop.f32.mrb[0].mxu0
    %v761 = vadd.f32 0.0, %v760
    %v762 = vpop.f32.mrb[0].mxu0
    %v763 = vadd.f32 0.0, %v762
    %v764 = vpop.f32.mrb[0].mxu0
    %v765 = vadd.f32 0.0, %v764
    %v766 = vpop.f32.mrb[0].mxu0
    %v767 = vadd.f32 0.0, %v766
    %768 = vmatprep.mubr.bf16.mxu0 0
    %769 = vmatmul.mubr.bf16.gmra.mrb[0].mxu0 %v549
    %v770 = vpop.f32.mrb[0].mxu0
    %v771 = vadd.f32 0.0, %v770
    %v772 = vpop.f32.mrb[0].mxu0
    %v773 = vadd.f32 0.0, %v772
    %v774 = vpop.f32.mrb[0].mxu0
    %v775 = vadd.f32 0.0, %v774
    %v776 = vpop.f32.mrb[0].mxu0
    %v777 = vadd.f32 0.0, %v776
    %778 = vmatprep.mubr.bf16.mxu0 0
    %779 = vmatmul.mubr.bf16.gmra.mrb[0].mxu0 %v552
    %v780 = vpop.f32.mrb[0].mxu0
    %v781 = vadd.f32 0.0, %v780
    %v782 = vpop.f32.mrb[0].mxu0
    %v783 = vadd.f32 0.0, %v782
    %v784 = vpop.f32.mrb[0].mxu0
    %v785 = vadd.f32 0.0, %v784
    %v786 = vpop.f32.mrb[0].mxu0
    %v787 = vadd.f32 0.0, %v786
    %788 = vmatprep.mubr.bf16.mxu0 0
    %789 = vmatmul.mubr.bf16.gmra.mrb[0].mxu0 %v555
    %v790 = vpop.f32.mrb[0].mxu0
    %v791 = vadd.f32 0.0, %v790
    %v792 = vpop.f32.mrb[0].mxu0
    %v793 = vadd.f32 0.0, %v792
    %v794 = vpop.f32.mrb[0].mxu0
    %v795 = vadd.f32 0.0, %v794
    %v796 = vpop.f32.mrb[0].mxu0
    %v797 = vadd.f32 0.0, %v796
    %798 = vmatprep.mubr.bf16.mxu0 0
    %799 = vmatmul.mubr.bf16.gmra.mrb[0].mxu0 %v558
    %v800 = vpop.f32.mrb[0].mxu0
    %v801 = vadd.f32 0.0, %v800
    %v802 = vpop.f32.mrb[0].mxu0
    %v803 = vadd.f32 0.0, %v802
    %v804 = vpop.f32.mrb[0].mxu0
    %v805 = vadd.f32 0.0, %v804
    %v806 = vpop.f32.mrb[0].mxu0
    %v807 = vadd.f32 0.0, %v806
    %808 = vmatprep.mubr.bf16.mxu0 0
    %809 = vmatmul.mubr.bf16.gmra.mrb[0].mxu0 %v561
    %v810 = vpop.f32.mrb[0].mxu0
    %v811 = vadd.f32 0.0, %v810
    %v812 = vpop.f32.mrb[0].mxu0
    %v813 = vadd.f32 0.0, %v812
    %v814 = vpop.f32.mrb[0].mxu0
    %v815 = vadd.f32 0.0, %v814
    %v816 = vpop.f32.mrb[0].mxu0
    %v817 = vadd.f32 0.0, %v816
    %818 = vmatprep.mubr.bf16.mxu0 0
    %819 = vmatmul.mubr.bf16.gmra.mrb[0].mxu0 %v564
    %v820 = vpop.f32.mrb[0].mxu0
    %v821 = vadd.f32 0.0, %v820
    %v822 = vpop.f32.mrb[0].mxu0
    %v823 = vadd.f32 0.0, %v822
    %v824 = vpop.f32.mrb[0].mxu0
    %v825 = vpop.f32.mrb[0].mxu0
    %826 = vdwg.mxu0
    %v827 = vpack.c.bf16 %v605, %v601
    %v828 = vpack.c.bf16 %v607, %v603
    %v829 = vpack.c.bf16 %v615, %v611
    %v830 = vpack.c.bf16 %v617, %v613
    %v831 = vpack.c.bf16 %v621, %v621
    %v832 = vpack.c.bf16 %v623, %v623
    %v833 = vpack.c.bf16 %v631, %v625
    %v834 = vpack.c.bf16 %v633, %v627
    %v835 = vpack.c.bf16 %v641, %v635
    %v836 = vpack.c.bf16 %v643, %v637
    %v837 = vpack.c.bf16 %v645, %v645
    %v838 = vpack.c.bf16 %v647, %v647
    %v839 = vpack.c.bf16 %v655, %v651
    %v840 = vpack.c.bf16 %v657, %v653
    %v841 = vpack.c.bf16 %v665, %v661
    %v842 = vpack.c.bf16 %v667, %v663
    %v843 = vpack.c.bf16 %v671, %v671
    %v844 = vpack.c.bf16 %v673, %v673
    %v845 = vpack.c.bf16 %v681, %v675
    %v846 = vpack.c.bf16 %v683, %v677
    %v847 = vpack.c.bf16 %v691, %v685
    %v848 = vpack.c.bf16 %v693, %v687
    %v849 = vpack.c.bf16 %v695, %v695
    %v850 = vpack.c.bf16 %v697, %v697
    %v851 = vpack.c.bf16 %v705, %v701
    %v852 = vpack.c.bf16 %v707, %v703
    %v853 = vpack.c.bf16 %v715, %v711
    %v854 = vpack.c.bf16 %v717, %v713
    %v855 = vpack.c.bf16 %v721, %v721
    %v856 = vpack.c.bf16 %v723, %v723
    %v857 = vpack.c.bf16 %v731, %v725
    %v858 = vpack.c.bf16 %v733, %v727
    %v859 = vpack.c.bf16 %v741, %v735
    %v860 = vpack.c.bf16 %v743, %v737
    %v861 = vpack.c.bf16 %v745, %v745
    %v862 = vpack.c.bf16 %v747, %v747
    %v863 = vpack.c.bf16 %v755, %v751
    %v864 = vpack.c.bf16 %v757, %v753
    %v865 = vpack.c.bf16 %v765, %v761
    %v866 = vpack.c.bf16 %v767, %v763
    %v867 = vpack.c.bf16 %v771, %v771
    %v868 = vpack.c.bf16 %v773, %v773
    %v869 = vpack.c.bf16 %v781, %v775
    %v870 = vpack.c.bf16 %v783, %v777
    %v871 = vpack.c.bf16 %v791, %v785
    %v872 = vpack.c.bf16 %v793, %v787
    %v873 = vpack.c.bf16 %v795, %v795
    %v874 = vpack.c.bf16 %v797, %v797
    %v875 = vpack.c.bf16 %v805, %v801
    %v876 = vpack.c.bf16 %v807, %v803
    %v877 = vpack.c.bf16 %v815, %v811
    %v878 = vpack.c.bf16 %v817, %v813
    %v879 = vpack.c.bf16 %v821, %v821
    %v880 = vpack.c.bf16 %v823, %v823
    %s881 = smul.u32 4, 288
    %s882 = smul.u32 %s881, 2
    %s883 = sshll.u32 %s882, 4
    %884 = dma.done [#allocation4], %s883
    %v885 = vld [vmem:[#allocation2] sm:$0xff]
    %v886 = vld [vmem:[#allocation2 + $0x8] sm:$0xff]
    %v887 = vld [vmem:[#allocation2 + $0x10] sm:$0xff]
    %v888 = vld [vmem:[#allocation2 + $0x18] sm:$0xff]
    %v889 = vld [vmem:[#allocation2 + $0x20] sm:$0xff]
    %v890 = vld [vmem:[#allocation2 + $0x28] sm:$0xff]
    %v891 = vld [vmem:[#allocation2 + $0x30] sm:$0xff]
    %v892 = vld [vmem:[#allocation2 + $0x38] sm:$0xff]
    %v893 = vld [vmem:[#allocation2 + $0x40] sm:$0xff]
    %v894 = vld [vmem:[#allocation2 + $0x48] sm:$0xff]
    %v895 = vld [vmem:[#allocation2 + $0x50] sm:$0xff]
    %v896 = vld [vmem:[#allocation2 + $0x58] sm:$0xff]
    %v897 = vld [vmem:[#allocation2 + $0x60] sm:$0xff]
    %v898 = vld [vmem:[#allocation2 + $0x68] sm:$0xff]
    %v899 = vld [vmem:[#allocation2 + $0x70] sm:$0xff]
    %v900 = vld [vmem:[#allocation2 + $0x78] sm:$0xff]
    %v901 = vld [vmem:[#allocation2 + $0x80] sm:$0xff]
    %v902 = vld [vmem:[#allocation2 + $0x88] sm:$0xff]
    %v903 = vld [vmem:[#allocation2 + $0x90] sm:$0xff]
    %v904 = vld [vmem:[#allocation2 + $0x98] sm:$0xff]
    %v905 = vld [vmem:[#allocation2 + $0xa0] sm:$0xff]
    %v906 = vld [vmem:[#allocation2 + $0xa8] sm:$0xff]
    %v907 = vld [vmem:[#allocation2 + $0xb0] sm:$0xff]
    %v908 = vld [vmem:[#allocation2 + $0xb8] sm:$0xff]
    %v909 = vld [vmem:[#allocation2 + $0xc0] sm:$0xff]
    %v910 = vld [vmem:[#allocation2 + $0xc8] sm:$0xff]
    %v911 = vld [vmem:[#allocation2 + $0xd0] sm:$0xff]
    %v912 = vld [vmem:[#allocation2 + $0xd8] sm:$0xff]
    %v913 = vld [vmem:[#allocation2 + $0xe0] sm:$0xff]
    %v914 = vld [vmem:[#allocation2 + $0xe8] sm:$0xff]
    %v915 = vld [vmem:[#allocation2 + $0xf0] sm:$0xff]
    %v916 = vld [vmem:[#allocation2 + $0xf8] sm:$0xff]
    %v917 = vld [vmem:[#allocation2 + $0x100] sm:$0xff]
    %v918 = vld [vmem:[#allocation2 + $0x108] sm:$0xff]
    %v919 = vld [vmem:[#allocation2 + $0x110] sm:$0xff]
    %v920 = vld [vmem:[#allocation2 + $0x118] sm:$0xff]
    %v921 = vld [vmem:[#allocation2 + $0x120] sm:$0xff]
    %v922 = vld [vmem:[#allocation2 + $0x128] sm:$0xff]
    %v923 = vld [vmem:[#allocation2 + $0x130] sm:$0xff]
    %v924 = vld [vmem:[#allocation2 + $0x138] sm:$0xff]
    %v925 = vld [vmem:[#allocation2 + $0x140] sm:$0xff]
    %v926 = vld [vmem:[#allocation2 + $0x148] sm:$0xff]
    %v927 = vld [vmem:[#allocation2 + $0x150] sm:$0xff]
    %v928 = vld [vmem:[#allocation2 + $0x158] sm:$0xff]
    %v929 = vld [vmem:[#allocation2 + $0x160] sm:$0xff]
    %v930 = vld [vmem:[#allocation2 + $0x168] sm:$0xff]
    %v931 = vld [vmem:[#allocation2 + $0x170] sm:$0xff]
    %v932 = vld [vmem:[#allocation2 + $0x178] sm:$0xff]
    %v933 = vld [vmem:[#allocation2 + $0x180] sm:$0xff]
    %v934 = vld [vmem:[#allocation2 + $0x188] sm:$0xff]
    %v935 = vld [vmem:[#allocation2 + $0x190] sm:$0xff]
    %v936 = vld [vmem:[#allocation2 + $0x198] sm:$0xff]
    %v937 = vld [vmem:[#allocation2 + $0x1a0] sm:$0xff]
    %v938 = vld [vmem:[#allocation2 + $0x1a8] sm:$0xff]
    %v939 = vld [vmem:[#allocation2 + $0x1b0] sm:$0xff]
    %v940 = vld [vmem:[#allocation2 + $0x1b8] sm:$0xff]
    %v941 = vld [vmem:[#allocation2 + $0x1c0] sm:$0xff]
    %v942 = vld [vmem:[#allocation2 + $0x1c8] sm:$0xff]
    %v943 = vld [vmem:[#allocation2 + $0x1d0] sm:$0xff]
    %v944 = vld [vmem:[#allocation2 + $0x1d8] sm:$0xff]
    %v945 = vld [vmem:[#allocation2 + $0x1e0] sm:$0xff]
    %v946 = vld [vmem:[#allocation2 + $0x1e8] sm:$0xff]
    %v947 = vld [vmem:[#allocation2 + $0x1f0] sm:$0xff]
    %v948 = vld [vmem:[#allocation2 + $0x1f8] sm:$0xff]
    %v949 = vld [vmem:[#allocation2 + $0x200] sm:$0xff]
    %v950 = vld [vmem:[#allocation2 + $0x208] sm:$0xff]
    %v951 = vld [vmem:[#allocation2 + $0x210] sm:$0xff]
    %v952 = vld [vmem:[#allocation2 + $0x218] sm:$0xff]
    %v953 = vld [vmem:[#allocation2 + $0x220] sm:$0xff]
    %v954 = vld [vmem:[#allocation2 + $0x228] sm:$0xff]
    %v955 = vld [vmem:[#allocation2 + $0x230] sm:$0xff]
    %v956 = vld [vmem:[#allocation2 + $0x238] sm:$0xff]
    %v957 = vld [vmem:[#allocation2 + $0x240] sm:$0xff]
    %v958 = vld [vmem:[#allocation2 + $0x248] sm:$0xff]
    %v959 = vld [vmem:[#allocation2 + $0x250] sm:$0xff]
    %v960 = vld [vmem:[#allocation2 + $0x258] sm:$0xff]
    %v961 = vld [vmem:[#allocation2 + $0x260] sm:$0xff]
    %v962 = vld [vmem:[#allocation2 + $0x268] sm:$0xff]
    %v963 = vld [vmem:[#allocation2 + $0x270] sm:$0xff]
    %v964 = vld [vmem:[#allocation2 + $0x278] sm:$0xff]
    %v965 = vld [vmem:[#allocation2 + $0x280] sm:$0xff]
    %v966 = vld [vmem:[#allocation2 + $0x288] sm:$0xff]
    %v967 = vld [vmem:[#allocation2 + $0x290] sm:$0xff]
    %v968 = vld [vmem:[#allocation2 + $0x298] sm:$0xff]
    %v969 = vld [vmem:[#allocation2 + $0x2a0] sm:$0xff]
    %v970 = vld [vmem:[#allocation2 + $0x2a8] sm:$0xff]
    %v971 = vld [vmem:[#allocation2 + $0x2b0] sm:$0xff]
    %v972 = vld [vmem:[#allocation2 + $0x2b8] sm:$0xff]
    %v973 = vld [vmem:[#allocation2 + $0x2c0] sm:$0xff]
    %v974 = vld [vmem:[#allocation2 + $0x2c8] sm:$0xff]
    %v975 = vld [vmem:[#allocation2 + $0x2d0] sm:$0xff]
    %v976 = vld [vmem:[#allocation2 + $0x2d8] sm:$0xff]
    %v977 = vld [vmem:[#allocation2 + $0x2e0] sm:$0xff]
    %v978 = vld [vmem:[#allocation2 + $0x2e8] sm:$0xff]
    %v979 = vld [vmem:[#allocation2 + $0x2f0] sm:$0xff]
    %v980 = vld [vmem:[#allocation2 + $0x2f8] sm:$0xff]
    %v981 = vld [vmem:[#allocation2 + $0x300] sm:$0xff]
    %v982 = vld [vmem:[#allocation2 + $0x308] sm:$0xff]
    %v983 = vld [vmem:[#allocation2 + $0x310] sm:$0xff]
    %v984 = vld [vmem:[#allocation2 + $0x318] sm:$0xff]
    %v985 = vld [vmem:[#allocation2 + $0x320] sm:$0xff]
    %v986 = vld [vmem:[#allocation2 + $0x328] sm:$0xff]
    %v987 = vld [vmem:[#allocation2 + $0x330] sm:$0xff]
    %v988 = vld [vmem:[#allocation2 + $0x338] sm:$0xff]
    %v989 = vld [vmem:[#allocation2 + $0x340] sm:$0xff]
    %v990 = vld [vmem:[#allocation2 + $0x348] sm:$0xff]
    %v991 = vld [vmem:[#allocation2 + $0x350] sm:$0xff]
    %v992 = vld [vmem:[#allocation2 + $0x358] sm:$0xff]
    %v993 = vld [vmem:[#allocation2 + $0x360] sm:$0xff]
    %v994 = vld [vmem:[#allocation2 + $0x368] sm:$0xff]
    %v995 = vld [vmem:[#allocation2 + $0x370] sm:$0xff]
    %v996 = vld [vmem:[#allocation2 + $0x378] sm:$0xff]
    %v997 = vld [vmem:[#allocation2 + $0x380] sm:$0xff]
    %v998 = vld [vmem:[#allocation2 + $0x388] sm:$0xff]
    %v999 = vld [vmem:[#allocation2 + $0x390] sm:$0xff]
    %v1000 = vld [vmem:[#allocation2 + $0x398] sm:$0xff]
    %v1001 = vld [vmem:[#allocation2 + $0x3a0] sm:$0xff]
    %v1002 = vld [vmem:[#allocation2 + $0x3a8] sm:$0xff]
    %v1003 = vld [vmem:[#allocation2 + $0x3b0] sm:$0xff]
    %v1004 = vld [vmem:[#allocation2 + $0x3b8] sm:$0xff]
    %v1005 = vld [vmem:[#allocation2 + $0x3c0] sm:$0xff]
    %v1006 = vld [vmem:[#allocation2 + $0x3c8] sm:$0xff]
    %v1007 = vld [vmem:[#allocation2 + $0x3d0] sm:$0xff]
    %v1008 = vld [vmem:[#allocation2 + $0x3d8] sm:$0xff]
    %v1009 = vld [vmem:[#allocation2 + $0x3e0] sm:$0xff]
    %v1010 = vld [vmem:[#allocation2 + $0x3e8] sm:$0xff]
    %v1011 = vld [vmem:[#allocation2 + $0x3f0] sm:$0xff]
    %v1012 = vld [vmem:[#allocation2 + $0x3f8] sm:$0xff]
    %v1013 = vld [vmem:[#allocation2 + $0x400] sm:$0xff]
    %v1014 = vld [vmem:[#allocation2 + $0x408] sm:$0xff]
    %v1015 = vld [vmem:[#allocation2 + $0x410] sm:$0xff]
    %v1016 = vld [vmem:[#allocation2 + $0x418] sm:$0xff]
    %v1017 = vld [vmem:[#allocation2 + $0x420] sm:$0xff]
    %v1018 = vld [vmem:[#allocation2 + $0x428] sm:$0xff]
    %v1019 = vld [vmem:[#allocation2 + $0x430] sm:$0xff]
    %v1020 = vld [vmem:[#allocation2 + $0x438] sm:$0xff]
    %v1021 = vld [vmem:[#allocation2 + $0x440] sm:$0xff]
    %v1022 = vld [vmem:[#allocation2 + $0x448] sm:$0xff]
    %v1023 = vld [vmem:[#allocation2 + $0x450] sm:$0xff]
    %v1024 = vld [vmem:[#allocation2 + $0x458] sm:$0xff]
    %v1025 = vld [vmem:[#allocation2 + $0x460] sm:$0xff]
    %v1026 = vld [vmem:[#allocation2 + $0x468] sm:$0xff]
    %v1027 = vld [vmem:[#allocation2 + $0x470] sm:$0xff]
    %v1028 = vld [vmem:[#allocation2 + $0x478] sm:$0xff]
    %v1029 = vld [vmem:[#allocation2 + $0x480] sm:$0xff]
    %v1030 = vld [vmem:[#allocation2 + $0x488] sm:$0xff]
    %v1031 = vld [vmem:[#allocation2 + $0x490] sm:$0xff]
    %v1032 = vld [vmem:[#allocation2 + $0x498] sm:$0xff]
    %v1033 = vld [vmem:[#allocation2 + $0x4a0] sm:$0xff]
    %v1034 = vld [vmem:[#allocation2 + $0x4a8] sm:$0xff]
    %v1035 = vld [vmem:[#allocation2 + $0x4b0] sm:$0xff]
    %v1036 = vld [vmem:[#allocation2 + $0x4b8] sm:$0xff]
    %v1037 = vld [vmem:[#allocation2 + $0x4c0] sm:$0xff]
    %v1038 = vld [vmem:[#allocation2 + $0x4c8] sm:$0xff]
    %v1039 = vld [vmem:[#allocation2 + $0x4d0] sm:$0xff]
    %v1040 = vld [vmem:[#allocation2 + $0x4d8] sm:$0xff]
    %v1041 = vld [vmem:[#allocation2 + $0x4e0] sm:$0xff]
    %v1042 = vld [vmem:[#allocation2 + $0x4e8] sm:$0xff]
    %v1043 = vld [vmem:[#allocation2 + $0x4f0] sm:$0xff]
    %v1044 = vld [vmem:[#allocation2 + $0x4f8] sm:$0xff]
    %v1045 = vld [vmem:[#allocation2 + $0x500] sm:$0xff]
    %v1046 = vld [vmem:[#allocation2 + $0x508] sm:$0xff]
    %v1047 = vld [vmem:[#allocation2 + $0x510] sm:$0xff]
    %v1048 = vld [vmem:[#allocation2 + $0x518] sm:$0xff]
    %v1049 = vld [vmem:[#allocation2 + $0x520] sm:$0xff]
    %v1050 = vld [vmem:[#allocation2 + $0x528] sm:$0xff]
    %v1051 = vld [vmem:[#allocation2 + $0x530] sm:$0xff]
    %v1052 = vld [vmem:[#allocation2 + $0x538] sm:$0xff]
    %v1053 = vld [vmem:[#allocation2 + $0x540] sm:$0xff]
    %v1054 = vld [vmem:[#allocation2 + $0x548] sm:$0xff]
    %v1055 = vld [vmem:[#allocation2 + $0x550] sm:$0xff]
    %v1056 = vld [vmem:[#allocation2 + $0x558] sm:$0xff]
    %v1057 = vld [vmem:[#allocation2 + $0x560] sm:$0xff]
    %v1058 = vld [vmem:[#allocation2 + $0x568] sm:$0xff]
    %v1059 = vld [vmem:[#allocation2 + $0x570] sm:$0xff]
    %v1060 = vld [vmem:[#allocation2 + $0x578] sm:$0xff]
    %v1061 = vld [vmem:[#allocation2 + $0x580] sm:$0xff]
    %v1062 = vld [vmem:[#allocation2 + $0x588] sm:$0xff]
    %v1063 = vld [vmem:[#allocation2 + $0x590] sm:$0xff]
    %v1064 = vld [vmem:[#allocation2 + $0x598] sm:$0xff]
    %v1065 = vld [vmem:[#allocation2 + $0x5a0] sm:$0xff]
    %v1066 = vld [vmem:[#allocation2 + $0x5a8] sm:$0xff]
    %v1067 = vld [vmem:[#allocation2 + $0x5b0] sm:$0xff]
    %v1068 = vld [vmem:[#allocation2 + $0x5b8] sm:$0xff]
    %v1069 = vld [vmem:[#allocation2 + $0x5c0] sm:$0xff]
    %v1070 = vld [vmem:[#allocation2 + $0x5c8] sm:$0xff]
    %v1071 = vld [vmem:[#allocation2 + $0x5d0] sm:$0xff]
    %v1072 = vld [vmem:[#allocation2 + $0x5d8] sm:$0xff]
    %v1073 = vld [vmem:[#allocation2 + $0x5e0] sm:$0xff]
    %v1074 = vld [vmem:[#allocation2 + $0x5e8] sm:$0xff]
    %v1075 = vld [vmem:[#allocation2 + $0x5f0] sm:$0xff]
    %v1076 = vld [vmem:[#allocation2 + $0x5f8] sm:$0xff]
    %v1077 = vld [vmem:[#allocation2 + $0x600] sm:$0xff]
    %v1078 = vld [vmem:[#allocation2 + $0x608] sm:$0xff]
    %v1079 = vld [vmem:[#allocation2 + $0x610] sm:$0xff]
    %v1080 = vld [vmem:[#allocation2 + $0x618] sm:$0xff]
    %v1081 = vld [vmem:[#allocation2 + $0x620] sm:$0xff]
    %v1082 = vld [vmem:[#allocation2 + $0x628] sm:$0xff]
    %v1083 = vld [vmem:[#allocation2 + $0x630] sm:$0xff]
    %v1084 = vld [vmem:[#allocation2 + $0x638] sm:$0xff]
    %v1085 = vld [vmem:[#allocation2 + $0x640] sm:$0xff]
    %v1086 = vld [vmem:[#allocation2 + $0x648] sm:$0xff]
    %v1087 = vld [vmem:[#allocation2 + $0x650] sm:$0xff]
    %v1088 = vld [vmem:[#allocation2 + $0x658] sm:$0xff]
    %v1089 = vld [vmem:[#allocation2 + $0x660] sm:$0xff]
    %v1090 = vld [vmem:[#allocation2 + $0x668] sm:$0xff]
    %v1091 = vld [vmem:[#allocation2 + $0x670] sm:$0xff]
    %v1092 = vld [vmem:[#allocation2 + $0x678] sm:$0xff]
    %v1093 = vld [vmem:[#allocation2 + $0x680] sm:$0xff]
    %v1094 = vld [vmem:[#allocation2 + $0x688] sm:$0xff]
    %v1095 = vld [vmem:[#allocation2 + $0x690] sm:$0xff]
    %v1096 = vld [vmem:[#allocation2 + $0x698] sm:$0xff]
    %v1097 = vld [vmem:[#allocation2 + $0x6a0] sm:$0xff]
    %v1098 = vld [vmem:[#allocation2 + $0x6a8] sm:$0xff]
    %v1099 = vld [vmem:[#allocation2 + $0x6b0] sm:$0xff]
    %v1100 = vld [vmem:[#allocation2 + $0x6b8] sm:$0xff]
    %v1101 = vld [vmem:[#allocation2 + $0x6c0] sm:$0xff]
    %v1102 = vld [vmem:[#allocation2 + $0x6c8] sm:$0xff]
    %v1103 = vld [vmem:[#allocation2 + $0x6d0] sm:$0xff]
    %v1104 = vld [vmem:[#allocation2 + $0x6d8] sm:$0xff]
    %v1105 = vld [vmem:[#allocation2 + $0x6e0] sm:$0xff]
    %v1106 = vld [vmem:[#allocation2 + $0x6e8] sm:$0xff]
    %v1107 = vld [vmem:[#allocation2 + $0x6f0] sm:$0xff]
    %v1108 = vld [vmem:[#allocation2 + $0x6f8] sm:$0xff]
    %v1109 = vld [vmem:[#allocation2 + $0x700] sm:$0xff]
    %v1110 = vld [vmem:[#allocation2 + $0x708] sm:$0xff]
    %v1111 = vld [vmem:[#allocation2 + $0x710] sm:$0xff]
    %v1112 = vld [vmem:[#allocation2 + $0x718] sm:$0xff]
    %v1113 = vld [vmem:[#allocation2 + $0x720] sm:$0xff]
    %v1114 = vld [vmem:[#allocation2 + $0x728] sm:$0xff]
    %v1115 = vld [vmem:[#allocation2 + $0x730] sm:$0xff]
    %v1116 = vld [vmem:[#allocation2 + $0x738] sm:$0xff]
    %v1117 = vld [vmem:[#allocation2 + $0x740] sm:$0xff]
    %v1118 = vld [vmem:[#allocation2 + $0x748] sm:$0xff]
    %v1119 = vld [vmem:[#allocation2 + $0x750] sm:$0xff]
    %v1120 = vld [vmem:[#allocation2 + $0x758] sm:$0xff]
    %v1121 = vld [vmem:[#allocation2 + $0x760] sm:$0xff]
    %v1122 = vld [vmem:[#allocation2 + $0x768] sm:$0xff]
    %v1123 = vld [vmem:[#allocation2 + $0x770] sm:$0xff]
    %v1124 = vld [vmem:[#allocation2 + $0x778] sm:$0xff]
    %v1125 = vld [vmem:[#allocation2 + $0x780] sm:$0xff]
    %v1126 = vld [vmem:[#allocation2 + $0x788] sm:$0xff]
    %v1127 = vld [vmem:[#allocation2 + $0x790] sm:$0xff]
    %v1128 = vld [vmem:[#allocation2 + $0x798] sm:$0xff]
    %v1129 = vld [vmem:[#allocation2 + $0x7a0] sm:$0xff]
    %v1130 = vld [vmem:[#allocation2 + $0x7a8] sm:$0xff]
    %v1131 = vld [vmem:[#allocation2 + $0x7b0] sm:$0xff]
    %v1132 = vld [vmem:[#allocation2 + $0x7b8] sm:$0xff]
    %v1133 = vld [vmem:[#allocation2 + $0x7c0] sm:$0xff]
    %v1134 = vld [vmem:[#allocation2 + $0x7c8] sm:$0xff]
    %v1135 = vld [vmem:[#allocation2 + $0x7d0] sm:$0xff]
    %v1136 = vld [vmem:[#allocation2 + $0x7d8] sm:$0xff]
    %v1137 = vld [vmem:[#allocation2 + $0x7e0] sm:$0xff]
    %v1138 = vld [vmem:[#allocation2 + $0x7e8] sm:$0xff]
    %v1139 = vld [vmem:[#allocation2 + $0x7f0] sm:$0xff]
    %v1140 = vld [vmem:[#allocation2 + $0x7f8] sm:$0xff]
    %v1141 = vld [vmem:[#allocation2 + $0x800] sm:$0xff]
    %v1142 = vld [vmem:[#allocation2 + $0x808] sm:$0xff]
    %v1143 = vld [vmem:[#allocation2 + $0x810] sm:$0xff]
    %v1144 = vld [vmem:[#allocation2 + $0x818] sm:$0xff]
    %v1145 = vld [vmem:[#allocation2 + $0x820] sm:$0xff]
    %v1146 = vld [vmem:[#allocation2 + $0x828] sm:$0xff]
    %v1147 = vld [vmem:[#allocation2 + $0x830] sm:$0xff]
    %v1148 = vld [vmem:[#allocation2 + $0x838] sm:$0xff]
    %v1149 = vld [vmem:[#allocation2 + $0x840] sm:$0xff]
    %v1150 = vld [vmem:[#allocation2 + $0x848] sm:$0xff]
    %v1151 = vld [vmem:[#allocation2 + $0x850] sm:$0xff]
    %v1152 = vld [vmem:[#allocation2 + $0x858] sm:$0xff]
    %v1153 = vld [vmem:[#allocation2 + $0x860] sm:$0xff]
    %v1154 = vld [vmem:[#allocation2 + $0x868] sm:$0xff]
    %v1155 = vld [vmem:[#allocation2 + $0x870] sm:$0xff]
    %v1156 = vld [vmem:[#allocation2 + $0x878] sm:$0xff]
    %v1157 = vld [vmem:[#allocation2 + $0x880] sm:$0xff]
    %v1158 = vld [vmem:[#allocation2 + $0x888] sm:$0xff]
    %v1159 = vld [vmem:[#allocation2 + $0x890] sm:$0xff]
    %v1160 = vld [vmem:[#allocation2 + $0x898] sm:$0xff]
    %v1161 = vld [vmem:[#allocation2 + $0x8a0] sm:$0xff]
    %v1162 = vld [vmem:[#allocation2 + $0x8a8] sm:$0xff]
    %v1163 = vld [vmem:[#allocation2 + $0x8b0] sm:$0xff]
    %v1164 = vld [vmem:[#allocation2 + $0x8b8] sm:$0xff]
    %v1165 = vld [vmem:[#allocation2 + $0x8c0] sm:$0xff]
    %v1166 = vld [vmem:[#allocation2 + $0x8c8] sm:$0xff]
    %v1167 = vld [vmem:[#allocation2 + $0x8d0] sm:$0xff]
    %v1168 = vld [vmem:[#allocation2 + $0x8d8] sm:$0xff]
    %v1169 = vld [vmem:[#allocation2 + $0x8e0] sm:$0xff]
    %v1170 = vld [vmem:[#allocation2 + $0x8e8] sm:$0xff]
    %v1171 = vld [vmem:[#allocation2 + $0x8f0] sm:$0xff]
    %v1172 = vld [vmem:[#allocation2 + $0x8f8] sm:$0xff]
    %v1174 = vlaneseq
    %v1175 = vshrl.u32 %v1174, 7
    %v1176 = vsub.s32 0, %v1175
    %v1177 = vrot.slane %v329, %v1176
    %v1178 = vlaneseq
    %v1179 = vshrl.u32 %v1178, 7
    %v1180 = vsub.s32 1, %v1179
    %v1181 = vrot.slane %v329, %v1180
    %1184 = vmatprep.subr.bf16.mxu0 %v886
    %1185 = vmatpush1.bf16.msra.mxu0 %v885
    %1186 = vmatprep.subr.bf16.mxu0 %v888
    %1187 = vmatpush1.bf16.msra.mxu0 %v887
    %1188 = vmatprep.subr.bf16.mxu0 %v890
    %1189 = vmatpush1.bf16.msra.mxu0 %v889
    %1190 = vmatprep.subr.bf16.mxu0 %v892
    %1191 = vmatpush1.bf16.msra.mxu0 %v891
    %1192 = vmatprep.subr.bf16.mxu0 %v894
    %1193 = vmatpush1.bf16.msra.mxu0 %v893
    %1194 = vmatprep.subr.bf16.mxu0 %v896
    %1195 = vmatpush1.bf16.msra.mxu0 %v895
    %1196 = vmatprep.subr.bf16.mxu0 %v898
    %1197 = vmatpush1.bf16.msra.mxu0 %v897
    %1198 = vmatprep.subr.bf16.mxu0 %v900
    %1199 = vmatpush1.bf16.msra.mxu0 %v899
    %1200 = vmatprep.subr.bf16.mxu0 %v902
    %1201 = vmatpush1.bf16.msra.mxu0 %v901
    %1202 = vmatprep.subr.bf16.mxu0 %v904
    %1203 = vmatpush1.bf16.msra.mxu0 %v903
    %1204 = vmatprep.subr.bf16.mxu0 %v906
    %1205 = vmatpush1.bf16.msra.mxu0 %v905
    %1206 = vmatprep.subr.bf16.mxu0 %v908
    %1207 = vmatpush1.bf16.msra.mxu0 %v907
    %1208 = vmatprep.subr.bf16.mxu0 %v910
    %1209 = vmatpush1.bf16.msra.mxu0 %v909
    %1210 = vmatprep.subr.bf16.mxu0 %v912
    %1211 = vmatpush1.bf16.msra.mxu0 %v911
    %1212 = vmatprep.subr.bf16.mxu0 %v914
    %1213 = vmatpush1.bf16.msra.mxu0 %v913
    %1214 = vmatprep.subr.bf16.mxu0 %v916
    %1215 = vmatpush1.bf16.msra.mxu0 %v915
    %1216 = vmatprep.mubr.bf16.mxu0 %v828
    %1217 = vmatmul.mubr.bf16.gmra.mrb[0].mxu0 %v827
    %v1218 = vpop.f32.mrb[0].mxu0
    %v1219 = vadd.f32 %v1177, %v1218
    %v1220 = vpop.f32.mrb[0].mxu0
    %v1221 = vadd.f32 %v1181, %v1220
    %v1222 = vpop.f32.mrb[0].mxu0
    %v1223 = vadd.f32 %v1177, %v1222
    %v1224 = vpop.f32.mrb[0].mxu0
    %v1225 = vadd.f32 %v1181, %v1224
    %1226 = vmatprep.mubr.bf16.mxu0 %v830
    %1227 = vmatmul.mubr.bf16.gmra.mrb[0].mxu0 %v829
    %v1228 = vpop.f32.mrb[0].mxu0
    %v1229 = vadd.f32 %v1177, %v1228
    %v1230 = vpop.f32.mrb[0].mxu0
    %v1231 = vadd.f32 %v1181, %v1230
    %v1232 = vpop.f32.mrb[0].mxu0
    %v1233 = vadd.f32 %v1177, %v1232
    %v1234 = vpop.f32.mrb[0].mxu0
    %v1235 = vadd.f32 %v1181, %v1234
    %1236 = vmatprep.mubr.bf16.mxu0 %v832
    %1237 = vmatmul.mubr.bf16.gmra.mrb[0].mxu0 %v831
    %v1238 = vpop.f32.mrb[0].mxu0
    %v1239 = vadd.f32 %v1177, %v1238
    %v1240 = vpop.f32.mrb[0].mxu0
    %v1241 = vadd.f32 %v1181, %v1240
    %v1242 = vpop.f32.mrb[0].mxu0
    %v1243 = vpop.f32.mrb[0].mxu0
    %1244 = vdwg.mxu0
    %1245 = vmatprep.subr.bf16.mxu0 %v918
    %1246 = vmatpush1.bf16.msra.mxu0 %v917
    %1247 = vmatprep.subr.bf16.mxu0 %v920
    %1248 = vmatpush1.bf16.msra.mxu0 %v919
    %1249 = vmatprep.subr.bf16.mxu0 %v922
    %1250 = vmatpush1.bf16.msra.mxu0 %v921
    %1251 = vmatprep.subr.bf16.mxu0 %v924
    %1252 = vmatpush1.bf16.msra.mxu0 %v923
    %1253 = vmatprep.subr.bf16.mxu0 %v926
    %1254 = vmatpush1.bf16.msra.mxu0 %v925
    %1255 = vmatprep.subr.bf16.mxu0 %v928
    %1256 = vmatpush1.bf16.msra.mxu0 %v927
    %1257 = vmatprep.subr.bf16.mxu0 %v930
    %1258 = vmatpush1.bf16.msra.mxu0 %v929
    %1259 = vmatprep.subr.bf16.mxu0 %v932
    %1260 = vmatpush1.bf16.msra.mxu0 %v931
    %1261 = vmatprep.subr.bf16.mxu0 %v934
    %1262 = vmatpush1.bf16.msra.mxu0 %v933
    %1263 = vmatprep.subr.bf16.mxu0 %v936
    %1264 = vmatpush1.bf16.msra.mxu0 %v935
    %1265 = vmatprep.subr.bf16.mxu0 %v938
    %1266 = vmatpush1.bf16.msra.mxu0 %v937
    %1267 = vmatprep.subr.bf16.mxu0 %v940
    %1268 = vmatpush1.bf16.msra.mxu0 %v939
    %1269 = vmatprep.subr.bf16.mxu0 %v942
    %1270 = vmatpush1.bf16.msra.mxu0 %v941
    %1271 = vmatprep.subr.bf16.mxu0 %v944
    %1272 = vmatpush1.bf16.msra.mxu0 %v943
    %1273 = vmatprep.subr.bf16.mxu0 %v946
    %1274 = vmatpush1.bf16.msra.mxu0 %v945
    %1275 = vmatprep.subr.bf16.mxu0 %v948
    %1276 = vmatpush1.bf16.msra.mxu0 %v947
    %1277 = vmatprep.mubr.bf16.mxu0 %v834
    %1278 = vmatmul.mubr.bf16.gmra.mrb[0].mxu0 %v833
    %v1279 = vpop.f32.mrb[0].mxu0
    %v1280 = vadd.f32 %v1219, %v1279
    %v1281 = vpop.f32.mrb[0].mxu0
    %v1282 = vadd.f32 %v1221, %v1281
    %v1283 = vpop.f32.mrb[0].mxu0
    %v1284 = vadd.f32 %v1223, %v1283
    %v1285 = vpop.f32.mrb[0].mxu0
    %v1286 = vadd.f32 %v1225, %v1285
    %1287 = vmatprep.mubr.bf16.mxu0 %v836
    %1288 = vmatmul.mubr.bf16.gmra.mrb[0].mxu0 %v835
    %v1289 = vpop.f32.mrb[0].mxu0
    %v1290 = vadd.f32 %v1229, %v1289
    %v1291 = vpop.f32.mrb[0].mxu0
    %v1292 = vadd.f32 %v1231, %v1291
    %v1293 = vpop.f32.mrb[0].mxu0
    %v1294 = vadd.f32 %v1233, %v1293
    %v1295 = vpop.f32.mrb[0].mxu0
    %v1296 = vadd.f32 %v1235, %v1295
    %1297 = vmatprep.mubr.bf16.mxu0 %v838
    %1298 = vmatmul.mubr.bf16.gmra.mrb[0].mxu0 %v837
    %v1299 = vpop.f32.mrb[0].mxu0
    %v1300 = vadd.f32 %v1239, %v1299
    %v1301 = vpop.f32.mrb[0].mxu0
    %v1302 = vadd.f32 %v1241, %v1301
    %v1303 = vpop.f32.mrb[0].mxu0
    %v1304 = vpop.f32.mrb[0].mxu0
    %1305 = vdwg.mxu0
    %1306 = vmatprep.subr.bf16.mxu0 %v950
    %1307 = vmatpush1.bf16.msra.mxu0 %v949
    %1308 = vmatprep.subr.bf16.mxu0 %v952
    %1309 = vmatpush1.bf16.msra.mxu0 %v951
    %1310 = vmatprep.subr.bf16.mxu0 %v954
    %1311 = vmatpush1.bf16.msra.mxu0 %v953
    %1312 = vmatprep.subr.bf16.mxu0 %v956
    %1313 = vmatpush1.bf16.msra.mxu0 %v955
    %1314 = vmatprep.subr.bf16.mxu0 %v958
    %1315 = vmatpush1.bf16.msra.mxu0 %v957
    %1316 = vmatprep.subr.bf16.mxu0 %v960
    %1317 = vmatpush1.bf16.msra.mxu0 %v959
    %1318 = vmatprep.subr.bf16.mxu0 %v962
    %1319 = vmatpush1.bf16.msra.mxu0 %v961
    %1320 = vmatprep.subr.bf16.mxu0 %v964
    %1321 = vmatpush1.bf16.msra.mxu0 %v963
    %1322 = vmatprep.subr.bf16.mxu0 %v966
    %1323 = vmatpush1.bf16.msra.mxu0 %v965
    %1324 = vmatprep.subr.bf16.mxu0 %v968
    %1325 = vmatpush1.bf16.msra.mxu0 %v967
    %1326 = vmatprep.subr.bf16.mxu0 %v970
    %1327 = vmatpush1.bf16.msra.mxu0 %v969
    %1328 = vmatprep.subr.bf16.mxu0 %v972
    %1329 = vmatpush1.bf16.msra.mxu0 %v971
    %1330 = vmatprep.subr.bf16.mxu0 %v974
    %1331 = vmatpush1.bf16.msra.mxu0 %v973
    %1332 = vmatprep.subr.bf16.mxu0 %v976
    %1333 = vmatpush1.bf16.msra.mxu0 %v975
    %1334 = vmatprep.subr.bf16.mxu0 %v978
    %1335 = vmatpush1.bf16.msra.mxu0 %v977
    %1336 = vmatprep.subr.bf16.mxu0 %v980
    %1337 = vmatpush1.bf16.msra.mxu0 %v979
    %1338 = vmatprep.mubr.bf16.mxu0 %v840
    %1339 = vmatmul.mubr.bf16.gmra.mrb[0].mxu0 %v839
    %v1340 = vpop.f32.mrb[0].mxu0
    %v1341 = vadd.f32 %v1280, %v1340
    %v1342 = vpop.f32.mrb[0].mxu0
    %v1343 = vadd.f32 %v1282, %v1342
    %v1344 = vpop.f32.mrb[0].mxu0
    %v1345 = vadd.f32 %v1284, %v1344
    %v1346 = vpop.f32.mrb[0].mxu0
    %v1347 = vadd.f32 %v1286, %v1346
    %1348 = vmatprep.mubr.bf16.mxu0 %v842
    %1349 = vmatmul.mubr.bf16.gmra.mrb[0].mxu0 %v841
    %v1350 = vpop.f32.mrb[0].mxu0
    %v1351 = vadd.f32 %v1290, %v1350
    %v1352 = vpop.f32.mrb[0].mxu0
    %v1353 = vadd.f32 %v1292, %v1352
    %v1354 = vpop.f32.mrb[0].mxu0
    %v1355 = vadd.f32 %v1294, %v1354
    %v1356 = vpop.f32.mrb[0].mxu0
    %v1357 = vadd.f32 %v1296, %v1356
    %1358 = vmatprep.mubr.bf16.mxu0 %v844
    %1359 = vmatmul.mubr.bf16.gmra.mrb[0].mxu0 %v843
    %v1360 = vpop.f32.mrb[0].mxu0
    %v1361 = vadd.f32 %v1300, %v1360
    %v1362 = vpop.f32.mrb[0].mxu0
    %v1363 = vadd.f32 %v1302, %v1362
    %v1364 = vpop.f32.mrb[0].mxu0
    %v1365 = vpop.f32.mrb[0].mxu0
    %1366 = vdwg.mxu0
    %1367 = vmatprep.subr.bf16.mxu0 %v982
    %1368 = vmatpush1.bf16.msra.mxu0 %v981
    %1369 = vmatprep.subr.bf16.mxu0 %v984
    %1370 = vmatpush1.bf16.msra.mxu0 %v983
    %1371 = vmatprep.subr.bf16.mxu0 %v986
    %1372 = vmatpush1.bf16.msra.mxu0 %v985
    %1373 = vmatprep.subr.bf16.mxu0 %v988
    %1374 = vmatpush1.bf16.msra.mxu0 %v987
    %1375 = vmatprep.subr.bf16.mxu0 %v990
    %1376 = vmatpush1.bf16.msra.mxu0 %v989
    %1377 = vmatprep.subr.bf16.mxu0 %v992
    %1378 = vmatpush1.bf16.msra.mxu0 %v991
    %1379 = vmatprep.subr.bf16.mxu0 %v994
    %1380 = vmatpush1.bf16.msra.mxu0 %v993
    %1381 = vmatprep.subr.bf16.mxu0 %v996
    %1382 = vmatpush1.bf16.msra.mxu0 %v995
    %1383 = vmatprep.subr.bf16.mxu0 %v998
    %1384 = vmatpush1.bf16.msra.mxu0 %v997
    %1385 = vmatprep.subr.bf16.mxu0 %v1000
    %1386 = vmatpush1.bf16.msra.mxu0 %v999
    %1387 = vmatprep.subr.bf16.mxu0 %v1002
    %1388 = vmatpush1.bf16.msra.mxu0 %v1001
    %1389 = vmatprep.subr.bf16.mxu0 %v1004
    %1390 = vmatpush1.bf16.msra.mxu0 %v1003
    %1391 = vmatprep.subr.bf16.mxu0 %v1006
    %1392 = vmatpush1.bf16.msra.mxu0 %v1005
    %1393 = vmatprep.subr.bf16.mxu0 %v1008
    %1394 = vmatpush1.bf16.msra.mxu0 %v1007
    %1395 = vmatprep.subr.bf16.mxu0 %v1010
    %1396 = vmatpush1.bf16.msra.mxu0 %v1009
    %1397 = vmatprep.subr.bf16.mxu0 %v1012
    %1398 = vmatpush1.bf16.msra.mxu0 %v1011
    %1399 = vmatprep.mubr.bf16.mxu0 %v846
    %1400 = vmatmul.mubr.bf16.gmra.mrb[0].mxu0 %v845
    %v1401 = vpop.f32.mrb[0].mxu0
    %v1402 = vadd.f32 %v1341, %v1401
    %v1403 = vpop.f32.mrb[0].mxu0
    %v1404 = vadd.f32 %v1343, %v1403
    %v1405 = vpop.f32.mrb[0].mxu0
    %v1406 = vadd.f32 %v1345, %v1405
    %v1407 = vpop.f32.mrb[0].mxu0
    %v1408 = vadd.f32 %v1347, %v1407
    %1409 = vmatprep.mubr.bf16.mxu0 %v848
    %1410 = vmatmul.mubr.bf16.gmra.mrb[0].mxu0 %v847
    %v1411 = vpop.f32.mrb[0].mxu0
    %v1412 = vadd.f32 %v1351, %v1411
    %v1413 = vpop.f32.mrb[0].mxu0
    %v1414 = vadd.f32 %v1353, %v1413
    %v1415 = vpop.f32.mrb[0].mxu0
    %v1416 = vadd.f32 %v1355, %v1415
    %v1417 = vpop.f32.mrb[0].mxu0
    %v1418 = vadd.f32 %v1357, %v1417
    %1419 = vmatprep.mubr.bf16.mxu0 %v850
    %1420 = vmatmul.mubr.bf16.gmra.mrb[0].mxu0 %v849
    %v1421 = vpop.f32.mrb[0].mxu0
    %v1422 = vadd.f32 %v1361, %v1421
    %v1423 = vpop.f32.mrb[0].mxu0
    %v1424 = vadd.f32 %v1363, %v1423
    %v1425 = vpop.f32.mrb[0].mxu0
    %v1426 = vpop.f32.mrb[0].mxu0
    %1427 = vdwg.mxu0
    %1428 = vmatprep.subr.bf16.mxu0 %v1014
    %1429 = vmatpush1.bf16.msra.mxu0 %v1013
    %1430 = vmatprep.subr.bf16.mxu0 %v1016
    %1431 = vmatpush1.bf16.msra.mxu0 %v1015
    %1432 = vmatprep.subr.bf16.mxu0 %v1018
    %1433 = vmatpush1.bf16.msra.mxu0 %v1017
    %1434 = vmatprep.subr.bf16.mxu0 %v1020
    %1435 = vmatpush1.bf16.msra.mxu0 %v1019
    %1436 = vmatprep.subr.bf16.mxu0 %v1022
    %1437 = vmatpush1.bf16.msra.mxu0 %v1021
    %1438 = vmatprep.subr.bf16.mxu0 %v1024
    %1439 = vmatpush1.bf16.msra.mxu0 %v1023
    %1440 = vmatprep.subr.bf16.mxu0 %v1026
    %1441 = vmatpush1.bf16.msra.mxu0 %v1025
    %1442 = vmatprep.subr.bf16.mxu0 %v1028
    %1443 = vmatpush1.bf16.msra.mxu0 %v1027
    %1444 = vmatprep.subr.bf16.mxu0 %v1030
    %1445 = vmatpush1.bf16.msra.mxu0 %v1029
    %1446 = vmatprep.subr.bf16.mxu0 %v1032
    %1447 = vmatpush1.bf16.msra.mxu0 %v1031
    %1448 = vmatprep.subr.bf16.mxu0 %v1034
    %1449 = vmatpush1.bf16.msra.mxu0 %v1033
    %1450 = vmatprep.subr.bf16.mxu0 %v1036
    %1451 = vmatpush1.bf16.msra.mxu0 %v1035
    %1452 = vmatprep.subr.bf16.mxu0 %v1038
    %1453 = vmatpush1.bf16.msra.mxu0 %v1037
    %1454 = vmatprep.subr.bf16.mxu0 %v1040
    %1455 = vmatpush1.bf16.msra.mxu0 %v1039
    %1456 = vmatprep.subr.bf16.mxu0 %v1042
    %1457 = vmatpush1.bf16.msra.mxu0 %v1041
    %1458 = vmatprep.subr.bf16.mxu0 %v1044
    %1459 = vmatpush1.bf16.msra.mxu0 %v1043
    %1460 = vmatprep.mubr.bf16.mxu0 %v852
    %1461 = vmatmul.mubr.bf16.gmra.mrb[0].mxu0 %v851
    %v1462 = vpop.f32.mrb[0].mxu0
    %v1463 = vadd.f32 %v1402, %v1462
    %v1464 = vpop.f32.mrb[0].mxu0
    %v1465 = vadd.f32 %v1404, %v1464
    %v1466 = vpop.f32.mrb[0].mxu0
    %v1467 = vadd.f32 %v1406, %v1466
    %v1468 = vpop.f32.mrb[0].mxu0
    %v1469 = vadd.f32 %v1408, %v1468
    %1470 = vmatprep.mubr.bf16.mxu0 %v854
    %1471 = vmatmul.mubr.bf16.gmra.mrb[0].mxu0 %v853
    %v1472 = vpop.f32.mrb[0].mxu0
    %v1473 = vadd.f32 %v1412, %v1472
    %v1474 = vpop.f32.mrb[0].mxu0
    %v1475 = vadd.f32 %v1414, %v1474
    %v1476 = vpop.f32.mrb[0].mxu0
    %v1477 = vadd.f32 %v1416, %v1476
    %v1478 = vpop.f32.mrb[0].mxu0
    %v1479 = vadd.f32 %v1418, %v1478
    %1480 = vmatprep.mubr.bf16.mxu0 %v856
    %1481 = vmatmul.mubr.bf16.gmra.mrb[0].mxu0 %v855
    %v1482 = vpop.f32.mrb[0].mxu0
    %v1483 = vadd.f32 %v1422, %v1482
    %v1484 = vpop.f32.mrb[0].mxu0
    %v1485 = vadd.f32 %v1424, %v1484
    %v1486 = vpop.f32.mrb[0].mxu0
    %v1487 = vpop.f32.mrb[0].mxu0
    %1488 = vdwg.mxu0
    %1489 = vmatprep.subr.bf16.mxu0 %v1046
    %1490 = vmatpush1.bf16.msra.mxu0 %v1045
    %1491 = vmatprep.subr.bf16.mxu0 %v1048
    %1492 = vmatpush1.bf16.msra.mxu0 %v1047
    %1493 = vmatprep.subr.bf16.mxu0 %v1050
    %1494 = vmatpush1.bf16.msra.mxu0 %v1049
    %1495 = vmatprep.subr.bf16.mxu0 %v1052
    %1496 = vmatpush1.bf16.msra.mxu0 %v1051
    %1497 = vmatprep.subr.bf16.mxu0 %v1054
    %1498 = vmatpush1.bf16.msra.mxu0 %v1053
    %1499 = vmatprep.subr.bf16.mxu0 %v1056
    %1500 = vmatpush1.bf16.msra.mxu0 %v1055
    %1501 = vmatprep.subr.bf16.mxu0 %v1058
    %1502 = vmatpush1.bf16.msra.mxu0 %v1057
    %1503 = vmatprep.subr.bf16.mxu0 %v1060
    %1504 = vmatpush1.bf16.msra.mxu0 %v1059
    %1505 = vmatprep.subr.bf16.mxu0 %v1062
    %1506 = vmatpush1.bf16.msra.mxu0 %v1061
    %1507 = vmatprep.subr.bf16.mxu0 %v1064
    %1508 = vmatpush1.bf16.msra.mxu0 %v1063
    %1509 = vmatprep.subr.bf16.mxu0 %v1066
    %1510 = vmatpush1.bf16.msra.mxu0 %v1065
    %1511 = vmatprep.subr.bf16.mxu0 %v1068
    %1512 = vmatpush1.bf16.msra.mxu0 %v1067
    %1513 = vmatprep.subr.bf16.mxu0 %v1070
    %1514 = vmatpush1.bf16.msra.mxu0 %v1069
    %1515 = vmatprep.subr.bf16.mxu0 %v1072
    %1516 = vmatpush1.bf16.msra.mxu0 %v1071
    %1517 = vmatprep.subr.bf16.mxu0 %v1074
    %1518 = vmatpush1.bf16.msra.mxu0 %v1073
    %1519 = vmatprep.subr.bf16.mxu0 %v1076
    %1520 = vmatpush1.bf16.msra.mxu0 %v1075
    %1521 = vmatprep.mubr.bf16.mxu0 %v858
    %1522 = vmatmul.mubr.bf16.gmra.mrb[0].mxu0 %v857
    %v1523 = vpop.f32.mrb[0].mxu0
    %v1524 = vadd.f32 %v1463, %v1523
    %v1525 = vpop.f32.mrb[0].mxu0
    %v1526 = vadd.f32 %v1465, %v1525
    %v1527 = vpop.f32.mrb[0].mxu0
    %v1528 = vadd.f32 %v1467, %v1527
    %v1529 = vpop.f32.mrb[0].mxu0
    %v1530 = vadd.f32 %v1469, %v1529
    %1531 = vmatprep.mubr.bf16.mxu0 %v860
    %1532 = vmatmul.mubr.bf16.gmra.mrb[0].mxu0 %v859
    %v1533 = vpop.f32.mrb[0].mxu0
    %v1534 = vadd.f32 %v1473, %v1533
    %v1535 = vpop.f32.mrb[0].mxu0
    %v1536 = vadd.f32 %v1475, %v1535
    %v1537 = vpop.f32.mrb[0].mxu0
    %v1538 = vadd.f32 %v1477, %v1537
    %v1539 = vpop.f32.mrb[0].mxu0
    %v1540 = vadd.f32 %v1479, %v1539
    %1541 = vmatprep.mubr.bf16.mxu0 %v862
    %1542 = vmatmul.mubr.bf16.gmra.mrb[0].mxu0 %v861
    %v1543 = vpop.f32.mrb[0].mxu0
    %v1544 = vadd.f32 %v1483, %v1543
    %v1545 = vpop.f32.mrb[0].mxu0
    %v1546 = vadd.f32 %v1485, %v1545
    %v1547 = vpop.f32.mrb[0].mxu0
    %v1548 = vpop.f32.mrb[0].mxu0
    %1549 = vdwg.mxu0
    %1550 = vmatprep.subr.bf16.mxu0 %v1078
    %1551 = vmatpush1.bf16.msra.mxu0 %v1077
    %1552 = vmatprep.subr.bf16.mxu0 %v1080
    %1553 = vmatpush1.bf16.msra.mxu0 %v1079
    %1554 = vmatprep.subr.bf16.mxu0 %v1082
    %1555 = vmatpush1.bf16.msra.mxu0 %v1081
    %1556 = vmatprep.subr.bf16.mxu0 %v1084
    %1557 = vmatpush1.bf16.msra.mxu0 %v1083
    %1558 = vmatprep.subr.bf16.mxu0 %v1086
    %1559 = vmatpush1.bf16.msra.mxu0 %v1085
    %1560 = vmatprep.subr.bf16.mxu0 %v1088
    %1561 = vmatpush1.bf16.msra.mxu0 %v1087
    %1562 = vmatprep.subr.bf16.mxu0 %v1090
    %1563 = vmatpush1.bf16.msra.mxu0 %v1089
    %1564 = vmatprep.subr.bf16.mxu0 %v1092
    %1565 = vmatpush1.bf16.msra.mxu0 %v1091
    %1566 = vmatprep.subr.bf16.mxu0 %v1094
    %1567 = vmatpush1.bf16.msra.mxu0 %v1093
    %1568 = vmatprep.subr.bf16.mxu0 %v1096
    %1569 = vmatpush1.bf16.msra.mxu0 %v1095
    %1570 = vmatprep.subr.bf16.mxu0 %v1098
    %1571 = vmatpush1.bf16.msra.mxu0 %v1097
    %1572 = vmatprep.subr.bf16.mxu0 %v1100
    %1573 = vmatpush1.bf16.msra.mxu0 %v1099
    %1574 = vmatprep.subr.bf16.mxu0 %v1102
    %1575 = vmatpush1.bf16.msra.mxu0 %v1101
    %1576 = vmatprep.subr.bf16.mxu0 %v1104
    %1577 = vmatpush1.bf16.msra.mxu0 %v1103
    %1578 = vmatprep.subr.bf16.mxu0 %v1106
    %1579 = vmatpush1.bf16.msra.mxu0 %v1105
    %1580 = vmatprep.subr.bf16.mxu0 %v1108
    %1581 = vmatpush1.bf16.msra.mxu0 %v1107
    %1582 = vmatprep.mubr.bf16.mxu0 %v864
    %1583 = vmatmul.mubr.bf16.gmra.mrb[0].mxu0 %v863
    %v1584 = vpop.f32.mrb[0].mxu0
    %v1585 = vadd.f32 %v1524, %v1584
    %v1586 = vpop.f32.mrb[0].mxu0
    %v1587 = vadd.f32 %v1526, %v1586
    %v1588 = vpop.f32.mrb[0].mxu0
    %v1589 = vadd.f32 %v1528, %v1588
    %v1590 = vpop.f32.mrb[0].mxu0
    %v1591 = vadd.f32 %v1530, %v1590
    %1592 = vmatprep.mubr.bf16.mxu0 %v866
    %1593 = vmatmul.mubr.bf16.gmra.mrb[0].mxu0 %v865
    %v1594 = vpop.f32.mrb[0].mxu0
    %v1595 = vadd.f32 %v1534, %v1594
    %v1596 = vpop.f32.mrb[0].mxu0
    %v1597 = vadd.f32 %v1536, %v1596
    %v1598 = vpop.f32.mrb[0].mxu0
    %v1599 = vadd.f32 %v1538, %v1598
    %v1600 = vpop.f32.mrb[0].mxu0
    %v1601 = vadd.f32 %v1540, %v1600
    %1602 = vmatprep.mubr.bf16.mxu0 %v868
    %1603 = vmatmul.mubr.bf16.gmra.mrb[0].mxu0 %v867
    %v1604 = vpop.f32.mrb[0].mxu0
    %v1605 = vadd.f32 %v1544, %v1604
    %v1606 = vpop.f32.mrb[0].mxu0
    %v1607 = vadd.f32 %v1546, %v1606
    %v1608 = vpop.f32.mrb[0].mxu0
    %v1609 = vpop.f32.mrb[0].mxu0
    %1610 = vdwg.mxu0
    %1611 = vmatprep.subr.bf16.mxu0 %v1110
    %1612 = vmatpush1.bf16.msra.mxu0 %v1109
    %1613 = vmatprep.subr.bf16.mxu0 %v1112
    %1614 = vmatpush1.bf16.msra.mxu0 %v1111
    %1615 = vmatprep.subr.bf16.mxu0 %v1114
    %1616 = vmatpush1.bf16.msra.mxu0 %v1113
    %1617 = vmatprep.subr.bf16.mxu0 %v1116
    %1618 = vmatpush1.bf16.msra.mxu0 %v1115
    %1619 = vmatprep.subr.bf16.mxu0 %v1118
    %1620 = vmatpush1.bf16.msra.mxu0 %v1117
    %1621 = vmatprep.subr.bf16.mxu0 %v1120
    %1622 = vmatpush1.bf16.msra.mxu0 %v1119
    %1623 = vmatprep.subr.bf16.mxu0 %v1122
    %1624 = vmatpush1.bf16.msra.mxu0 %v1121
    %1625 = vmatprep.subr.bf16.mxu0 %v1124
    %1626 = vmatpush1.bf16.msra.mxu0 %v1123
    %1627 = vmatprep.subr.bf16.mxu0 %v1126
    %1628 = vmatpush1.bf16.msra.mxu0 %v1125
    %1629 = vmatprep.subr.bf16.mxu0 %v1128
    %1630 = vmatpush1.bf16.msra.mxu0 %v1127
    %1631 = vmatprep.subr.bf16.mxu0 %v1130
    %1632 = vmatpush1.bf16.msra.mxu0 %v1129
    %1633 = vmatprep.subr.bf16.mxu0 %v1132
    %1634 = vmatpush1.bf16.msra.mxu0 %v1131
    %1635 = vmatprep.subr.bf16.mxu0 %v1134
    %1636 = vmatpush1.bf16.msra.mxu0 %v1133
    %1637 = vmatprep.subr.bf16.mxu0 %v1136
    %1638 = vmatpush1.bf16.msra.mxu0 %v1135
    %1639 = vmatprep.subr.bf16.mxu0 %v1138
    %1640 = vmatpush1.bf16.msra.mxu0 %v1137
    %1641 = vmatprep.subr.bf16.mxu0 %v1140
    %1642 = vmatpush1.bf16.msra.mxu0 %v1139
    %1643 = vmatprep.mubr.bf16.mxu0 %v870
    %1644 = vmatmul.mubr.bf16.gmra.mrb[0].mxu0 %v869
    %v1645 = vpop.f32.mrb[0].mxu0
    %v1646 = vadd.f32 %v1585, %v1645
    %v1647 = vpop.f32.mrb[0].mxu0
    %v1648 = vadd.f32 %v1587, %v1647
    %v1649 = vpop.f32.mrb[0].mxu0
    %v1650 = vadd.f32 %v1589, %v1649
    %v1651 = vpop.f32.mrb[0].mxu0
    %v1652 = vadd.f32 %v1591, %v1651
    %1653 = vmatprep.mubr.bf16.mxu0 %v872
    %1654 = vmatmul.mubr.bf16.gmra.mrb[0].mxu0 %v871
    %v1655 = vpop.f32.mrb[0].mxu0
    %v1656 = vadd.f32 %v1595, %v1655
    %v1657 = vpop.f32.mrb[0].mxu0
    %v1658 = vadd.f32 %v1597, %v1657
    %v1659 = vpop.f32.mrb[0].mxu0
    %v1660 = vadd.f32 %v1599, %v1659
    %v1661 = vpop.f32.mrb[0].mxu0
    %v1662 = vadd.f32 %v1601, %v1661
    %1663 = vmatprep.mubr.bf16.mxu0 %v874
    %1664 = vmatmul.mubr.bf16.gmra.mrb[0].mxu0 %v873
    %v1665 = vpop.f32.mrb[0].mxu0
    %v1666 = vadd.f32 %v1605, %v1665
    %v1667 = vpop.f32.mrb[0].mxu0
    %v1668 = vadd.f32 %v1607, %v1667
    %v1669 = vpop.f32.mrb[0].mxu0
    %v1670 = vpop.f32.mrb[0].mxu0
    %1671 = vdwg.mxu0
    %1672 = vmatprep.subr.bf16.mxu0 %v1142
    %1673 = vmatpush1.bf16.msra.mxu0 %v1141
    %1674 = vmatprep.subr.bf16.mxu0 %v1144
    %1675 = vmatpush1.bf16.msra.mxu0 %v1143
    %1676 = vmatprep.subr.bf16.mxu0 %v1146
    %1677 = vmatpush1.bf16.msra.mxu0 %v1145
    %1678 = vmatprep.subr.bf16.mxu0 %v1148
    %1679 = vmatpush1.bf16.msra.mxu0 %v1147
    %1680 = vmatprep.subr.bf16.mxu0 %v1150
    %1681 = vmatpush1.bf16.msra.mxu0 %v1149
    %1682 = vmatprep.subr.bf16.mxu0 %v1152
    %1683 = vmatpush1.bf16.msra.mxu0 %v1151
    %1684 = vmatprep.subr.bf16.mxu0 %v1154
    %1685 = vmatpush1.bf16.msra.mxu0 %v1153
    %1686 = vmatprep.subr.bf16.mxu0 %v1156
    %1687 = vmatpush1.bf16.msra.mxu0 %v1155
    %1688 = vmatprep.subr.bf16.mxu0 %v1158
    %1689 = vmatpush1.bf16.msra.mxu0 %v1157
    %1690 = vmatprep.subr.bf16.mxu0 %v1160
    %1691 = vmatpush1.bf16.msra.mxu0 %v1159
    %1692 = vmatprep.subr.bf16.mxu0 %v1162
    %1693 = vmatpush1.bf16.msra.mxu0 %v1161
    %1694 = vmatprep.subr.bf16.mxu0 %v1164
    %1695 = vmatpush1.bf16.msra.mxu0 %v1163
    %1696 = vmatprep.subr.bf16.mxu0 %v1166
    %1697 = vmatpush1.bf16.msra.mxu0 %v1165
    %1698 = vmatprep.subr.bf16.mxu0 %v1168
    %1699 = vmatpush1.bf16.msra.mxu0 %v1167
    %1700 = vmatprep.subr.bf16.mxu0 %v1170
    %1701 = vmatpush1.bf16.msra.mxu0 %v1169
    %1702 = vmatprep.subr.bf16.mxu0 %v1172
    %1703 = vmatpush1.bf16.msra.mxu0 %v1171
    %1704 = vmatprep.mubr.bf16.mxu0 %v876
    %1705 = vmatmul.mubr.bf16.gmra.mrb[0].mxu0 %v875
    %v1706 = vpop.f32.mrb[0].mxu0
    %v1707 = vadd.f32 %v1646, %v1706
    %v1708 = vpop.f32.mrb[0].mxu0
    %v1709 = vadd.f32 %v1648, %v1708
    %v1710 = vpop.f32.mrb[0].mxu0
    %v1711 = vadd.f32 %v1650, %v1710
    %v1712 = vpop.f32.mrb[0].mxu0
    %v1713 = vadd.f32 %v1652, %v1712
    %1714 = vmatprep.mubr.bf16.mxu0 %v878
    %1715 = vmatmul.mubr.bf16.gmra.mrb[0].mxu0 %v877
    %v1716 = vpop.f32.mrb[0].mxu0
    %v1717 = vadd.f32 %v1656, %v1716
    %v1718 = vpop.f32.mrb[0].mxu0
    %v1719 = vadd.f32 %v1658, %v1718
    %v1720 = vpop.f32.mrb[0].mxu0
    %v1721 = vadd.f32 %v1660, %v1720
    %v1722 = vpop.f32.mrb[0].mxu0
    %v1723 = vadd.f32 %v1662, %v1722
    %1724 = vmatprep.mubr.bf16.mxu0 %v880
    %1725 = vmatmul.mubr.bf16.gmra.mrb[0].mxu0 %v879
    %v1726 = vpop.f32.mrb[0].mxu0
    %v1727 = vadd.f32 %v1666, %v1726
    %v1728 = vpop.f32.mrb[0].mxu0
    %v1729 = vadd.f32 %v1668, %v1728
    %v1730 = vpop.f32.mrb[0].mxu0
    %v1731 = vpop.f32.mrb[0].mxu0
    %1732 = vdwg.mxu0
    %v1733 = vmax.f32 %v1707, 0.0
    %v1734 = vmax.f32 %v1709, 0.0
    %v1735 = vmax.f32 %v1711, 0.0
    %v1736 = vmax.f32 %v1713, 0.0
    %v1737 = vmax.f32 %v1717, 0.0
    %v1738 = vmax.f32 %v1719, 0.0
    %v1739 = vmax.f32 %v1721, 0.0
    %v1740 = vmax.f32 %v1723, 0.0
    %v1741 = vmax.f32 %v1727, 0.0
    %v1742 = vmax.f32 %v1729, 0.0
    %v1743 = vld [vmem:[%s4] sm:$0xf]
    %v1744 = vld [vmem:[%s4 + $0x4] sm:$0xf]
    %v1745 = vld [vmem:[%s4 + $0x8] sm:$0xf]
    %v1746 = vld [vmem:[%s4 + $0xc] sm:$0xf]
    %v1747 = vld [vmem:[%s4 + $0x10] sm:$0xf]
    %v1748 = vld [vmem:[%s4 + $0x14] sm:$0xf]
    %v1749 = vld [vmem:[%s4 + $0x18] sm:$0xf]
    %v1750 = vld [vmem:[%s4 + $0x1c] sm:$0xf]
    %v1751 = vld [vmem:[%s4 + $0x20] sm:$0xf]
    %v1752 = vld [vmem:[%s4 + $0x24] sm:$0xf]
    %v1753 = vld [vmem:[%s4 + $0x28] sm:$0xf]
    %v1754 = vld [vmem:[%s4 + $0x2c] sm:$0xf]
    %v1755 = vld [vmem:[%s4 + $0x30] sm:$0xf]
    %v1756 = vld [vmem:[%s4 + $0x34] sm:$0xf]
    %v1757 = vld [vmem:[%s4 + $0x38] sm:$0xf]
    %v1758 = vld [vmem:[%s4 + $0x3c] sm:$0xf]
    %v1759 = vld [vmem:[%s4 + $0x40] sm:$0xf]
    %v1760 = vld [vmem:[%s4 + $0x44] sm:$0xf]
    %v1761 = vpack.c.bf16 %v1735, %v1733
    %v1762 = vpack.c.bf16 %v1736, %v1734
    %v1763 = vpack.c.bf16 %v1739, %v1737
    %v1764 = vpack.c.bf16 %v1740, %v1738
    %v1765 = vpack.c.bf16 %v1741, %v1741
    %v1766 = vpack.c.bf16 %v1742, %v1742
    %v1785 = vunpack.c.l.b16 %v1743
    %v1786 = vunpack.c.l.b16 %v1744
    %v1787 = vunpack.c.l.b16 %v1745
    %v1788 = vunpack.c.l.b16 %v1746
    %v1789 = vunpack.c.l.b16 %v1747
    %v1790 = vunpack.c.l.b16 %v1748
    %v1791 = vunpack.c.l.b16 %v1749
    %v1792 = vunpack.c.l.b16 %v1750
    %v1793 = vunpack.c.l.b16 %v1751
    %v1794 = vunpack.c.l.b16 %v1752
    %v1795 = vunpack.c.l.b16 %v1753
    %v1796 = vunpack.c.l.b16 %v1754
    %v1797 = vunpack.c.l.b16 %v1755
    %v1798 = vunpack.c.l.b16 %v1756
    %v1799 = vunpack.c.l.b16 %v1757
    %v1800 = vunpack.c.l.b16 %v1758
    %v1801 = vunpack.c.l.b16 %v1759
    %v1802 = vunpack.c.l.b16 %v1760
    %v1803 = vpack.c.b16 %v1786, %v1785
    %v1804 = vpack.c.b16 %v1788, %v1787
    %v1805 = vpack.c.b16 %v1790, %v1789
    %v1806 = vpack.c.b16 %v1792, %v1791
    %v1807 = vpack.c.b16 %v1794, %v1793
    %v1808 = vpack.c.b16 %v1796, %v1795
    %v1809 = vpack.c.b16 %v1798, %v1797
    %v1810 = vpack.c.b16 %v1800, %v1799
    %v1811 = vpack.c.b16 %v1802, %v1801
    %vm1812 = vcmask 293888
    %v1814 = vsel %vm1812, %v1803, 0
    %v1817 = vsel %vm1812, %v1804, 0
    %v1820 = vsel %vm1812, %v1805, 0
    %v1823 = vsel %vm1812, %v1806, 0
    %v1826 = vsel %vm1812, %v1807, 0
    %v1829 = vsel %vm1812, %v1808, 0
    %v1832 = vsel %vm1812, %v1809, 0
    %v1835 = vsel %vm1812, %v1810, 0
    %v1838 = vsel %vm1812, %v1811, 0
    %vm1840 = vcmask 1041408
    %v1842 = vsel %vm1840, %v1765, 0
    %v1845 = vsel %vm1840, %v1766, 0
    %1847 = vmatprep.subr.bf16.mxu0 %v1762
    %1848 = vmatpush1.bf16.msra.mxu0 %v1761
    %1849 = vmatprep.subr.bf16.mxu0 %v1764
    %1850 = vmatpush1.bf16.msra.mxu0 %v1763
    %1851 = vmatprep.subr.bf16.mxu0 %v1845
    %1852 = vmatpush1.bf16.msra.mxu0 %v1842
    %1853 = vmatprep.subr.bf16.mxu0 0
    %1854 = vmatpush1.bf16.msra.mxu0 0
    %1855 = vmatprep.subr.bf16.mxu0 0
    %1856 = vmatpush1.bf16.msra.mxu0 0
    %1857 = vmatprep.subr.bf16.mxu0 0
    %1858 = vmatpush1.bf16.msra.mxu0 0
    %1859 = vmatprep.subr.bf16.mxu0 0
    %1860 = vmatpush1.bf16.msra.mxu0 0
    %1861 = vmatprep.subr.bf16.mxu0 0
    %1862 = vmatpush1.bf16.msra.mxu0 0
    %1863 = vmatprep.subr.bf16.mxu0 0
    %1864 = vmatpush1.bf16.msra.mxu0 0
    %1865 = vmatprep.subr.bf16.mxu0 0
    %1866 = vmatpush1.bf16.msra.mxu0 0
    %1867 = vmatprep.subr.bf16.mxu0 0
    %1868 = vmatpush1.bf16.msra.mxu0 0
    %1869 = vmatprep.subr.bf16.mxu0 0
    %1870 = vmatpush1.bf16.msra.mxu0 0
    %1871 = vmatprep.subr.bf16.mxu0 0
    %1872 = vmatpush1.bf16.msra.mxu0 0
    %1873 = vmatprep.subr.bf16.mxu0 0
    %1874 = vmatpush1.bf16.msra.mxu0 0
    %1875 = vmatprep.subr.bf16.mxu0 0
    %1876 = vmatpush1.bf16.msra.mxu0 0
    %1877 = vmatprep.subr.bf16.mxu0 0
    %1878 = vmatpush1.bf16.msra.mxu0 0
    %1879 = vmatprep.mubr.bf16.mxu0 0
    %1880 = vmatmul.mubr.bf16.gmra.mrb[0].mxu0 %v1814
    %v1881 = vpop.f32.mrb[0].mxu0
    %v1882 = vadd.f32 0.0, %v1881
    %v1883 = vpop.f32.mrb[0].mxu0
    %v1884 = vadd.f32 0.0, %v1883
    %v1885 = vpop.f32.mrb[0].mxu0
    %v1886 = vadd.f32 0.0, %v1885
    %v1887 = vpop.f32.mrb[0].mxu0
    %v1888 = vadd.f32 0.0, %v1887
    %1889 = vmatprep.mubr.bf16.mxu0 0
    %1890 = vmatmul.mubr.bf16.gmra.mrb[0].mxu0 %v1817
    %v1891 = vpop.f32.mrb[0].mxu0
    %v1892 = vadd.f32 0.0, %v1891
    %v1893 = vpop.f32.mrb[0].mxu0
    %v1894 = vadd.f32 0.0, %v1893
    %v1895 = vpop.f32.mrb[0].mxu0
    %v1896 = vadd.f32 0.0, %v1895
    %v1897 = vpop.f32.mrb[0].mxu0
    %v1898 = vadd.f32 0.0, %v1897
    %1899 = vmatprep.mubr.bf16.mxu0 0
    %1900 = vmatmul.mubr.bf16.gmra.mrb[0].mxu0 %v1820
    %v1901 = vpop.f32.mrb[0].mxu0
    %v1902 = vadd.f32 0.0, %v1901
    %v1903 = vpop.f32.mrb[0].mxu0
    %v1904 = vadd.f32 0.0, %v1903
    %v1905 = vpop.f32.mrb[0].mxu0
    %v1906 = vadd.f32 0.0, %v1905
    %v1907 = vpop.f32.mrb[0].mxu0
    %v1908 = vadd.f32 0.0, %v1907
    %1909 = vmatprep.mubr.bf16.mxu0 0
    %1910 = vmatmul.mubr.bf16.gmra.mrb[0].mxu0 %v1823
    %v1911 = vpop.f32.mrb[0].mxu0
    %v1912 = vadd.f32 0.0, %v1911
    %v1913 = vpop.f32.mrb[0].mxu0
    %v1914 = vadd.f32 0.0, %v1913
    %v1915 = vpop.f32.mrb[0].mxu0
    %v1916 = vadd.f32 0.0, %v1915
    %v1917 = vpop.f32.mrb[0].mxu0
    %v1918 = vadd.f32 0.0, %v1917
    %1919 = vmatprep.mubr.bf16.mxu0 0
    %1920 = vmatmul.mubr.bf16.gmra.mrb[0].mxu0 %v1826
    %v1921 = vpop.f32.mrb[0].mxu0
    %v1922 = vadd.f32 0.0, %v1921
    %v1923 = vpop.f32.mrb[0].mxu0
    %v1924 = vadd.f32 0.0, %v1923
    %v1925 = vpop.f32.mrb[0].mxu0
    %v1926 = vadd.f32 0.0, %v1925
    %v1927 = vpop.f32.mrb[0].mxu0
    %v1928 = vadd.f32 0.0, %v1927
    %1929 = vmatprep.mubr.bf16.mxu0 0
    %1930 = vmatmul.mubr.bf16.gmra.mrb[0].mxu0 %v1829
    %v1931 = vpop.f32.mrb[0].mxu0
    %v1932 = vadd.f32 0.0, %v1931
    %v1933 = vpop.f32.mrb[0].mxu0
    %v1934 = vadd.f32 0.0, %v1933
    %v1935 = vpop.f32.mrb[0].mxu0
    %v1936 = vadd.f32 0.0, %v1935
    %v1937 = vpop.f32.mrb[0].mxu0
    %v1938 = vadd.f32 0.0, %v1937
    %1939 = vmatprep.mubr.bf16.mxu0 0
    %1940 = vmatmul.mubr.bf16.gmra.mrb[0].mxu0 %v1832
    %v1941 = vpop.f32.mrb[0].mxu0
    %v1942 = vadd.f32 0.0, %v1941
    %v1943 = vpop.f32.mrb[0].mxu0
    %v1944 = vadd.f32 0.0, %v1943
    %v1945 = vpop.f32.mrb[0].mxu0
    %v1946 = vadd.f32 0.0, %v1945
    %v1947 = vpop.f32.mrb[0].mxu0
    %v1948 = vadd.f32 0.0, %v1947
    %1949 = vmatprep.mubr.bf16.mxu0 0
    %1950 = vmatmul.mubr.bf16.gmra.mrb[0].mxu0 %v1835
    %v1951 = vpop.f32.mrb[0].mxu0
    %v1952 = vadd.f32 0.0, %v1951
    %v1953 = vpop.f32.mrb[0].mxu0
    %v1954 = vadd.f32 0.0, %v1953
    %v1955 = vpop.f32.mrb[0].mxu0
    %v1956 = vadd.f32 0.0, %v1955
    %v1957 = vpop.f32.mrb[0].mxu0
    %v1958 = vadd.f32 0.0, %v1957
    %1959 = vmatprep.mubr.bf16.mxu0 0
    %1960 = vmatmul.mubr.bf16.gmra.mrb[0].mxu0 %v1838
    %v1961 = vpop.f32.mrb[0].mxu0
    %v1962 = vadd.f32 0.0, %v1961
    %v1963 = vpop.f32.mrb[0].mxu0
    %v1964 = vadd.f32 0.0, %v1963
    %v1965 = vpop.f32.mrb[0].mxu0
    %v1966 = vadd.f32 0.0, %v1965
    %v1967 = vpop.f32.mrb[0].mxu0
    %v1968 = vadd.f32 0.0, %v1967
    %1969 = vdwg.mxu0
    %v1970 = vpack.c.bf16 %v1886, %v1882
    %v1971 = vpack.c.bf16 %v1888, %v1884
    %v1972 = vpack.c.bf16 %v1896, %v1892
    %v1973 = vpack.c.bf16 %v1898, %v1894
    %v1974 = vpack.c.bf16 %v1906, %v1902
    %v1975 = vpack.c.bf16 %v1908, %v1904
    %v1976 = vpack.c.bf16 %v1916, %v1912
    %v1977 = vpack.c.bf16 %v1918, %v1914
    %v1978 = vpack.c.bf16 %v1926, %v1922
    %v1979 = vpack.c.bf16 %v1928, %v1924
    %v1980 = vpack.c.bf16 %v1936, %v1932
    %v1981 = vpack.c.bf16 %v1938, %v1934
    %v1982 = vpack.c.bf16 %v1946, %v1942
    %v1983 = vpack.c.bf16 %v1948, %v1944
    %v1984 = vpack.c.bf16 %v1956, %v1952
    %v1985 = vpack.c.bf16 %v1958, %v1954
    %v1986 = vpack.c.bf16 %v1966, %v1962
    %v1987 = vpack.c.bf16 %v1968, %v1964
    %1988 = vmatprep.subr.bf16.mxu0 %v886
    %1989 = vmatpush1.bf16.msra.mxu0 %v885
    %1990 = vmatprep.subr.bf16.mxu0 %v888
    %1991 = vmatpush1.bf16.msra.mxu0 %v887
    %1992 = vmatprep.subr.bf16.mxu0 %v890
    %1993 = vmatpush1.bf16.msra.mxu0 %v889
    %1994 = vmatprep.subr.bf16.mxu0 %v892
    %1995 = vmatpush1.bf16.msra.mxu0 %v891
    %1996 = vmatprep.subr.bf16.mxu0 %v894
    %1997 = vmatpush1.bf16.msra.mxu0 %v893
    %1998 = vmatprep.subr.bf16.mxu0 %v896
    %1999 = vmatpush1.bf16.msra.mxu0 %v895
    %2000 = vmatprep.subr.bf16.mxu0 %v898
    %2001 = vmatpush1.bf16.msra.mxu0 %v897
    %2002 = vmatprep.subr.bf16.mxu0 %v900
    %2003 = vmatpush1.bf16.msra.mxu0 %v899
    %2004 = vmatprep.subr.bf16.mxu0 %v902
    %2005 = vmatpush1.bf16.msra.mxu0 %v901
    %2006 = vmatprep.subr.bf16.mxu0 %v904
    %2007 = vmatpush1.bf16.msra.mxu0 %v903
    %2008 = vmatprep.subr.bf16.mxu0 %v906
    %2009 = vmatpush1.bf16.msra.mxu0 %v905
    %2010 = vmatprep.subr.bf16.mxu0 %v908
    %2011 = vmatpush1.bf16.msra.mxu0 %v907
    %2012 = vmatprep.subr.bf16.mxu0 %v910
    %2013 = vmatpush1.bf16.msra.mxu0 %v909
    %2014 = vmatprep.subr.bf16.mxu0 %v912
    %2015 = vmatpush1.bf16.msra.mxu0 %v911
    %2016 = vmatprep.subr.bf16.mxu0 %v914
    %2017 = vmatpush1.bf16.msra.mxu0 %v913
    %2018 = vmatprep.subr.bf16.mxu0 %v916
    %2019 = vmatpush1.bf16.msra.mxu0 %v915
    %2020 = vmatprep.mubr.bf16.mxu0 %v1971
    %2021 = vmatmul.mubr.bf16.gmra.mrb[0].mxu0 %v1970
    %v2022 = vpop.f32.mrb[0].mxu0
    %v2023 = vadd.f32 %v1177, %v2022
    %v2024 = vpop.f32.mrb[0].mxu0
    %v2025 = vadd.f32 %v1181, %v2024
    %v2026 = vpop.f32.mrb[0].mxu0
    %v2027 = vadd.f32 %v1177, %v2026
    %v2028 = vpop.f32.mrb[0].mxu0
    %v2029 = vadd.f32 %v1181, %v2028
    %2030 = vdwg.mxu0
    %2031 = vmatprep.subr.bf16.mxu0 %v918
    %2032 = vmatpush1.bf16.msra.mxu0 %v917
    %2033 = vmatprep.subr.bf16.mxu0 %v920
    %2034 = vmatpush1.bf16.msra.mxu0 %v919
    %2035 = vmatprep.subr.bf16.mxu0 %v922
    %2036 = vmatpush1.bf16.msra.mxu0 %v921
    %2037 = vmatprep.subr.bf16.mxu0 %v924
    %2038 = vmatpush1.bf16.msra.mxu0 %v923
    %2039 = vmatprep.subr.bf16.mxu0 %v926
    %2040 = vmatpush1.bf16.msra.mxu0 %v925
    %2041 = vmatprep.subr.bf16.mxu0 %v928
    %2042 = vmatpush1.bf16.msra.mxu0 %v927
    %2043 = vmatprep.subr.bf16.mxu0 %v930
    %2044 = vmatpush1.bf16.msra.mxu0 %v929
    %2045 = vmatprep.subr.bf16.mxu0 %v932
    %2046 = vmatpush1.bf16.msra.mxu0 %v931
    %2047 = vmatprep.subr.bf16.mxu0 %v934
    %2048 = vmatpush1.bf16.msra.mxu0 %v933
    %2049 = vmatprep.subr.bf16.mxu0 %v936
    %2050 = vmatpush1.bf16.msra.mxu0 %v935
    %2051 = vmatprep.subr.bf16.mxu0 %v938
    %2052 = vmatpush1.bf16.msra.mxu0 %v937
    %2053 = vmatprep.subr.bf16.mxu0 %v940
    %2054 = vmatpush1.bf16.msra.mxu0 %v939
    %2055 = vmatprep.subr.bf16.mxu0 %v942
    %2056 = vmatpush1.bf16.msra.mxu0 %v941
    %2057 = vmatprep.subr.bf16.mxu0 %v944
    %2058 = vmatpush1.bf16.msra.mxu0 %v943
    %2059 = vmatprep.subr.bf16.mxu0 %v946
    %2060 = vmatpush1.bf16.msra.mxu0 %v945
    %2061 = vmatprep.subr.bf16.mxu0 %v948
    %2062 = vmatpush1.bf16.msra.mxu0 %v947
    %2063 = vmatprep.mubr.bf16.mxu0 %v1973
    %2064 = vmatmul.mubr.bf16.gmra.mrb[0].mxu0 %v1972
    %v2065 = vpop.f32.mrb[0].mxu0
    %v2066 = vadd.f32 %v2023, %v2065
    %v2067 = vpop.f32.mrb[0].mxu0
    %v2068 = vadd.f32 %v2025, %v2067
    %v2069 = vpop.f32.mrb[0].mxu0
    %v2070 = vadd.f32 %v2027, %v2069
    %v2071 = vpop.f32.mrb[0].mxu0
    %v2072 = vadd.f32 %v2029, %v2071
    %2073 = vdwg.mxu0
    %2074 = vmatprep.subr.bf16.mxu0 %v950
    %2075 = vmatpush1.bf16.msra.mxu0 %v949
    %2076 = vmatprep.subr.bf16.mxu0 %v952
    %2077 = vmatpush1.bf16.msra.mxu0 %v951
    %2078 = vmatprep.subr.bf16.mxu0 %v954
    %2079 = vmatpush1.bf16.msra.mxu0 %v953
    %2080 = vmatprep.subr.bf16.mxu0 %v956
    %2081 = vmatpush1.bf16.msra.mxu0 %v955
    %2082 = vmatprep.subr.bf16.mxu0 %v958
    %2083 = vmatpush1.bf16.msra.mxu0 %v957
    %2084 = vmatprep.subr.bf16.mxu0 %v960
    %2085 = vmatpush1.bf16.msra.mxu0 %v959
    %2086 = vmatprep.subr.bf16.mxu0 %v962
    %2087 = vmatpush1.bf16.msra.mxu0 %v961
    %2088 = vmatprep.subr.bf16.mxu0 %v964
    %2089 = vmatpush1.bf16.msra.mxu0 %v963
    %2090 = vmatprep.subr.bf16.mxu0 %v966
    %2091 = vmatpush1.bf16.msra.mxu0 %v965
    %2092 = vmatprep.subr.bf16.mxu0 %v968
    %2093 = vmatpush1.bf16.msra.mxu0 %v967
    %2094 = vmatprep.subr.bf16.mxu0 %v970
    %2095 = vmatpush1.bf16.msra.mxu0 %v969
    %2096 = vmatprep.subr.bf16.mxu0 %v972
    %2097 = vmatpush1.bf16.msra.mxu0 %v971
    %2098 = vmatprep.subr.bf16.mxu0 %v974
    %2099 = vmatpush1.bf16.msra.mxu0 %v973
    %2100 = vmatprep.subr.bf16.mxu0 %v976
    %2101 = vmatpush1.bf16.msra.mxu0 %v975
    %2102 = vmatprep.subr.bf16.mxu0 %v978
    %2103 = vmatpush1.bf16.msra.mxu0 %v977
    %2104 = vmatprep.subr.bf16.mxu0 %v980
    %2105 = vmatpush1.bf16.msra.mxu0 %v979
    %2106 = vmatprep.mubr.bf16.mxu0 %v1975
    %2107 = vmatmul.mubr.bf16.gmra.mrb[0].mxu0 %v1974
    %v2108 = vpop.f32.mrb[0].mxu0
    %v2109 = vadd.f32 %v2066, %v2108
    %v2110 = vpop.f32.mrb[0].mxu0
    %v2111 = vadd.f32 %v2068, %v2110
    %v2112 = vpop.f32.mrb[0].mxu0
    %v2113 = vadd.f32 %v2070, %v2112
    %v2114 = vpop.f32.mrb[0].mxu0
    %v2115 = vadd.f32 %v2072, %v2114
    %2116 = vdwg.mxu0
    %2117 = vmatprep.subr.bf16.mxu0 %v982
    %2118 = vmatpush1.bf16.msra.mxu0 %v981
    %2119 = vmatprep.subr.bf16.mxu0 %v984
    %2120 = vmatpush1.bf16.msra.mxu0 %v983
    %2121 = vmatprep.subr.bf16.mxu0 %v986
    %2122 = vmatpush1.bf16.msra.mxu0 %v985
    %2123 = vmatprep.subr.bf16.mxu0 %v988
    %2124 = vmatpush1.bf16.msra.mxu0 %v987
    %2125 = vmatprep.subr.bf16.mxu0 %v990
    %2126 = vmatpush1.bf16.msra.mxu0 %v989
    %2127 = vmatprep.subr.bf16.mxu0 %v992
    %2128 = vmatpush1.bf16.msra.mxu0 %v991
    %2129 = vmatprep.subr.bf16.mxu0 %v994
    %2130 = vmatpush1.bf16.msra.mxu0 %v993
    %2131 = vmatprep.subr.bf16.mxu0 %v996
    %2132 = vmatpush1.bf16.msra.mxu0 %v995
    %2133 = vmatprep.subr.bf16.mxu0 %v998
    %2134 = vmatpush1.bf16.msra.mxu0 %v997
    %2135 = vmatprep.subr.bf16.mxu0 %v1000
    %2136 = vmatpush1.bf16.msra.mxu0 %v999
    %2137 = vmatprep.subr.bf16.mxu0 %v1002
    %2138 = vmatpush1.bf16.msra.mxu0 %v1001
    %2139 = vmatprep.subr.bf16.mxu0 %v1004
    %2140 = vmatpush1.bf16.msra.mxu0 %v1003
    %2141 = vmatprep.subr.bf16.mxu0 %v1006
    %2142 = vmatpush1.bf16.msra.mxu0 %v1005
    %2143 = vmatprep.subr.bf16.mxu0 %v1008
    %2144 = vmatpush1.bf16.msra.mxu0 %v1007
    %2145 = vmatprep.subr.bf16.mxu0 %v1010
    %2146 = vmatpush1.bf16.msra.mxu0 %v1009
    %2147 = vmatprep.subr.bf16.mxu0 %v1012
    %2148 = vmatpush1.bf16.msra.mxu0 %v1011
    %2149 = vmatprep.mubr.bf16.mxu0 %v1977
    %2150 = vmatmul.mubr.bf16.gmra.mrb[0].mxu0 %v1976
    %v2151 = vpop.f32.mrb[0].mxu0
    %v2152 = vadd.f32 %v2109, %v2151
    %v2153 = vpop.f32.mrb[0].mxu0
    %v2154 = vadd.f32 %v2111, %v2153
    %v2155 = vpop.f32.mrb[0].mxu0
    %v2156 = vadd.f32 %v2113, %v2155
    %v2157 = vpop.f32.mrb[0].mxu0
    %v2158 = vadd.f32 %v2115, %v2157
    %2159 = vdwg.mxu0
    %2160 = vmatprep.subr.bf16.mxu0 %v1014
    %2161 = vmatpush1.bf16.msra.mxu0 %v1013
    %2162 = vmatprep.subr.bf16.mxu0 %v1016
    %2163 = vmatpush1.bf16.msra.mxu0 %v1015
    %2164 = vmatprep.subr.bf16.mxu0 %v1018
    %2165 = vmatpush1.bf16.msra.mxu0 %v1017
    %2166 = vmatprep.subr.bf16.mxu0 %v1020
    %2167 = vmatpush1.bf16.msra.mxu0 %v1019
    %2168 = vmatprep.subr.bf16.mxu0 %v1022
    %2169 = vmatpush1.bf16.msra.mxu0 %v1021
    %2170 = vmatprep.subr.bf16.mxu0 %v1024
    %2171 = vmatpush1.bf16.msra.mxu0 %v1023
    %2172 = vmatprep.subr.bf16.mxu0 %v1026
    %2173 = vmatpush1.bf16.msra.mxu0 %v1025
    %2174 = vmatprep.subr.bf16.mxu0 %v1028
    %2175 = vmatpush1.bf16.msra.mxu0 %v1027
    %2176 = vmatprep.subr.bf16.mxu0 %v1030
    %2177 = vmatpush1.bf16.msra.mxu0 %v1029
    %2178 = vmatprep.subr.bf16.mxu0 %v1032
    %2179 = vmatpush1.bf16.msra.mxu0 %v1031
    %2180 = vmatprep.subr.bf16.mxu0 %v1034
    %2181 = vmatpush1.bf16.msra.mxu0 %v1033
    %2182 = vmatprep.subr.bf16.mxu0 %v1036
    %2183 = vmatpush1.bf16.msra.mxu0 %v1035
    %2184 = vmatprep.subr.bf16.mxu0 %v1038
    %2185 = vmatpush1.bf16.msra.mxu0 %v1037
    %2186 = vmatprep.subr.bf16.mxu0 %v1040
    %2187 = vmatpush1.bf16.msra.mxu0 %v1039
    %2188 = vmatprep.subr.bf16.mxu0 %v1042
    %2189 = vmatpush1.bf16.msra.mxu0 %v1041
    %2190 = vmatprep.subr.bf16.mxu0 %v1044
    %2191 = vmatpush1.bf16.msra.mxu0 %v1043
    %2192 = vmatprep.mubr.bf16.mxu0 %v1979
    %2193 = vmatmul.mubr.bf16.gmra.mrb[0].mxu0 %v1978
    %v2194 = vpop.f32.mrb[0].mxu0
    %v2195 = vadd.f32 %v2152, %v2194
    %v2196 = vpop.f32.mrb[0].mxu0
    %v2197 = vadd.f32 %v2154, %v2196
    %v2198 = vpop.f32.mrb[0].mxu0
    %v2199 = vadd.f32 %v2156, %v2198
    %v2200 = vpop.f32.mrb[0].mxu0
    %v2201 = vadd.f32 %v2158, %v2200
    %2202 = vdwg.mxu0
    %2203 = vmatprep.subr.bf16.mxu0 %v1046
    %2204 = vmatpush1.bf16.msra.mxu0 %v1045
    %2205 = vmatprep.subr.bf16.mxu0 %v1048
    %2206 = vmatpush1.bf16.msra.mxu0 %v1047
    %2207 = vmatprep.subr.bf16.mxu0 %v1050
    %2208 = vmatpush1.bf16.msra.mxu0 %v1049
    %2209 = vmatprep.subr.bf16.mxu0 %v1052
    %2210 = vmatpush1.bf16.msra.mxu0 %v1051
    %2211 = vmatprep.subr.bf16.mxu0 %v1054
    %2212 = vmatpush1.bf16.msra.mxu0 %v1053
    %2213 = vmatprep.subr.bf16.mxu0 %v1056
    %2214 = vmatpush1.bf16.msra.mxu0 %v1055
    %2215 = vmatprep.subr.bf16.mxu0 %v1058
    %2216 = vmatpush1.bf16.msra.mxu0 %v1057
    %2217 = vmatprep.subr.bf16.mxu0 %v1060
    %2218 = vmatpush1.bf16.msra.mxu0 %v1059
    %2219 = vmatprep.subr.bf16.mxu0 %v1062
    %2220 = vmatpush1.bf16.msra.mxu0 %v1061
    %2221 = vmatprep.subr.bf16.mxu0 %v1064
    %2222 = vmatpush1.bf16.msra.mxu0 %v1063
    %2223 = vmatprep.subr.bf16.mxu0 %v1066
    %2224 = vmatpush1.bf16.msra.mxu0 %v1065
    %2225 = vmatprep.subr.bf16.mxu0 %v1068
    %2226 = vmatpush1.bf16.msra.mxu0 %v1067
    %2227 = vmatprep.subr.bf16.mxu0 %v1070
    %2228 = vmatpush1.bf16.msra.mxu0 %v1069
    %2229 = vmatprep.subr.bf16.mxu0 %v1072
    %2230 = vmatpush1.bf16.msra.mxu0 %v1071
    %2231 = vmatprep.subr.bf16.mxu0 %v1074
    %2232 = vmatpush1.bf16.msra.mxu0 %v1073
    %2233 = vmatprep.subr.bf16.mxu0 %v1076
    %2234 = vmatpush1.bf16.msra.mxu0 %v1075
    %2235 = vmatprep.mubr.bf16.mxu0 %v1981
    %2236 = vmatmul.mubr.bf16.gmra.mrb[0].mxu0 %v1980
    %v2237 = vpop.f32.mrb[0].mxu0
    %v2238 = vadd.f32 %v2195, %v2237
    %v2239 = vpop.f32.mrb[0].mxu0
    %v2240 = vadd.f32 %v2197, %v2239
    %v2241 = vpop.f32.mrb[0].mxu0
    %v2242 = vadd.f32 %v2199, %v2241
    %v2243 = vpop.f32.mrb[0].mxu0
    %v2244 = vadd.f32 %v2201, %v2243
    %2245 = vdwg.mxu0
    %2246 = vmatprep.subr.bf16.mxu0 %v1078
    %2247 = vmatpush1.bf16.msra.mxu0 %v1077
    %2248 = vmatprep.subr.bf16.mxu0 %v1080
    %2249 = vmatpush1.bf16.msra.mxu0 %v1079
    %2250 = vmatprep.subr.bf16.mxu0 %v1082
    %2251 = vmatpush1.bf16.msra.mxu0 %v1081
    %2252 = vmatprep.subr.bf16.mxu0 %v1084
    %2253 = vmatpush1.bf16.msra.mxu0 %v1083
    %2254 = vmatprep.subr.bf16.mxu0 %v1086
    %2255 = vmatpush1.bf16.msra.mxu0 %v1085
    %2256 = vmatprep.subr.bf16.mxu0 %v1088
    %2257 = vmatpush1.bf16.msra.mxu0 %v1087
    %2258 = vmatprep.subr.bf16.mxu0 %v1090
    %2259 = vmatpush1.bf16.msra.mxu0 %v1089
    %2260 = vmatprep.subr.bf16.mxu0 %v1092
    %2261 = vmatpush1.bf16.msra.mxu0 %v1091
    %2262 = vmatprep.subr.bf16.mxu0 %v1094
    %2263 = vmatpush1.bf16.msra.mxu0 %v1093
    %2264 = vmatprep.subr.bf16.mxu0 %v1096
    %2265 = vmatpush1.bf16.msra.mxu0 %v1095
    %2266 = vmatprep.subr.bf16.mxu0 %v1098
    %2267 = vmatpush1.bf16.msra.mxu0 %v1097
    %2268 = vmatprep.subr.bf16.mxu0 %v1100
    %2269 = vmatpush1.bf16.msra.mxu0 %v1099
    %2270 = vmatprep.subr.bf16.mxu0 %v1102
    %2271 = vmatpush1.bf16.msra.mxu0 %v1101
    %2272 = vmatprep.subr.bf16.mxu0 %v1104
    %2273 = vmatpush1.bf16.msra.mxu0 %v1103
    %2274 = vmatprep.subr.bf16.mxu0 %v1106
    %2275 = vmatpush1.bf16.msra.mxu0 %v1105
    %2276 = vmatprep.subr.bf16.mxu0 %v1108
    %2277 = vmatpush1.bf16.msra.mxu0 %v1107
    %2278 = vmatprep.mubr.bf16.mxu0 %v1983
    %2279 = vmatmul.mubr.bf16.gmra.mrb[0].mxu0 %v1982
    %v2280 = vpop.f32.mrb[0].mxu0
    %v2281 = vadd.f32 %v2238, %v2280
    %v2282 = vpop.f32.mrb[0].mxu0
    %v2283 = vadd.f32 %v2240, %v2282
    %v2284 = vpop.f32.mrb[0].mxu0
    %v2285 = vadd.f32 %v2242, %v2284
    %v2286 = vpop.f32.mrb[0].mxu0
    %v2287 = vadd.f32 %v2244, %v2286
    %2288 = vdwg.mxu0
    %2289 = vmatprep.subr.bf16.mxu0 %v1110
    %2290 = vmatpush1.bf16.msra.mxu0 %v1109
    %2291 = vmatprep.subr.bf16.mxu0 %v1112
    %2292 = vmatpush1.bf16.msra.mxu0 %v1111
    %2293 = vmatprep.subr.bf16.mxu0 %v1114
    %2294 = vmatpush1.bf16.msra.mxu0 %v1113
    %2295 = vmatprep.subr.bf16.mxu0 %v1116
    %2296 = vmatpush1.bf16.msra.mxu0 %v1115
    %2297 = vmatprep.subr.bf16.mxu0 %v1118
    %2298 = vmatpush1.bf16.msra.mxu0 %v1117
    %2299 = vmatprep.subr.bf16.mxu0 %v1120
    %2300 = vmatpush1.bf16.msra.mxu0 %v1119
    %2301 = vmatprep.subr.bf16.mxu0 %v1122
    %2302 = vmatpush1.bf16.msra.mxu0 %v1121
    %2303 = vmatprep.subr.bf16.mxu0 %v1124
    %2304 = vmatpush1.bf16.msra.mxu0 %v1123
    %2305 = vmatprep.subr.bf16.mxu0 %v1126
    %2306 = vmatpush1.bf16.msra.mxu0 %v1125
    %2307 = vmatprep.subr.bf16.mxu0 %v1128
    %2308 = vmatpush1.bf16.msra.mxu0 %v1127
    %2309 = vmatprep.subr.bf16.mxu0 %v1130
    %2310 = vmatpush1.bf16.msra.mxu0 %v1129
    %2311 = vmatprep.subr.bf16.mxu0 %v1132
    %2312 = vmatpush1.bf16.msra.mxu0 %v1131
    %2313 = vmatprep.subr.bf16.mxu0 %v1134
    %2314 = vmatpush1.bf16.msra.mxu0 %v1133
    %2315 = vmatprep.subr.bf16.mxu0 %v1136
    %2316 = vmatpush1.bf16.msra.mxu0 %v1135
    %2317 = vmatprep.subr.bf16.mxu0 %v1138
    %2318 = vmatpush1.bf16.msra.mxu0 %v1137
    %2319 = vmatprep.subr.bf16.mxu0 %v1140
    %2320 = vmatpush1.bf16.msra.mxu0 %v1139
    %2321 = vmatprep.mubr.bf16.mxu0 %v1985
    %2322 = vmatmul.mubr.bf16.gmra.mrb[0].mxu0 %v1984
    %v2323 = vpop.f32.mrb[0].mxu0
    %v2324 = vadd.f32 %v2281, %v2323
    %v2325 = vpop.f32.mrb[0].mxu0
    %v2326 = vadd.f32 %v2283, %v2325
    %v2327 = vpop.f32.mrb[0].mxu0
    %v2328 = vadd.f32 %v2285, %v2327
    %v2329 = vpop.f32.mrb[0].mxu0
    %v2330 = vadd.f32 %v2287, %v2329
    %2331 = vdwg.mxu0
    %2332 = vmatprep.subr.bf16.mxu0 %v1142
    %2333 = vmatpush1.bf16.msra.mxu0 %v1141
    %2334 = vmatprep.subr.bf16.mxu0 %v1144
    %2335 = vmatpush1.bf16.msra.mxu0 %v1143
    %2336 = vmatprep.subr.bf16.mxu0 %v1146
    %2337 = vmatpush1.bf16.msra.mxu0 %v1145
    %2338 = vmatprep.subr.bf16.mxu0 %v1148
    %2339 = vmatpush1.bf16.msra.mxu0 %v1147
    %2340 = vmatprep.subr.bf16.mxu0 %v1150
    %2341 = vmatpush1.bf16.msra.mxu0 %v1149
    %2342 = vmatprep.subr.bf16.mxu0 %v1152
    %2343 = vmatpush1.bf16.msra.mxu0 %v1151
    %2344 = vmatprep.subr.bf16.mxu0 %v1154
    %2345 = vmatpush1.bf16.msra.mxu0 %v1153
    %2346 = vmatprep.subr.bf16.mxu0 %v1156
    %2347 = vmatpush1.bf16.msra.mxu0 %v1155
    %2348 = vmatprep.subr.bf16.mxu0 %v1158
    %2349 = vmatpush1.bf16.msra.mxu0 %v1157
    %2350 = vmatprep.subr.bf16.mxu0 %v1160
    %2351 = vmatpush1.bf16.msra.mxu0 %v1159
    %2352 = vmatprep.subr.bf16.mxu0 %v1162
    %2353 = vmatpush1.bf16.msra.mxu0 %v1161
    %2354 = vmatprep.subr.bf16.mxu0 %v1164
    %2355 = vmatpush1.bf16.msra.mxu0 %v1163
    %2356 = vmatprep.subr.bf16.mxu0 %v1166
    %2357 = vmatpush1.bf16.msra.mxu0 %v1165
    %2358 = vmatprep.subr.bf16.mxu0 %v1168
    %2359 = vmatpush1.bf16.msra.mxu0 %v1167
    %2360 = vmatprep.subr.bf16.mxu0 %v1170
    %2361 = vmatpush1.bf16.msra.mxu0 %v1169
    %2362 = vmatprep.subr.bf16.mxu0 %v1172
    %2363 = vmatpush1.bf16.msra.mxu0 %v1171
    %2364 = vmatprep.mubr.bf16.mxu0 %v1987
    %2365 = vmatmul.mubr.bf16.gmra.mrb[0].mxu0 %v1986
    %v2366 = vpop.f32.mrb[0].mxu0
    %v2367 = vadd.f32 %v2324, %v2366
    %v2368 = vpop.f32.mrb[0].mxu0
    %v2369 = vadd.f32 %v2326, %v2368
    %v2370 = vpop.f32.mrb[0].mxu0
    %v2371 = vadd.f32 %v2328, %v2370
    %v2372 = vpop.f32.mrb[0].mxu0
    %v2373 = vadd.f32 %v2330, %v2372
    %2374 = vdwg.mxu0
    %v2375 = vmax.f32 %v2367, 0.0
    %v2376 = vmax.f32 %v2369, 0.0
    %v2377 = vmax.f32 %v2371, 0.0
    %v2378 = vmax.f32 %v2373, 0.0
    %v2379 = vld [vmem:[%s5] sm:$0xf]
    %v2380 = vld [vmem:[%s5 + $0x4] sm:$0xf]
    %v2381 = vld [vmem:[%s5 + $0x8] sm:$0xf]
    %v2382 = vld [vmem:[%s5 + $0xc] sm:$0xf]
    %v2383 = vld [vmem:[%s5 + $0x10] sm:$0xf]
    %v2384 = vld [vmem:[%s5 + $0x14] sm:$0xf]
    %v2385 = vld [vmem:[%s5 + $0x18] sm:$0xf]
    %v2386 = vld [vmem:[%s5 + $0x1c] sm:$0xf]
    %v2387 = vld [vmem:[%s5 + $0x20] sm:$0xf]
    %v2388 = vpack.c.bf16 %v2377, %v2375
    %v2389 = vpack.c.bf16 %v2378, %v2376
    %v2399 = vunpack.c.l.b16 %v2379
    %v2400 = vunpack.c.l.b16 %v2380
    %v2401 = vunpack.c.l.b16 %v2381
    %v2402 = vunpack.c.l.b16 %v2382
    %v2403 = vunpack.c.l.b16 %v2383
    %v2404 = vunpack.c.l.b16 %v2384
    %v2405 = vunpack.c.l.b16 %v2385
    %v2406 = vunpack.c.l.b16 %v2386
    %v2407 = vunpack.c.l.b16 %v2387
    %v2408 = vpack.c.b16 %v2400, %v2399
    %v2409 = vpack.c.b16 %v2402, %v2401
    %v2410 = vpack.c.b16 %v2404, %v2403
    %v2411 = vpack.c.b16 %v2406, %v2405
    %v2412 = vpack.c.b16 %v2407, %v2407
    %v2414 = vsel %vm175, %v2408, 0
    %v2417 = vsel %vm175, %v2409, 0
    %v2420 = vsel %vm175, %v2410, 0
    %v2423 = vsel %vm175, %v2411, 0
    %v2426 = vsel %vm175, %v2412, 0
    %2428 = vmatprep.subr.bf16.mxu0 %v2389
    %2429 = vmatpush1.bf16.msra.mxu0 %v2388
    %2430 = vmatprep.subr.bf16.mxu0 0
    %2431 = vmatpush1.bf16.msra.mxu0 0
    %2432 = vmatprep.subr.bf16.mxu0 0
    %2433 = vmatpush1.bf16.msra.mxu0 0
    %2434 = vmatprep.subr.bf16.mxu0 0
    %2435 = vmatpush1.bf16.msra.mxu0 0
    %2436 = vmatprep.subr.bf16.mxu0 0
    %2437 = vmatpush1.bf16.msra.mxu0 0
    %2438 = vmatprep.subr.bf16.mxu0 0
    %2439 = vmatpush1.bf16.msra.mxu0 0
    %2440 = vmatprep.subr.bf16.mxu0 0
    %2441 = vmatpush1.bf16.msra.mxu0 0
    %2442 = vmatprep.subr.bf16.mxu0 0
    %2443 = vmatpush1.bf16.msra.mxu0 0
    %2444 = vmatprep.subr.bf16.mxu0 0
    %2445 = vmatpush1.bf16.msra.mxu0 0
    %2446 = vmatprep.subr.bf16.mxu0 0
    %2447 = vmatpush1.bf16.msra.mxu0 0
    %2448 = vmatprep.subr.bf16.mxu0 0
    %2449 = vmatpush1.bf16.msra.mxu0 0
    %2450 = vmatprep.subr.bf16.mxu0 0
    %2451 = vmatpush1.bf16.msra.mxu0 0
    %2452 = vmatprep.subr.bf16.mxu0 0
    %2453 = vmatpush1.bf16.msra.mxu0 0
    %2454 = vmatprep.subr.bf16.mxu0 0
    %2455 = vmatpush1.bf16.msra.mxu0 0
    %2456 = vmatprep.subr.bf16.mxu0 0
    %2457 = vmatpush1.bf16.msra.mxu0 0
    %2458 = vmatprep.subr.bf16.mxu0 0
    %2459 = vmatpush1.bf16.msra.mxu0 0
    %2460 = vmatprep.mubr.bf16.mxu0 0
    %2461 = vmatmul.mubr.bf16.gmra.mrb[0].mxu0 %v2414
    %v2462 = vpop.f32.mrb[0].mxu0
    %v2463 = vadd.f32 0.0, %v2462
    %v2464 = vpop.f32.mrb[0].mxu0
    %v2465 = vadd.f32 0.0, %v2464
    %v2466 = vpop.f32.mrb[0].mxu0
    %v2467 = vadd.f32 0.0, %v2466
    %v2468 = vpop.f32.mrb[0].mxu0
    %v2469 = vadd.f32 0.0, %v2468
    %2470 = vmatprep.mubr.bf16.mxu0 0
    %2471 = vmatmul.mubr.bf16.gmra.mrb[0].mxu0 %v2417
    %v2472 = vpop.f32.mrb[0].mxu0
    %v2473 = vadd.f32 0.0, %v2472
    %v2474 = vpop.f32.mrb[0].mxu0
    %v2475 = vadd.f32 0.0, %v2474
    %v2476 = vpop.f32.mrb[0].mxu0
    %v2477 = vadd.f32 0.0, %v2476
    %v2478 = vpop.f32.mrb[0].mxu0
    %v2479 = vadd.f32 0.0, %v2478
    %2480 = vmatprep.mubr.bf16.mxu0 0
    %2481 = vmatmul.mubr.bf16.gmra.mrb[0].mxu0 %v2420
    %v2482 = vpop.f32.mrb[0].mxu0
    %v2483 = vadd.f32 0.0, %v2482
    %v2484 = vpop.f32.mrb[0].mxu0
    %v2485 = vadd.f32 0.0, %v2484
    %v2486 = vpop.f32.mrb[0].mxu0
    %v2487 = vadd.f32 0.0, %v2486
    %v2488 = vpop.f32.mrb[0].mxu0
    %v2489 = vadd.f32 0.0, %v2488
    %2490 = vmatprep.mubr.bf16.mxu0 0
    %2491 = vmatmul.mubr.bf16.gmra.mrb[0].mxu0 %v2423
    %v2492 = vpop.f32.mrb[0].mxu0
    %v2493 = vadd.f32 0.0, %v2492
    %v2494 = vpop.f32.mrb[0].mxu0
    %v2495 = vadd.f32 0.0, %v2494
    %v2496 = vpop.f32.mrb[0].mxu0
    %v2497 = vadd.f32 0.0, %v2496
    %v2498 = vpop.f32.mrb[0].mxu0
    %v2499 = vadd.f32 0.0, %v2498
    %2500 = vmatprep.mubr.bf16.mxu0 0
    %2501 = vmatmul.mubr.bf16.gmra.mrb[0].mxu0 %v2426
    %v2502 = vpop.f32.mrb[0].mxu0
    %v2503 = vadd.f32 0.0, %v2502
    %v2504 = vpop.f32.mrb[0].mxu0
    %v2505 = vadd.f32 0.0, %v2504
    %v2506 = vpop.f32.mrb[0].mxu0
    %v2507 = vpop.f32.mrb[0].mxu0
    %2508 = vdwg.mxu0
    %v2509 = vpack.c.bf16 %v2463, %v2463
    %v2510 = vpack.c.bf16 %v2465, %v2465
    %v2511 = vpack.c.bf16 %v2467, %v2467
    %v2512 = vpack.c.bf16 %v2469, %v2469
    %v2513 = vpack.c.bf16 %v2473, %v2473
    %v2514 = vpack.c.bf16 %v2475, %v2475
    %v2515 = vpack.c.bf16 %v2477, %v2477
    %v2516 = vpack.c.bf16 %v2479, %v2479
    %v2517 = vpack.c.bf16 %v2483, %v2483
    %v2518 = vpack.c.bf16 %v2485, %v2485
    %v2519 = vpack.c.bf16 %v2487, %v2487
    %v2520 = vpack.c.bf16 %v2489, %v2489
    %v2521 = vpack.c.bf16 %v2493, %v2493
    %v2522 = vpack.c.bf16 %v2495, %v2495
    %v2523 = vpack.c.bf16 %v2497, %v2497
    %v2524 = vpack.c.bf16 %v2499, %v2499
    %v2525 = vpack.c.bf16 %v2503, %v2503
    %v2526 = vpack.c.bf16 %v2505, %v2505
    %2527 = vmatprep.subr.bf16.mxu0 %v886
    %2528 = vmatpush1.bf16.msra.mxu0 %v885
    %2529 = vmatprep.subr.bf16.mxu0 %v888
    %2530 = vmatpush1.bf16.msra.mxu0 %v887
    %2531 = vmatprep.subr.bf16.mxu0 %v890
    %2532 = vmatpush1.bf16.msra.mxu0 %v889
    %2533 = vmatprep.subr.bf16.mxu0 %v892
    %2534 = vmatpush1.bf16.msra.mxu0 %v891
    %2535 = vmatprep.subr.bf16.mxu0 %v894
    %2536 = vmatpush1.bf16.msra.mxu0 %v893
    %2537 = vmatprep.subr.bf16.mxu0 %v896
    %2538 = vmatpush1.bf16.msra.mxu0 %v895
    %2539 = vmatprep.subr.bf16.mxu0 %v898
    %2540 = vmatpush1.bf16.msra.mxu0 %v897
    %2541 = vmatprep.subr.bf16.mxu0 %v900
    %2542 = vmatpush1.bf16.msra.mxu0 %v899
    %2543 = vmatprep.subr.bf16.mxu0 %v902
    %2544 = vmatpush1.bf16.msra.mxu0 %v901
    %2545 = vmatprep.subr.bf16.mxu0 %v904
    %2546 = vmatpush1.bf16.msra.mxu0 %v903
    %2547 = vmatprep.subr.bf16.mxu0 %v906
    %2548 = vmatpush1.bf16.msra.mxu0 %v905
    %2549 = vmatprep.subr.bf16.mxu0 %v908
    %2550 = vmatpush1.bf16.msra.mxu0 %v907
    %2551 = vmatprep.subr.bf16.mxu0 %v910
    %2552 = vmatpush1.bf16.msra.mxu0 %v909
    %2553 = vmatprep.subr.bf16.mxu0 %v912
    %2554 = vmatpush1.bf16.msra.mxu0 %v911
    %2555 = vmatprep.subr.bf16.mxu0 %v914
    %2556 = vmatpush1.bf16.msra.mxu0 %v913
    %2557 = vmatprep.subr.bf16.mxu0 %v916
    %2558 = vmatpush1.bf16.msra.mxu0 %v915
    %2559 = vmatprep.mubr.bf16.mxu0 %v2510
    %2560 = vmatmul.mubr.bf16.gmra.mrb[0].mxu0 %v2509
    %v2561 = vpop.f32.mrb[0].mxu0
    %v2562 = vadd.f32 %v1177, %v2561
    %v2563 = vpop.f32.mrb[0].mxu0
    %v2564 = vadd.f32 %v1181, %v2563
    %v2565 = vpop.f32.mrb[0].mxu0
    %v2566 = vpop.f32.mrb[0].mxu0
    %2567 = vdwg.mxu0
    %2568 = vmatprep.subr.bf16.mxu0 %v918
    %2569 = vmatpush1.bf16.msra.mxu0 %v917
    %2570 = vmatprep.subr.bf16.mxu0 %v920
    %2571 = vmatpush1.bf16.msra.mxu0 %v919
    %2572 = vmatprep.subr.bf16.mxu0 %v922
    %2573 = vmatpush1.bf16.msra.mxu0 %v921
    %2574 = vmatprep.subr.bf16.mxu0 %v924
    %2575 = vmatpush1.bf16.msra.mxu0 %v923
    %2576 = vmatprep.subr.bf16.mxu0 %v926
    %2577 = vmatpush1.bf16.msra.mxu0 %v925
    %2578 = vmatprep.subr.bf16.mxu0 %v928
    %2579 = vmatpush1.bf16.msra.mxu0 %v927
    %2580 = vmatprep.subr.bf16.mxu0 %v930
    %2581 = vmatpush1.bf16.msra.mxu0 %v929
    %2582 = vmatprep.subr.bf16.mxu0 %v932
    %2583 = vmatpush1.bf16.msra.mxu0 %v931
    %2584 = vmatprep.subr.bf16.mxu0 %v934
    %2585 = vmatpush1.bf16.msra.mxu0 %v933
    %2586 = vmatprep.subr.bf16.mxu0 %v936
    %2587 = vmatpush1.bf16.msra.mxu0 %v935
    %2588 = vmatprep.subr.bf16.mxu0 %v938
    %2589 = vmatpush1.bf16.msra.mxu0 %v937
    %2590 = vmatprep.subr.bf16.mxu0 %v940
    %2591 = vmatpush1.bf16.msra.mxu0 %v939
    %2592 = vmatprep.subr.bf16.mxu0 %v942
    %2593 = vmatpush1.bf16.msra.mxu0 %v941
    %2594 = vmatprep.subr.bf16.mxu0 %v944
    %2595 = vmatpush1.bf16.msra.mxu0 %v943
    %2596 = vmatprep.subr.bf16.mxu0 %v946
    %2597 = vmatpush1.bf16.msra.mxu0 %v945
    %2598 = vmatprep.subr.bf16.mxu0 %v948
    %2599 = vmatpush1.bf16.msra.mxu0 %v947
    %2600 = vmatprep.mubr.bf16.mxu0 %v2512
    %2601 = vmatmul.mubr.bf16.gmra.mrb[0].mxu0 %v2511
    %v2602 = vpop.f32.mrb[0].mxu0
    %v2603 = vadd.f32 %v2562, %v2602
    %v2604 = vpop.f32.mrb[0].mxu0
    %v2605 = vadd.f32 %v2564, %v2604
    %v2606 = vpop.f32.mrb[0].mxu0
    %v2607 = vpop.f32.mrb[0].mxu0
    %2608 = vdwg.mxu0
    %2609 = vmatprep.subr.bf16.mxu0 %v950
    %2610 = vmatpush1.bf16.msra.mxu0 %v949
    %2611 = vmatprep.subr.bf16.mxu0 %v952
    %2612 = vmatpush1.bf16.msra.mxu0 %v951
    %2613 = vmatprep.subr.bf16.mxu0 %v954
    %2614 = vmatpush1.bf16.msra.mxu0 %v953
    %2615 = vmatprep.subr.bf16.mxu0 %v956
    %2616 = vmatpush1.bf16.msra.mxu0 %v955
    %2617 = vmatprep.subr.bf16.mxu0 %v958
    %2618 = vmatpush1.bf16.msra.mxu0 %v957
    %2619 = vmatprep.subr.bf16.mxu0 %v960
    %2620 = vmatpush1.bf16.msra.mxu0 %v959
    %2621 = vmatprep.subr.bf16.mxu0 %v962
    %2622 = vmatpush1.bf16.msra.mxu0 %v961
    %2623 = vmatprep.subr.bf16.mxu0 %v964
    %2624 = vmatpush1.bf16.msra.mxu0 %v963
    %2625 = vmatprep.subr.bf16.mxu0 %v966
    %2626 = vmatpush1.bf16.msra.mxu0 %v965
    %2627 = vmatprep.subr.bf16.mxu0 %v968
    %2628 = vmatpush1.bf16.msra.mxu0 %v967
    %2629 = vmatprep.subr.bf16.mxu0 %v970
    %2630 = vmatpush1.bf16.msra.mxu0 %v969
    %2631 = vmatprep.subr.bf16.mxu0 %v972
    %2632 = vmatpush1.bf16.msra.mxu0 %v971
    %2633 = vmatprep.subr.bf16.mxu0 %v974
    %2634 = vmatpush1.bf16.msra.mxu0 %v973
    %2635 = vmatprep.subr.bf16.mxu0 %v976
    %2636 = vmatpush1.bf16.msra.mxu0 %v975
    %2637 = vmatprep.subr.bf16.mxu0 %v978
    %2638 = vmatpush1.bf16.msra.mxu0 %v977
    %2639 = vmatprep.subr.bf16.mxu0 %v980
    %2640 = vmatpush1.bf16.msra.mxu0 %v979
    %2641 = vmatprep.mubr.bf16.mxu0 %v2514
    %2642 = vmatmul.mubr.bf16.gmra.mrb[0].mxu0 %v2513
    %v2643 = vpop.f32.mrb[0].mxu0
    %v2644 = vadd.f32 %v2603, %v2643
    %v2645 = vpop.f32.mrb[0].mxu0
    %v2646 = vadd.f32 %v2605, %v2645
    %v2647 = vpop.f32.mrb[0].mxu0
    %v2648 = vpop.f32.mrb[0].mxu0
    %2649 = vdwg.mxu0
    %2650 = vmatprep.subr.bf16.mxu0 %v982
    %2651 = vmatpush1.bf16.msra.mxu0 %v981
    %2652 = vmatprep.subr.bf16.mxu0 %v984
    %2653 = vmatpush1.bf16.msra.mxu0 %v983
    %2654 = vmatprep.subr.bf16.mxu0 %v986
    %2655 = vmatpush1.bf16.msra.mxu0 %v985
    %2656 = vmatprep.subr.bf16.mxu0 %v988
    %2657 = vmatpush1.bf16.msra.mxu0 %v987
    %2658 = vmatprep.subr.bf16.mxu0 %v990
    %2659 = vmatpush1.bf16.msra.mxu0 %v989
    %2660 = vmatprep.subr.bf16.mxu0 %v992
    %2661 = vmatpush1.bf16.msra.mxu0 %v991
    %2662 = vmatprep.subr.bf16.mxu0 %v994
    %2663 = vmatpush1.bf16.msra.mxu0 %v993
    %2664 = vmatprep.subr.bf16.mxu0 %v996
    %2665 = vmatpush1.bf16.msra.mxu0 %v995
    %2666 = vmatprep.subr.bf16.mxu0 %v998
    %2667 = vmatpush1.bf16.msra.mxu0 %v997
    %2668 = vmatprep.subr.bf16.mxu0 %v1000
    %2669 = vmatpush1.bf16.msra.mxu0 %v999
    %2670 = vmatprep.subr.bf16.mxu0 %v1002
    %2671 = vmatpush1.bf16.msra.mxu0 %v1001
    %2672 = vmatprep.subr.bf16.mxu0 %v1004
    %2673 = vmatpush1.bf16.msra.mxu0 %v1003
    %2674 = vmatprep.subr.bf16.mxu0 %v1006
    %2675 = vmatpush1.bf16.msra.mxu0 %v1005
    %2676 = vmatprep.subr.bf16.mxu0 %v1008
    %2677 = vmatpush1.bf16.msra.mxu0 %v1007
    %2678 = vmatprep.subr.bf16.mxu0 %v1010
    %2679 = vmatpush1.bf16.msra.mxu0 %v1009
    %2680 = vmatprep.subr.bf16.mxu0 %v1012
    %2681 = vmatpush1.bf16.msra.mxu0 %v1011
    %2682 = vmatprep.mubr.bf16.mxu0 %v2516
    %2683 = vmatmul.mubr.bf16.gmra.mrb[0].mxu0 %v2515
    %v2684 = vpop.f32.mrb[0].mxu0
    %v2685 = vadd.f32 %v2644, %v2684
    %v2686 = vpop.f32.mrb[0].mxu0
    %v2687 = vadd.f32 %v2646, %v2686
    %v2688 = vpop.f32.mrb[0].mxu0
    %v2689 = vpop.f32.mrb[0].mxu0
    %2690 = vdwg.mxu0
    %2691 = vmatprep.subr.bf16.mxu0 %v1014
    %2692 = vmatpush1.bf16.msra.mxu0 %v1013
    %2693 = vmatprep.subr.bf16.mxu0 %v1016
    %2694 = vmatpush1.bf16.msra.mxu0 %v1015
    %2695 = vmatprep.subr.bf16.mxu0 %v1018
    %2696 = vmatpush1.bf16.msra.mxu0 %v1017
    %2697 = vmatprep.subr.bf16.mxu0 %v1020
    %2698 = vmatpush1.bf16.msra.mxu0 %v1019
    %2699 = vmatprep.subr.bf16.mxu0 %v1022
    %2700 = vmatpush1.bf16.msra.mxu0 %v1021
    %2701 = vmatprep.subr.bf16.mxu0 %v1024
    %2702 = vmatpush1.bf16.msra.mxu0 %v1023
    %2703 = vmatprep.subr.bf16.mxu0 %v1026
    %2704 = vmatpush1.bf16.msra.mxu0 %v1025
    %2705 = vmatprep.subr.bf16.mxu0 %v1028
    %2706 = vmatpush1.bf16.msra.mxu0 %v1027
    %2707 = vmatprep.subr.bf16.mxu0 %v1030
    %2708 = vmatpush1.bf16.msra.mxu0 %v1029
    %2709 = vmatprep.subr.bf16.mxu0 %v1032
    %2710 = vmatpush1.bf16.msra.mxu0 %v1031
    %2711 = vmatprep.subr.bf16.mxu0 %v1034
    %2712 = vmatpush1.bf16.msra.mxu0 %v1033
    %2713 = vmatprep.subr.bf16.mxu0 %v1036
    %2714 = vmatpush1.bf16.msra.mxu0 %v1035
    %2715 = vmatprep.subr.bf16.mxu0 %v1038
    %2716 = vmatpush1.bf16.msra.mxu0 %v1037
    %2717 = vmatprep.subr.bf16.mxu0 %v1040
    %2718 = vmatpush1.bf16.msra.mxu0 %v1039
    %2719 = vmatprep.subr.bf16.mxu0 %v1042
    %2720 = vmatpush1.bf16.msra.mxu0 %v1041
    %2721 = vmatprep.subr.bf16.mxu0 %v1044
    %2722 = vmatpush1.bf16.msra.mxu0 %v1043
    %2723 = vmatprep.mubr.bf16.mxu0 %v2518
    %2724 = vmatmul.mubr.bf16.gmra.mrb[0].mxu0 %v2517
    %v2725 = vpop.f32.mrb[0].mxu0
    %v2726 = vadd.f32 %v2685, %v2725
    %v2727 = vpop.f32.mrb[0].mxu0
    %v2728 = vadd.f32 %v2687, %v2727
    %v2729 = vpop.f32.mrb[0].mxu0
    %v2730 = vpop.f32.mrb[0].mxu0
    %2731 = vdwg.mxu0
    %2732 = vmatprep.subr.bf16.mxu0 %v1046
    %2733 = vmatpush1.bf16.msra.mxu0 %v1045
    %2734 = vmatprep.subr.bf16.mxu0 %v1048
    %2735 = vmatpush1.bf16.msra.mxu0 %v1047
    %2736 = vmatprep.subr.bf16.mxu0 %v1050
    %2737 = vmatpush1.bf16.msra.mxu0 %v1049
    %2738 = vmatprep.subr.bf16.mxu0 %v1052
    %2739 = vmatpush1.bf16.msra.mxu0 %v1051
    %2740 = vmatprep.subr.bf16.mxu0 %v1054
    %2741 = vmatpush1.bf16.msra.mxu0 %v1053
    %2742 = vmatprep.subr.bf16.mxu0 %v1056
    %2743 = vmatpush1.bf16.msra.mxu0 %v1055
    %2744 = vmatprep.subr.bf16.mxu0 %v1058
    %2745 = vmatpush1.bf16.msra.mxu0 %v1057
    %2746 = vmatprep.subr.bf16.mxu0 %v1060
    %2747 = vmatpush1.bf16.msra.mxu0 %v1059
    %2748 = vmatprep.subr.bf16.mxu0 %v1062
    %2749 = vmatpush1.bf16.msra.mxu0 %v1061
    %2750 = vmatprep.subr.bf16.mxu0 %v1064
    %2751 = vmatpush1.bf16.msra.mxu0 %v1063
    %2752 = vmatprep.subr.bf16.mxu0 %v1066
    %2753 = vmatpush1.bf16.msra.mxu0 %v1065
    %2754 = vmatprep.subr.bf16.mxu0 %v1068
    %2755 = vmatpush1.bf16.msra.mxu0 %v1067
    %2756 = vmatprep.subr.bf16.mxu0 %v1070
    %2757 = vmatpush1.bf16.msra.mxu0 %v1069
    %2758 = vmatprep.subr.bf16.mxu0 %v1072
    %2759 = vmatpush1.bf16.msra.mxu0 %v1071
    %2760 = vmatprep.subr.bf16.mxu0 %v1074
    %2761 = vmatpush1.bf16.msra.mxu0 %v1073
    %2762 = vmatprep.subr.bf16.mxu0 %v1076
    %2763 = vmatpush1.bf16.msra.mxu0 %v1075
    %2764 = vmatprep.mubr.bf16.mxu0 %v2520
    %2765 = vmatmul.mubr.bf16.gmra.mrb[0].mxu0 %v2519
    %v2766 = vpop.f32.mrb[0].mxu0
    %v2767 = vadd.f32 %v2726, %v2766
    %v2768 = vpop.f32.mrb[0].mxu0
    %v2769 = vadd.f32 %v2728, %v2768
    %v2770 = vpop.f32.mrb[0].mxu0
    %v2771 = vpop.f32.mrb[0].mxu0
    %2772 = vdwg.mxu0
    %2773 = vmatprep.subr.bf16.mxu0 %v1078
    %2774 = vmatpush1.bf16.msra.mxu0 %v1077
    %2775 = vmatprep.subr.bf16.mxu0 %v1080
    %2776 = vmatpush1.bf16.msra.mxu0 %v1079
    %2777 = vmatprep.subr.bf16.mxu0 %v1082
    %2778 = vmatpush1.bf16.msra.mxu0 %v1081
    %2779 = vmatprep.subr.bf16.mxu0 %v1084
    %2780 = vmatpush1.bf16.msra.mxu0 %v1083
    %2781 = vmatprep.subr.bf16.mxu0 %v1086
    %2782 = vmatpush1.bf16.msra.mxu0 %v1085
    %2783 = vmatprep.subr.bf16.mxu0 %v1088
    %2784 = vmatpush1.bf16.msra.mxu0 %v1087
    %2785 = vmatprep.subr.bf16.mxu0 %v1090
    %2786 = vmatpush1.bf16.msra.mxu0 %v1089
    %2787 = vmatprep.subr.bf16.mxu0 %v1092
    %2788 = vmatpush1.bf16.msra.mxu0 %v1091
    %2789 = vmatprep.subr.bf16.mxu0 %v1094
    %2790 = vmatpush1.bf16.msra.mxu0 %v1093
    %2791 = vmatprep.subr.bf16.mxu0 %v1096
    %2792 = vmatpush1.bf16.msra.mxu0 %v1095
    %2793 = vmatprep.subr.bf16.mxu0 %v1098
    %2794 = vmatpush1.bf16.msra.mxu0 %v1097
    %2795 = vmatprep.subr.bf16.mxu0 %v1100
    %2796 = vmatpush1.bf16.msra.mxu0 %v1099
    %2797 = vmatprep.subr.bf16.mxu0 %v1102
    %2798 = vmatpush1.bf16.msra.mxu0 %v1101
    %2799 = vmatprep.subr.bf16.mxu0 %v1104
    %2800 = vmatpush1.bf16.msra.mxu0 %v1103
    %2801 = vmatprep.subr.bf16.mxu0 %v1106
    %2802 = vmatpush1.bf16.msra.mxu0 %v1105
    %2803 = vmatprep.subr.bf16.mxu0 %v1108
    %2804 = vmatpush1.bf16.msra.mxu0 %v1107
    %2805 = vmatprep.mubr.bf16.mxu0 %v2522
    %2806 = vmatmul.mubr.bf16.gmra.mrb[0].mxu0 %v2521
    %v2807 = vpop.f32.mrb[0].mxu0
    %v2808 = vadd.f32 %v2767, %v2807
    %v2809 = vpop.f32.mrb[0].mxu0
    %v2810 = vadd.f32 %v2769, %v2809
    %v2811 = vpop.f32.mrb[0].mxu0
    %v2812 = vpop.f32.mrb[0].mxu0
    %2813 = vdwg.mxu0
    %2814 = vmatprep.subr.bf16.mxu0 %v1110
    %2815 = vmatpush1.bf16.msra.mxu0 %v1109
    %2816 = vmatprep.subr.bf16.mxu0 %v1112
    %2817 = vmatpush1.bf16.msra.mxu0 %v1111
    %2818 = vmatprep.subr.bf16.mxu0 %v1114
    %2819 = vmatpush1.bf16.msra.mxu0 %v1113
    %2820 = vmatprep.subr.bf16.mxu0 %v1116
    %2821 = vmatpush1.bf16.msra.mxu0 %v1115
    %2822 = vmatprep.subr.bf16.mxu0 %v1118
    %2823 = vmatpush1.bf16.msra.mxu0 %v1117
    %2824 = vmatprep.subr.bf16.mxu0 %v1120
    %2825 = vmatpush1.bf16.msra.mxu0 %v1119
    %2826 = vmatprep.subr.bf16.mxu0 %v1122
    %2827 = vmatpush1.bf16.msra.mxu0 %v1121
    %2828 = vmatprep.subr.bf16.mxu0 %v1124
    %2829 = vmatpush1.bf16.msra.mxu0 %v1123
    %2830 = vmatprep.subr.bf16.mxu0 %v1126
    %2831 = vmatpush1.bf16.msra.mxu0 %v1125
    %2832 = vmatprep.subr.bf16.mxu0 %v1128
    %2833 = vmatpush1.bf16.msra.mxu0 %v1127
    %2834 = vmatprep.subr.bf16.mxu0 %v1130
    %2835 = vmatpush1.bf16.msra.mxu0 %v1129
    %2836 = vmatprep.subr.bf16.mxu0 %v1132
    %2837 = vmatpush1.bf16.msra.mxu0 %v1131
    %2838 = vmatprep.subr.bf16.mxu0 %v1134
    %2839 = vmatpush1.bf16.msra.mxu0 %v1133
    %2840 = vmatprep.subr.bf16.mxu0 %v1136
    %2841 = vmatpush1.bf16.msra.mxu0 %v1135
    %2842 = vmatprep.subr.bf16.mxu0 %v1138
    %2843 = vmatpush1.bf16.msra.mxu0 %v1137
    %2844 = vmatprep.subr.bf16.mxu0 %v1140
    %2845 = vmatpush1.bf16.msra.mxu0 %v1139
    %2846 = vmatprep.mubr.bf16.mxu0 %v2524
    %2847 = vmatmul.mubr.bf16.gmra.mrb[0].mxu0 %v2523
    %v2848 = vpop.f32.mrb[0].mxu0
    %v2849 = vadd.f32 %v2808, %v2848
    %v2850 = vpop.f32.mrb[0].mxu0
    %v2851 = vadd.f32 %v2810, %v2850
    %v2852 = vpop.f32.mrb[0].mxu0
    %v2853 = vpop.f32.mrb[0].mxu0
    %2854 = vdwg.mxu0
    %2855 = vmatprep.subr.bf16.mxu0 %v1142
    %2856 = vmatpush1.bf16.msra.mxu0 %v1141
    %2857 = vmatprep.subr.bf16.mxu0 %v1144
    %2858 = vmatpush1.bf16.msra.mxu0 %v1143
    %2859 = vmatprep.subr.bf16.mxu0 %v1146
    %2860 = vmatpush1.bf16.msra.mxu0 %v1145
    %2861 = vmatprep.subr.bf16.mxu0 %v1148
    %2862 = vmatpush1.bf16.msra.mxu0 %v1147
    %2863 = vmatprep.subr.bf16.mxu0 %v1150
    %2864 = vmatpush1.bf16.msra.mxu0 %v1149
    %2865 = vmatprep.subr.bf16.mxu0 %v1152
    %2866 = vmatpush1.bf16.msra.mxu0 %v1151
    %2867 = vmatprep.subr.bf16.mxu0 %v1154
    %2868 = vmatpush1.bf16.msra.mxu0 %v1153
    %2869 = vmatprep.subr.bf16.mxu0 %v1156
    %2870 = vmatpush1.bf16.msra.mxu0 %v1155
    %2871 = vmatprep.subr.bf16.mxu0 %v1158
    %2872 = vmatpush1.bf16.msra.mxu0 %v1157
    %2873 = vmatprep.subr.bf16.mxu0 %v1160
    %2874 = vmatpush1.bf16.msra.mxu0 %v1159
    %2875 = vmatprep.subr.bf16.mxu0 %v1162
    %2876 = vmatpush1.bf16.msra.mxu0 %v1161
    %2877 = vmatprep.subr.bf16.mxu0 %v1164
    %2878 = vmatpush1.bf16.msra.mxu0 %v1163
    %2879 = vmatprep.subr.bf16.mxu0 %v1166
    %2880 = vmatpush1.bf16.msra.mxu0 %v1165
    %2881 = vmatprep.subr.bf16.mxu0 %v1168
    %2882 = vmatpush1.bf16.msra.mxu0 %v1167
    %2883 = vmatprep.subr.bf16.mxu0 %v1170
    %2884 = vmatpush1.bf16.msra.mxu0 %v1169
    %2885 = vmatprep.subr.bf16.mxu0 %v1172
    %2886 = vmatpush1.bf16.msra.mxu0 %v1171
    %2887 = vmatprep.mubr.bf16.mxu0 %v2526
    %2888 = vmatmul.mubr.bf16.gmra.mrb[0].mxu0 %v2525
    %v2889 = vpop.f32.mrb[0].mxu0
    %v2890 = vadd.f32 %v2849, %v2889
    %v2891 = vpop.f32.mrb[0].mxu0
    %v2892 = vadd.f32 %v2851, %v2891
    %v2893 = vpop.f32.mrb[0].mxu0
    %v2894 = vpop.f32.mrb[0].mxu0
    %2895 = vdwg.mxu0
    %v2896 = vmax.f32 %v2890, 0.0
    %v2897 = vmax.f32 %v2892, 0.0
    %s2898 = smul.u32 4, 32
    %s2899 = smul.u32 %s2898, 4
    %s2900 = sshll.u32 %s2899, 4
    %2901 = dma.done %s116, %s2900
    %v2902 = vpack.c.bf16 %v2896, %v2896
    %v2903 = vpack.c.bf16 %v2897, %v2897
    %v2904 = vld [vmem:[#allocation3] sm:$0xff]
    %v2905 = vld [vmem:[#allocation3 + $0x8] sm:$0xff]
    %v2906 = vld [vmem:[#allocation3 + $0x10] sm:$0xff]
    %v2907 = vld [vmem:[#allocation3 + $0x18] sm:$0xff]
    %v2908 = vld [vmem:[#allocation3 + $0x20] sm:$0xff]
    %v2909 = vld [vmem:[#allocation3 + $0x28] sm:$0xff]
    %v2910 = vld [vmem:[#allocation3 + $0x30] sm:$0xff]
    %v2911 = vld [vmem:[#allocation3 + $0x38] sm:$0xff]
    %v2912 = vld [vmem:[#allocation3 + $0x40] sm:$0xff]
    %v2913 = vld [vmem:[#allocation3 + $0x48] sm:$0xff]
    %v2914 = vld [vmem:[#allocation3 + $0x50] sm:$0xff]
    %v2915 = vld [vmem:[#allocation3 + $0x58] sm:$0xff]
    %v2916 = vld [vmem:[#allocation3 + $0x60] sm:$0xff]
    %v2917 = vld [vmem:[#allocation3 + $0x68] sm:$0xff]
    %v2918 = vld [vmem:[#allocation3 + $0x70] sm:$0xff]
    %v2919 = vld [vmem:[#allocation3 + $0x78] sm:$0xff]
    %v2920 = vld [vmem:[#allocation3 + $0x80] sm:$0xff]
    %v2921 = vld [vmem:[#allocation3 + $0x88] sm:$0xff]
    %v2922 = vld [vmem:[#allocation3 + $0x90] sm:$0xff]
    %v2923 = vld [vmem:[#allocation3 + $0x98] sm:$0xff]
    %v2924 = vld [vmem:[#allocation3 + $0xa0] sm:$0xff]
    %v2925 = vld [vmem:[#allocation3 + $0xa8] sm:$0xff]
    %v2926 = vld [vmem:[#allocation3 + $0xb0] sm:$0xff]
    %v2927 = vld [vmem:[#allocation3 + $0xb8] sm:$0xff]
    %v2928 = vld [vmem:[#allocation3 + $0xc0] sm:$0xff]
    %v2929 = vld [vmem:[#allocation3 + $0xc8] sm:$0xff]
    %v2930 = vld [vmem:[#allocation3 + $0xd0] sm:$0xff]
    %v2931 = vld [vmem:[#allocation3 + $0xd8] sm:$0xff]
    %v2932 = vld [vmem:[#allocation3 + $0xe0] sm:$0xff]
    %v2933 = vld [vmem:[#allocation3 + $0xe8] sm:$0xff]
    %v2934 = vld [vmem:[#allocation3 + $0xf0] sm:$0xff]
    %v2935 = vld [vmem:[#allocation3 + $0xf8] sm:$0xff]
    %v2936 = vld [vmem:[#allocation3 + $0x100] sm:$0xff]
    %v2937 = vld [vmem:[#allocation3 + $0x108] sm:$0xff]
    %v2938 = vld [vmem:[#allocation3 + $0x110] sm:$0xff]
    %v2939 = vld [vmem:[#allocation3 + $0x118] sm:$0xff]
    %v2940 = vld [vmem:[#allocation3 + $0x120] sm:$0xff]
    %v2941 = vld [vmem:[#allocation3 + $0x128] sm:$0xff]
    %v2942 = vld [vmem:[#allocation3 + $0x130] sm:$0xff]
    %v2943 = vld [vmem:[#allocation3 + $0x138] sm:$0xff]
    %v2944 = vld [vmem:[#allocation3 + $0x140] sm:$0xff]
    %v2945 = vld [vmem:[#allocation3 + $0x148] sm:$0xff]
    %v2946 = vld [vmem:[#allocation3 + $0x150] sm:$0xff]
    %v2947 = vld [vmem:[#allocation3 + $0x158] sm:$0xff]
    %v2948 = vld [vmem:[#allocation3 + $0x160] sm:$0xff]
    %v2949 = vld [vmem:[#allocation3 + $0x168] sm:$0xff]
    %v2950 = vld [vmem:[#allocation3 + $0x170] sm:$0xff]
    %v2951 = vld [vmem:[#allocation3 + $0x178] sm:$0xff]
    %v2952 = vld [vmem:[#allocation3 + $0x180] sm:$0xff]
    %v2953 = vld [vmem:[#allocation3 + $0x188] sm:$0xff]
    %v2954 = vld [vmem:[#allocation3 + $0x190] sm:$0xff]
    %v2955 = vld [vmem:[#allocation3 + $0x198] sm:$0xff]
    %v2956 = vld [vmem:[#allocation3 + $0x1a0] sm:$0xff]
    %v2957 = vld [vmem:[#allocation3 + $0x1a8] sm:$0xff]
    %v2958 = vld [vmem:[#allocation3 + $0x1b0] sm:$0xff]
    %v2959 = vld [vmem:[#allocation3 + $0x1b8] sm:$0xff]
    %v2960 = vld [vmem:[#allocation3 + $0x1c0] sm:$0xff]
    %v2961 = vld [vmem:[#allocation3 + $0x1c8] sm:$0xff]
    %v2962 = vld [vmem:[#allocation3 + $0x1d0] sm:$0xff]
    %v2963 = vld [vmem:[#allocation3 + $0x1d8] sm:$0xff]
    %v2964 = vld [vmem:[#allocation3 + $0x1e0] sm:$0xff]
    %v2965 = vld [vmem:[#allocation3 + $0x1e8] sm:$0xff]
    %v2966 = vld [vmem:[#allocation3 + $0x1f0] sm:$0xff]
    %v2967 = vld [vmem:[#allocation3 + $0x1f8] sm:$0xff]
    %2968 = vmatprep.subr.bf16.mxu0 %v2905
    %2969 = vmatpush1.bf16.msra.mxu0 %v2904
    %2970 = vmatprep.subr.bf16.mxu0 %v2909
    %2971 = vmatpush1.bf16.msra.mxu0 %v2908
    %2972 = vmatprep.subr.bf16.mxu0 %v2913
    %2973 = vmatpush1.bf16.msra.mxu0 %v2912
    %2974 = vmatprep.subr.bf16.mxu0 %v2917
    %2975 = vmatpush1.bf16.msra.mxu0 %v2916
    %2976 = vmatprep.subr.bf16.mxu0 %v2921
    %2977 = vmatpush1.bf16.msra.mxu0 %v2920
    %2978 = vmatprep.subr.bf16.mxu0 %v2925
    %2979 = vmatpush1.bf16.msra.mxu0 %v2924
    %2980 = vmatprep.subr.bf16.mxu0 %v2929
    %2981 = vmatpush1.bf16.msra.mxu0 %v2928
    %2982 = vmatprep.subr.bf16.mxu0 %v2933
    %2983 = vmatpush1.bf16.msra.mxu0 %v2932
    %2984 = vmatprep.subr.bf16.mxu0 %v2937
    %2985 = vmatpush1.bf16.msra.mxu0 %v2936
    %2986 = vmatprep.subr.bf16.mxu0 %v2941
    %2987 = vmatpush1.bf16.msra.mxu0 %v2940
    %2988 = vmatprep.subr.bf16.mxu0 %v2945
    %2989 = vmatpush1.bf16.msra.mxu0 %v2944
    %2990 = vmatprep.subr.bf16.mxu0 %v2949
    %2991 = vmatpush1.bf16.msra.mxu0 %v2948
    %2992 = vmatprep.subr.bf16.mxu0 %v2953
    %2993 = vmatpush1.bf16.msra.mxu0 %v2952
    %2994 = vmatprep.subr.bf16.mxu0 %v2957
    %2995 = vmatpush1.bf16.msra.mxu0 %v2956
    %2996 = vmatprep.subr.bf16.mxu0 %v2961
    %2997 = vmatpush1.bf16.msra.mxu0 %v2960
    %2998 = vmatprep.subr.bf16.mxu0 %v2965
    %2999 = vmatpush1.bf16.msra.mxu0 %v2964
    %3000 = vmatprep.mubr.bf16.mxu0 %v2903
    %3001 = vmatmul.mubr.bf16.gmra.mrb[0].mxu0 %v2902
    %v3002 = vpop.f32.mrb[0].mxu0
    %v3003 = vadd.f32 0.0, %v3002
    %v3004 = vpop.f32.mrb[0].mxu0
    %v3005 = vadd.f32 0.0, %v3004
    %v3006 = vpop.f32.mrb[0].mxu0
    %v3007 = vpop.f32.mrb[0].mxu0
    %3008 = vdwg.mxu0
    %3009 = vmatprep.subr.bf16.mxu0 %v2907
    %3010 = vmatpush1.bf16.msra.mxu0 %v2906
    %3011 = vmatprep.subr.bf16.mxu0 %v2911
    %3012 = vmatpush1.bf16.msra.mxu0 %v2910
    %3013 = vmatprep.subr.bf16.mxu0 %v2915
    %3014 = vmatpush1.bf16.msra.mxu0 %v2914
    %3015 = vmatprep.subr.bf16.mxu0 %v2919
    %3016 = vmatpush1.bf16.msra.mxu0 %v2918
    %3017 = vmatprep.subr.bf16.mxu0 %v2923
    %3018 = vmatpush1.bf16.msra.mxu0 %v2922
    %3019 = vmatprep.subr.bf16.mxu0 %v2927
    %3020 = vmatpush1.bf16.msra.mxu0 %v2926
    %3021 = vmatprep.subr.bf16.mxu0 %v2931
    %3022 = vmatpush1.bf16.msra.mxu0 %v2930
    %3023 = vmatprep.subr.bf16.mxu0 %v2935
    %3024 = vmatpush1.bf16.msra.mxu0 %v2934
    %3025 = vmatprep.subr.bf16.mxu0 %v2939
    %3026 = vmatpush1.bf16.msra.mxu0 %v2938
    %3027 = vmatprep.subr.bf16.mxu0 %v2943
    %3028 = vmatpush1.bf16.msra.mxu0 %v2942
    %3029 = vmatprep.subr.bf16.mxu0 %v2947
    %3030 = vmatpush1.bf16.msra.mxu0 %v2946
    %3031 = vmatprep.subr.bf16.mxu0 %v2951
    %3032 = vmatpush1.bf16.msra.mxu0 %v2950
    %3033 = vmatprep.subr.bf16.mxu0 %v2955
    %3034 = vmatpush1.bf16.msra.mxu0 %v2954
    %3035 = vmatprep.subr.bf16.mxu0 %v2959
    %3036 = vmatpush1.bf16.msra.mxu0 %v2958
    %3037 = vmatprep.subr.bf16.mxu0 %v2963
    %3038 = vmatpush1.bf16.msra.mxu0 %v2962
    %3039 = vmatprep.subr.bf16.mxu0 %v2967
    %3040 = vmatpush1.bf16.msra.mxu0 %v2966
    %3041 = vmatprep.mubr.bf16.mxu0 %v2903
    %3042 = vmatmul.mubr.bf16.gmra.mrb[0].mxu0 %v2902
    %v3043 = vpop.f32.mrb[0].mxu0
    %v3044 = vadd.f32 0.0, %v3043
    %v3045 = vpop.f32.mrb[0].mxu0
    %v3046 = vadd.f32 0.0, %v3045
    %v3047 = vpop.f32.mrb[0].mxu0
    %v3048 = vpop.f32.mrb[0].mxu0
    %3049 = vdwg.mxu0
    %v3050 = vld [vmem:[#allocation10] sm:$0x1]
    %v3051 = vadd.f32 %v3050, %v3003
    %v3054 = vunpack.c.l.s4 1966171168
    %v3055 = vunpack.c.0.s8 %v3054
    %v3056 = vlaneseq
    %v3057 = vshrl.u32 %v3056, 7
    %v3058 = vsub.s32 %v3055, %v3057
    %v3059 = vrot.slane %v3005, %v3058
    %v3060 = vcombine.high %v3059, %v3059
    %v3062 = vunpack.c.l.s4 1966171168
    %v3063 = vunpack.c.0.s8 %v3062
    %v3064 = vlaneseq
    %v3065 = vshrl.u32 %v3064, 7
    %v3066 = vsub.s32 %v3063, %v3065
    %v3067 = vrot.slane %v3060, %v3066
    %v3069 = vadd.f32 %v3051, %v3067
    %v3072 = vunpack.c.l.s4 1966171168
    %v3073 = vunpack.c.0.s8 %v3072
    %v3074 = vlaneseq
    %v3075 = vshrl.u32 %v3074, 7
    %v3076 = vsub.s32 %v3073, %v3075
    %v3077 = vrot.slane %v3044, %v3076
    %v3079 = vunpack.c.l.s4 1966171168
    %v3080 = vunpack.c.0.s8 %v3079
    %v3081 = vlaneseq
    %v3082 = vshrl.u32 %v3081, 7
    %v3083 = vsub.s32 %v3080, %v3082
    %v3084 = vrot.slane %v3077, %v3083
    %v3085 = vcombine.high %v3084, %v3084
    %v3087 = vadd.f32 %v3069, %v3085
    %v3090 = vunpack.c.l.s4 1966171168
    %v3091 = vunpack.c.0.s8 %v3090
    %v3092 = vlaneseq
    %v3093 = vshrl.u32 %v3092, 7
    %v3094 = vsub.s32 %v3091, %v3093
    %v3095 = vrot.slane %v3046, %v3094
    %v3096 = vcombine.high %v3095, %v3095
    %v3098 = vunpack.c.l.s4 1966171168
    %v3099 = vunpack.c.0.s8 %v3098
    %v3100 = vlaneseq
    %v3101 = vshrl.u32 %v3100, 7
    %v3102 = vsub.s32 %v3099, %v3101
    %v3103 = vrot.slane %v3096, %v3102
    %v3104 = vcombine.high %v3103, %v3103
    %v3106 = vadd.f32 %v3087, %v3104
    %v3107 = vlaneseq
    %v3108 = vand.u32 %v3107, 127
    %vm3109 = vcmp.lt.s32.totalorder %v3108, 64
    %v3110 = vsel %vm3109, %v3106, -inf
    %vm3111 = vcmask 1040384
    %v3112 = vsel %vm3111, %v3110, -inf
    %3113 = vmax.xlane.f32.xlu0 %v3112
    %v3114 = vpop.xlane.xlu0 %3113
    %v3115 = vsub.f32 %v3106, %v3114
    %v3116 = vmul.f32 %v3115, 1.442695
    %v3117 = vpow.pop %v3116
    %v3118 = vsel %vm3109, %v3117, 0.0
    %v3119 = vsel %vm3111, %v3118, 0.0
    %3120 = vadd.xlane.f32.xlu0 %v3119
    %v3121 = vpop.xlane.xlu0 %3120
    %v3122 = vlog2.pop %v3121
    %v3123 = vmul.f32 %v3122, 0.6931472
    %v3124 = vsub.f32 %v3115, %v3123
    %vm3125 = vcmp.eq.s32.totalorder %v3108, 64
    %v3126 = vtanh.pop %v3106
    %v3127 = vsel %vm3125, %v3126, 0.0
    %v3128 = vsel %vm3109, %v3124, %v3127
    %3129 = vst [vmem:[%s10] sm:$0x1] %v3128
    // Predicated region
    $region50: #{alphahex_forward.1} parent=1 // pred_check
      _
    $region51: #{alphahex_forward.1} parent=1 // pred_check_branch
      %3131 = sbr.rel (0) target = $region53
    $region52: #{alphahex_forward.1} parent=1 // pred_region
      _
    $region53: #{alphahex_forward.1} parent=1 // pred_fallthru
      _
    // Predicated region
    $region54: #{alphahex_forward.1} parent=1 // pred_check
      _
    $region55: #{alphahex_forward.1} parent=1 // pred_check_branch
      %3133 = sbr.rel (0) target = $region57
    $region56: #{alphahex_forward.1} parent=1 // pred_region
      _
    $region57: #{alphahex_forward.1} parent=1 // pred_fallthru
      _
    %3134 = vsyncpa [#allocation6], 1
    %3135 = vsyncpa [#allocation8], 1
    %3136 = vsyncpa [#allocation11], 1
  %3137 = vsyncmov [#allocation4]
  %s3138 = vpop.sfrf %3137
  %p3139 = scmp.eq.s32.totalorder %s3138, 0
  %p3140 = pneg %p3139
  %3142 = shalt.err (%p3140)
  %s3143 = scalar_lea.sflag [#allocation4], 1
  %3144 = vsyncmov %s3143
  %s3145 = vpop.sfrf %3144
  %p3146 = scmp.eq.s32.totalorder %s3145, 0
  %p3147 = pneg %p3146
  %3149 = shalt.err (%p3147)

</llo_original>
